<compile_context>
chip_gen: v7x
topology: tpu7x:2x2x1
jax: 0.10.0
libtpu: 0.0.40
codegen_flags: <defaults>
</compile_context>

<pallas_src>
import numpy as np
import jax
import jax.numpy as jnp
from jax.experimental import pallas as pl
from jax.experimental.pallas import tpu as pltpu

# ----------------------------- static model dims ---------------------------
IMG = 28                     # input spatial size (fixed by the 16*4*4 flatten)
K = 5                        # conv kernel size
C1_OUT = 6
C1_W = IMG - K + 1           # 24 (conv1 output width)
P1_W = C1_W // 2             # 12 (pool1 output width / conv2 input width)
P1_PAD = 16                  # pool1 output rows padded to a multiple of 8
C2_OUT = 16
C2_W = P1_W - K + 1          # 8  (conv2 output width)
P2_W = C2_W // 2             # 4  (pool2 output width)
FEAT = C2_OUT * P2_W * P2_W  # 256
FC1 = 128
FC2 = 84
NCLASS_PAD = 128             # lane-dense padded logits
TILE_B = 128                 # images per grid step (multiple of 8)


# ----------------------------- fused kernel --------------------------------
def _lenet_kernel(x_ref, w1_ref, b1_ref, sw1_ref, w2_ref, b2_ref, sw2_ref,
                  wf1_ref, bf1_ref, wf2_ref, bf2_ref, wf3_ref, bf3_ref,
                  out_ref):
    f32 = jnp.float32
    bf16 = jnp.bfloat16
    tb = out_ref.shape[0]

    # ---- conv1 (+bias+relu) on both H-pool phases at once ------------------
    # x: (tb, 2, 16, 5*28*cin) bf16; rows 12..15 of each phase are zero pad.
    x = x_ref[...]
    xm = x.reshape(tb * 2 * P1_PAD, -1)                       # layout-preserving
    c1 = jnp.dot(xm, w1_ref[...], preferred_element_type=f32)
    c1 = jnp.maximum(c1 + b1_ref[...], 0.0)                   # (tb*32, 144) f32

    # ---- pool1, W direction: 0/1 lane-select matmuls on the MXU ------------
    c1b = c1.astype(bf16)
    wp = jnp.maximum(
        jnp.dot(c1b, sw1_ref[0], preferred_element_type=f32),
        jnp.dot(c1b, sw1_ref[1], preferred_element_type=f32))  # (tb*32, 72)

    # ---- pool1, H direction: elementwise max over the two phases -----------
    wp = wp.reshape(tb, 2, P1_PAD, C1_OUT * P1_W)
    p1 = jnp.maximum(wp[:, 0], wp[:, 1]).astype(bf16)          # (tb, 16, 72)

    # ---- conv2 (+bias+relu): accumulation over the 5 kernel rows ------------
    c2 = jnp.zeros((tb * C2_W, C2_OUT * C2_W), f32)
    for s in range(K):
        slab = p1[:, s:s + C2_W, :].reshape(tb * C2_W, C1_OUT * P1_W)
        c2 = c2 + jnp.dot(slab, w2_ref[s], preferred_element_type=f32)
    c2 = jnp.maximum(c2 + b2_ref[...], 0.0)                    # (tb*8, 128) f32

    # ---- pool2, W direction on the MXU --------------------------------------
    c2b = c2.astype(bf16)
    wp2 = jnp.maximum(
        jnp.dot(c2b, sw2_ref[0], preferred_element_type=f32),
        jnp.dot(c2b, sw2_ref[1], preferred_element_type=f32))  # (tb*8, 64)
    wp2 = wp2.reshape(tb, C2_W, C2_OUT * P2_W)                 # (tb, 8, 64)

    # ---- pool2 H direction + flatten fused into fc1 (4 accumulated matmuls) -
    acc1 = jnp.zeros((tb, FC1), f32)
    for ph in range(P2_W):
        m = jnp.maximum(wp2[:, 2 * ph, :], wp2[:, 2 * ph + 1, :]).astype(bf16)
        acc1 = acc1 + jnp.dot(m, wf1_ref[ph], preferred_element_type=f32)
    h1 = jnp.maximum(acc1 + bf1_ref[...], 0.0)                 # (tb, 128)

    # ---- fc2 -> relu -> fc3 (lanes padded to 128, stores lane-dense) --------
    h2 = jnp.maximum(
        jnp.dot(h1.astype(bf16), wf2_ref[...], preferred_element_type=f32)
        + bf2_ref[...], 0.0)
    out_ref[...] = (jnp.dot(h2.astype(bf16), wf3_ref[...],
                            preferred_element_type=f32) + bf3_ref[...])


# ------------------------ wrapper-side constant builders -------------------
def _conv_row_matmul_weight(w, out_w, in_w, channels_minor):
    """Banded matrix mapping a KH-row input slab -> all conv outputs of one
    output row.  Rows ordered (kh, jf, ci) if channels_minor else (kh, ci, jf);
    cols ordered (co, ow)."""
    cout, cin, kh, kw = w.shape
    jf = jnp.arange(in_w)[:, None]
    ow = jnp.arange(out_w)[None, :]
    kk = jf - ow                                       # (in_w, out_w)
    valid = (kk >= 0) & (kk < kw)
    kk = jnp.clip(kk, 0, kw - 1)
    wt = jnp.transpose(w, (2, 3, 1, 0))                # (kh, kw, cin, cout)
    g = wt[:, kk]                                      # (kh, in_w, out_w, cin, cout)
    g = jnp.where(valid[None, :, :, None, None], g, 0.0)
    if channels_minor:
        g = jnp.transpose(g, (0, 1, 3, 4, 2))          # (kh, jf, ci, co, ow)
    else:
        g = jnp.transpose(g, (0, 3, 1, 4, 2))          # (kh, ci, jf, co, ow)
    return g.reshape(kh * in_w * cin, cout * out_w)


def _pool_lane_select(c, w_in):
    """(2, c*w_in, c*w_in//2) even/odd lane selectors for W-direction pooling."""
    w_out = w_in // 2
    se = np.zeros((c * w_in, c * w_out), np.float32)
    so = np.zeros((c * w_in, c * w_out), np.float32)
    for ch in range(c):
        for p in range(w_out):
            se[ch * w_in + 2 * p, ch * w_out + p] = 1.0
            so[ch * w_in + 2 * p + 1, ch * w_out + p] = 1.0
    return np.stack([se, so])


def _prepare_constants(params):
    nclass = params["fc3_w"].shape[1]
    assert nclass <= NCLASS_PAD
    bf16 = jnp.bfloat16

    w1 = _conv_row_matmul_weight(params["conv1_w"], C1_W, IMG,
                                 channels_minor=True).astype(bf16)   # (140*cin, 144)
    b1 = jnp.repeat(params["conv1_b"], C1_W).reshape(1, -1).astype(jnp.float32)

    w2 = _conv_row_matmul_weight(params["conv2_w"], C2_W, P1_W,
                                 channels_minor=False)
    w2 = w2.reshape(K, C1_OUT * P1_W, C2_OUT * C2_W).astype(bf16)    # (5, 72, 128)
    b2 = jnp.repeat(params["conv2_b"], C2_W).reshape(1, -1).astype(jnp.float32)

    sw1 = jnp.asarray(_pool_lane_select(C1_OUT, C1_W), bf16)         # (2, 144, 72)
    sw2 = jnp.asarray(_pool_lane_select(C2_OUT, C2_W), bf16)         # (2, 128, 64)

    # fc1 split per pooled row ph2; PyTorch flatten order is (co2, ph2, pw2).
    wf1 = params["fc1_w"].reshape(C2_OUT, P2_W, P2_W, FC1)
    wf1 = jnp.transpose(wf1, (1, 0, 2, 3)).reshape(P2_W, C2_OUT * P2_W, FC1)
    wf1 = wf1.astype(bf16)                                           # (4, 64, 128)
    bf1 = params["fc1_b"].reshape(1, FC1).astype(jnp.float32)

    wf2 = jnp.zeros((FC1, 128), jnp.float32).at[:, :FC2].set(params["fc2_w"]).astype(bf16)
    bf2 = jnp.zeros((1, 128), jnp.float32).at[:, :FC2].set(params["fc2_b"])
    wf3 = jnp.zeros((128, NCLASS_PAD), jnp.float32).at[:FC2, :nclass].set(
        params["fc3_w"]).astype(bf16)
    bf3 = jnp.zeros((1, NCLASS_PAD), jnp.float32).at[:, :nclass].set(params["fc3_b"])

    return (w1, b1, sw1, w2, b2, sw2, wf1, bf1, wf2, bf2, wf3, bf3)


# ----------------------------- forward -------------------------------------
def forward(params, x_nchw, *, tile_b=TILE_B):
    """x_nchw: (N, Cin, 28, 28) float32 -> (N, output_dim) logits."""
    assert tile_b % 8 == 0 and tile_b >= 8
    n, cin, h, w = x_nchw.shape
    assert (h, w) == (IMG, IMG)
    assert cin == params["conv1_w"].shape[1]
    nclass = params["fc3_w"].shape[1]

    # Tile selection: large tiles for MXU row utilization, but keep >= 2 grid
    # steps when the batch allows it (v7x has two TensorCores).
    n8 = ((n + 7) // 8) * 8
    tb = max(8, (min(tile_b, n8) // 8) * 8)
    if n8 // tb < 2 and n8 >= 16:
        tb = max(8, ((n8 // 2) // 8) * 8)
    n_pad = ((n + tb - 1) // tb) * tb

    # NCHW -> (N, H, W*Cin), then build the phase-split conv1 row slab:
    # slab[n, r, p, kh*28*cin:(kh+1)*28*cin] = x[n, 2p + r + kh, :] (p < 12).
    xr = jnp.transpose(x_nchw.astype(jnp.float32), (0, 2, 3, 1)).reshape(
        n, IMG, IMG * cin)
    phases = []
    for r in range(2):
        pieces = [xr[:, (r + kh)::2, :][:, :P1_W, :] for kh in range(K)]
        ph = jnp.concatenate(pieces, axis=-1)                  # (n, 12, 140*cin)
        ph = jnp.pad(ph, ((0, 0), (0, P1_PAD - P1_W), (0, 0)))
        phases.append(ph)
    slab = jnp.stack(phases, axis=1).astype(jnp.bfloat16)      # (n, 2, 16, 140*cin)
    if n_pad != n:
        slab = jnp.pad(slab, ((0, n_pad - n), (0, 0), (0, 0), (0, 0)))

    consts = _prepare_constants(params)

    def _full_spec(c):
        return pl.BlockSpec(c.shape, lambda i, _r=c.ndim: (0,) * _r)

    in_specs = [pl.BlockSpec((tb, 2, P1_PAD, K * IMG * cin),
                             lambda i: (i, 0, 0, 0))]
    in_specs += [_full_spec(c) for c in consts]

    out = pl.pallas_call(
        _lenet_kernel,
        out_shape=jax.ShapeDtypeStruct((n_pad, NCLASS_PAD), jnp.float32),
        grid=(n_pad // tb,),
        in_specs=in_specs,
        out_specs=pl.BlockSpec((tb, NCLASS_PAD), lambda i: (i, 0)),
        compiler_params=pltpu.CompilerParams(
            dimension_semantics=("parallel",),
            vmem_limit_bytes=32 * 1024 * 1024),
    )(slab, *consts)

    return out[:n, :nclass]


# ----------------------------- parameters ----------------------------------
def init_params(key, in_channels=1, output_dim=10):
    ks = jax.random.split(key, 10)

    def uniform(k, shape, fan_in):
        bound = 1.0 / jnp.sqrt(float(fan_in))
        return jax.random.uniform(k, shape, jnp.float32, -bound, bound)

    p = {}
    p["conv1_w"] = uniform(ks[0], (C1_OUT, in_channels, K, K), in_channels * K * K)
    p["conv1_b"] = uniform(ks[1], (C1_OUT,), in_channels * K * K)
    p["conv2_w"] = uniform(ks[2], (C2_OUT, C1_OUT, K, K), C1_OUT * K * K)
    p["conv2_b"] = uniform(ks[3], (C2_OUT,), C1_OUT * K * K)
    # fc weights stored as (in, out) matmul layout (transpose of nn.Linear.weight)
    p["fc1_w"] = uniform(ks[4], (FEAT, FC1), FEAT)
    p["fc1_b"] = uniform(ks[5], (FC1,), FEAT)
    p["fc2_w"] = uniform(ks[6], (FC1, FC2), FC1)
    p["fc2_b"] = uniform(ks[7], (FC2,), FC1)
    p["fc3_w"] = uniform(ks[8], (FC2, output_dim), FC2)
    p["fc3_b"] = uniform(ks[9], (output_dim,), FC2)
    return p


if __name__ == "__main__":
    key = jax.random.PRNGKey(0)
    k_param, k_x = jax.random.split(key)
    params = init_params(k_param, in_channels=1, output_dim=10)
    x = jax.random.normal(k_x, (2, 1, 28, 28), dtype=jnp.float32)

    out = jax.jit(forward)(params, x)
    out = jax.block_until_ready(out)
    assert out.shape == (2, 10), out.shape
    print("KERNEL_OK")
</pallas_src>

<mosaic_0001>
module attributes {stable_mosaic.version = 11 : i64} {
  func.func @_lenet_kernel(%arg0: i32, %arg1: memref<8x2x16x140xbf16, #tpu.memory_space<vmem>>, %arg2: memref<140x144xbf16, #tpu.memory_space<vmem>>, %arg3: memref<1x144xf32, #tpu.memory_space<vmem>>, %arg4: memref<2x144x72xbf16, #tpu.memory_space<vmem>>, %arg5: memref<5x72x128xbf16, #tpu.memory_space<vmem>>, %arg6: memref<1x128xf32, #tpu.memory_space<vmem>>, %arg7: memref<2x128x64xbf16, #tpu.memory_space<vmem>>, %arg8: memref<4x64x128xbf16, #tpu.memory_space<vmem>>, %arg9: memref<1x128xf32, #tpu.memory_space<vmem>>, %arg10: memref<128x128xbf16, #tpu.memory_space<vmem>>, %arg11: memref<1x128xf32, #tpu.memory_space<vmem>>, %arg12: memref<128x128xbf16, #tpu.memory_space<vmem>>, %arg13: memref<1x128xf32, #tpu.memory_space<vmem>>, %arg14: memref<8x128xf32, #tpu.memory_space<vmem>>) attributes {dimension_semantics = [#tpu.dimension_semantics<parallel>], iteration_bounds = array<i64: 1>, scalar_prefetch = 0 : i64, scratch_operands = 0 : i64, tpu.core_type = #tpu.core_type<tc>, window_params = [{transform_indices = @transform_0, window_bounds = array<i64: 8, 2, 16, 140>}, {pipeline_mode = #tpu.pipeline_mode<synchronous>, transform_indices = @transform_1, window_bounds = array<i64: 140, 144>}, {pipeline_mode = #tpu.pipeline_mode<synchronous>, transform_indices = @transform_2, window_bounds = array<i64: 1, 144>}, {pipeline_mode = #tpu.pipeline_mode<synchronous>, transform_indices = @transform_3, window_bounds = array<i64: 2, 144, 72>}, {pipeline_mode = #tpu.pipeline_mode<synchronous>, transform_indices = @transform_4, window_bounds = array<i64: 5, 72, 128>}, {pipeline_mode = #tpu.pipeline_mode<synchronous>, transform_indices = @transform_5, window_bounds = array<i64: 1, 128>}, {pipeline_mode = #tpu.pipeline_mode<synchronous>, transform_indices = @transform_6, window_bounds = array<i64: 2, 128, 64>}, {pipeline_mode = #tpu.pipeline_mode<synchronous>, transform_indices = @transform_7, window_bounds = array<i64: 4, 64, 128>}, {pipeline_mode = #tpu.pipeline_mode<synchronous>, transform_indices = @transform_8, window_bounds = array<i64: 1, 128>}, {pipeline_mode = #tpu.pipeline_mode<synchronous>, transform_indices = @transform_9, window_bounds = array<i64: 128, 128>}, {pipeline_mode = #tpu.pipeline_mode<synchronous>, transform_indices = @transform_10, window_bounds = array<i64: 1, 128>}, {pipeline_mode = #tpu.pipeline_mode<synchronous>, transform_indices = @transform_11, window_bounds = array<i64: 128, 128>}, {pipeline_mode = #tpu.pipeline_mode<synchronous>, transform_indices = @transform_12, window_bounds = array<i64: 1, 128>}, {transform_indices = @transform_13, window_bounds = array<i64: 8, 128>}]} {
    %c0 = arith.constant 0 : index
    %c0_0 = arith.constant 0 : index
    %c0_1 = arith.constant 0 : index
    %c0_2 = arith.constant 0 : index
    %0 = vector.load %arg1[%c0, %c0_0, %c0_1, %c0_2] : memref<8x2x16x140xbf16, #tpu.memory_space<vmem>>, vector<8x2x16x140xbf16>
    %1 = vector.shape_cast %0 : vector<8x2x16x140xbf16> to vector<256x140xbf16>
    %c0_3 = arith.constant 0 : index
    %c0_4 = arith.constant 0 : index
    %2 = vector.load %arg2[%c0_3, %c0_4] : memref<140x144xbf16, #tpu.memory_space<vmem>>, vector<140x144xbf16>
    %cst = arith.constant dense<0.000000e+00> : vector<256x144xf32>
    %3 = tpu.matmul %1, %2, %cst {dimension_numbers = #tpu.dot_dimension_numbers<[1], [0], [0], [1], [0, 0, 1, 1], [], []>} : vector<256x140xbf16>, vector<140x144xbf16>, vector<256x144xf32> -> vector<256x144xf32>
    %c0_5 = arith.constant 0 : index
    %c0_6 = arith.constant 0 : index
    %4 = vector.load %arg3[%c0_5, %c0_6] : memref<1x144xf32, #tpu.memory_space<vmem>>, vector<1x144xf32>
    %5 = vector.broadcast %4 : vector<1x144xf32> to vector<256x144xf32>
    %6 = arith.addf %3, %5 : vector<256x144xf32>
    %cst_7 = arith.constant 0.000000e+00 : f32
    %7 = vector.broadcast %cst_7 : f32 to vector<256x144xf32>
    %8 = arith.maximumf %6, %7 : vector<256x144xf32>
    %9 = arith.truncf %8 : vector<256x144xf32> to vector<256x144xbf16>
    %c0_8 = arith.constant 0 : index
    %c0_9 = arith.constant 0 : index
    %c0_10 = arith.constant 0 : index
    %10 = vector.load %arg4[%c0_8, %c0_9, %c0_10] : memref<2x144x72xbf16, #tpu.memory_space<vmem>>, vector<1x144x72xbf16>
    %11 = vector.shape_cast %10 : vector<1x144x72xbf16> to vector<144x72xbf16>
    %cst_11 = arith.constant dense<0.000000e+00> : vector<256x72xf32>
    %12 = tpu.matmul %9, %11, %cst_11 {dimension_numbers = #tpu.dot_dimension_numbers<[1], [0], [0], [1], [0, 0, 1, 1], [], []>} : vector<256x144xbf16>, vector<144x72xbf16>, vector<256x72xf32> -> vector<256x72xf32>
    %c1 = arith.constant 1 : index
    %c0_12 = arith.constant 0 : index
    %c0_13 = arith.constant 0 : index
    %13 = vector.load %arg4[%c1, %c0_12, %c0_13] : memref<2x144x72xbf16, #tpu.memory_space<vmem>>, vector<1x144x72xbf16>
    %14 = vector.shape_cast %13 : vector<1x144x72xbf16> to vector<144x72xbf16>
    %cst_14 = arith.constant dense<0.000000e+00> : vector<256x72xf32>
    %15 = tpu.matmul %9, %14, %cst_14 {dimension_numbers = #tpu.dot_dimension_numbers<[1], [0], [0], [1], [0, 0, 1, 1], [], []>} : vector<256x144xbf16>, vector<144x72xbf16>, vector<256x72xf32> -> vector<256x72xf32>
    %16 = arith.maximumf %12, %15 : vector<256x72xf32>
    %17 = vector.shape_cast %16 : vector<256x72xf32> to vector<8x2x16x72xf32>
    %18 = vector.extract_strided_slice %17 {offsets = [0, 0, 0, 0], sizes = [8, 1, 16, 72], strides = [1, 1, 1, 1]} : vector<8x2x16x72xf32> to vector<8x1x16x72xf32>
    %19 = vector.shape_cast %18 : vector<8x1x16x72xf32> to vector<8x16x72xf32>
    %20 = vector.extract_strided_slice %17 {offsets = [0, 1, 0, 0], sizes = [8, 1, 16, 72], strides = [1, 1, 1, 1]} : vector<8x2x16x72xf32> to vector<8x1x16x72xf32>
    %21 = vector.shape_cast %20 : vector<8x1x16x72xf32> to vector<8x16x72xf32>
    %22 = arith.maximumf %19, %21 : vector<8x16x72xf32>
    %23 = arith.truncf %22 : vector<8x16x72xf32> to vector<8x16x72xbf16>
    %cst_15 = arith.constant 0.000000e+00 : f32
    %24 = vector.broadcast %cst_15 : f32 to vector<64x128xf32>
    %25 = vector.extract_strided_slice %23 {offsets = [0, 0, 0], sizes = [8, 8, 72], strides = [1, 1, 1]} : vector<8x16x72xbf16> to vector<8x8x72xbf16>
    %26 = vector.shape_cast %25 : vector<8x8x72xbf16> to vector<64x72xbf16>
    %c0_16 = arith.constant 0 : index
    %c0_17 = arith.constant 0 : index
    %c0_18 = arith.constant 0 : index
    %27 = vector.load %arg5[%c0_16, %c0_17, %c0_18] : memref<5x72x128xbf16, #tpu.memory_space<vmem>>, vector<1x72x128xbf16>
    %28 = vector.shape_cast %27 : vector<1x72x128xbf16> to vector<72x128xbf16>
    %cst_19 = arith.constant dense<0.000000e+00> : vector<64x128xf32>
    %29 = tpu.matmul %26, %28, %cst_19 {dimension_numbers = #tpu.dot_dimension_numbers<[1], [0], [0], [1], [0, 0, 1, 1], [], []>} : vector<64x72xbf16>, vector<72x128xbf16>, vector<64x128xf32> -> vector<64x128xf32>
    %30 = arith.addf %24, %29 : vector<64x128xf32>
    %31 = vector.extract_strided_slice %23 {offsets = [0, 1, 0], sizes = [8, 8, 72], strides = [1, 1, 1]} : vector<8x16x72xbf16> to vector<8x8x72xbf16>
    %32 = vector.shape_cast %31 : vector<8x8x72xbf16> to vector<64x72xbf16>
    %c1_20 = arith.constant 1 : index
    %c0_21 = arith.constant 0 : index
    %c0_22 = arith.constant 0 : index
    %33 = vector.load %arg5[%c1_20, %c0_21, %c0_22] : memref<5x72x128xbf16, #tpu.memory_space<vmem>>, vector<1x72x128xbf16>
    %34 = vector.shape_cast %33 : vector<1x72x128xbf16> to vector<72x128xbf16>
    %cst_23 = arith.constant dense<0.000000e+00> : vector<64x128xf32>
    %35 = tpu.matmul %32, %34, %cst_23 {dimension_numbers = #tpu.dot_dimension_numbers<[1], [0], [0], [1], [0, 0, 1, 1], [], []>} : vector<64x72xbf16>, vector<72x128xbf16>, vector<64x128xf32> -> vector<64x128xf32>
    %36 = arith.addf %30, %35 : vector<64x128xf32>
    %37 = vector.extract_strided_slice %23 {offsets = [0, 2, 0], sizes = [8, 8, 72], strides = [1, 1, 1]} : vector<8x16x72xbf16> to vector<8x8x72xbf16>
    %38 = vector.shape_cast %37 : vector<8x8x72xbf16> to vector<64x72xbf16>
    %c2 = arith.constant 2 : index
    %c0_24 = arith.constant 0 : index
    %c0_25 = arith.constant 0 : index
    %39 = vector.load %arg5[%c2, %c0_24, %c0_25] : memref<5x72x128xbf16, #tpu.memory_space<vmem>>, vector<1x72x128xbf16>
    %40 = vector.shape_cast %39 : vector<1x72x128xbf16> to vector<72x128xbf16>
    %cst_26 = arith.constant dense<0.000000e+00> : vector<64x128xf32>
    %41 = tpu.matmul %38, %40, %cst_26 {dimension_numbers = #tpu.dot_dimension_numbers<[1], [0], [0], [1], [0, 0, 1, 1], [], []>} : vector<64x72xbf16>, vector<72x128xbf16>, vector<64x128xf32> -> vector<64x128xf32>
    %42 = arith.addf %36, %41 : vector<64x128xf32>
    %43 = vector.extract_strided_slice %23 {offsets = [0, 3, 0], sizes = [8, 8, 72], strides = [1, 1, 1]} : vector<8x16x72xbf16> to vector<8x8x72xbf16>
    %44 = vector.shape_cast %43 : vector<8x8x72xbf16> to vector<64x72xbf16>
    %c3 = arith.constant 3 : index
    %c0_27 = arith.constant 0 : index
    %c0_28 = arith.constant 0 : index
    %45 = vector.load %arg5[%c3, %c0_27, %c0_28] : memref<5x72x128xbf16, #tpu.memory_space<vmem>>, vector<1x72x128xbf16>
    %46 = vector.shape_cast %45 : vector<1x72x128xbf16> to vector<72x128xbf16>
    %cst_29 = arith.constant dense<0.000000e+00> : vector<64x128xf32>
    %47 = tpu.matmul %44, %46, %cst_29 {dimension_numbers = #tpu.dot_dimension_numbers<[1], [0], [0], [1], [0, 0, 1, 1], [], []>} : vector<64x72xbf16>, vector<72x128xbf16>, vector<64x128xf32> -> vector<64x128xf32>
    %48 = arith.addf %42, %47 : vector<64x128xf32>
    %49 = vector.extract_strided_slice %23 {offsets = [0, 4, 0], sizes = [8, 8, 72], strides = [1, 1, 1]} : vector<8x16x72xbf16> to vector<8x8x72xbf16>
    %50 = vector.shape_cast %49 : vector<8x8x72xbf16> to vector<64x72xbf16>
    %c4 = arith.constant 4 : index
    %c0_30 = arith.constant 0 : index
    %c0_31 = arith.constant 0 : index
    %51 = vector.load %arg5[%c4, %c0_30, %c0_31] : memref<5x72x128xbf16, #tpu.memory_space<vmem>>, vector<1x72x128xbf16>
    %52 = vector.shape_cast %51 : vector<1x72x128xbf16> to vector<72x128xbf16>
    %cst_32 = arith.constant dense<0.000000e+00> : vector<64x128xf32>
    %53 = tpu.matmul %50, %52, %cst_32 {dimension_numbers = #tpu.dot_dimension_numbers<[1], [0], [0], [1], [0, 0, 1, 1], [], []>} : vector<64x72xbf16>, vector<72x128xbf16>, vector<64x128xf32> -> vector<64x128xf32>
    %54 = arith.addf %48, %53 : vector<64x128xf32>
    %c0_33 = arith.constant 0 : index
    %c0_34 = arith.constant 0 : index
    %55 = vector.load %arg6[%c0_33, %c0_34] : memref<1x128xf32, #tpu.memory_space<vmem>>, vector<1x128xf32>
    %56 = vector.broadcast %55 : vector<1x128xf32> to vector<64x128xf32>
    %57 = arith.addf %54, %56 : vector<64x128xf32>
    %cst_35 = arith.constant 0.000000e+00 : f32
    %58 = vector.broadcast %cst_35 : f32 to vector<64x128xf32>
    %59 = arith.maximumf %57, %58 : vector<64x128xf32>
    %60 = arith.truncf %59 : vector<64x128xf32> to vector<64x128xbf16>
    %c0_36 = arith.constant 0 : index
    %c0_37 = arith.constant 0 : index
    %c0_38 = arith.constant 0 : index
    %61 = vector.load %arg7[%c0_36, %c0_37, %c0_38] : memref<2x128x64xbf16, #tpu.memory_space<vmem>>, vector<1x128x64xbf16>
    %62 = vector.shape_cast %61 : vector<1x128x64xbf16> to vector<128x64xbf16>
    %cst_39 = arith.constant dense<0.000000e+00> : vector<64x64xf32>
    %63 = tpu.matmul %60, %62, %cst_39 {dimension_numbers = #tpu.dot_dimension_numbers<[1], [0], [0], [1], [0, 0, 1, 1], [], []>} : vector<64x128xbf16>, vector<128x64xbf16>, vector<64x64xf32> -> vector<64x64xf32>
    %c1_40 = arith.constant 1 : index
    %c0_41 = arith.constant 0 : index
    %c0_42 = arith.constant 0 : index
    %64 = vector.load %arg7[%c1_40, %c0_41, %c0_42] : memref<2x128x64xbf16, #tpu.memory_space<vmem>>, vector<1x128x64xbf16>
    %65 = vector.shape_cast %64 : vector<1x128x64xbf16> to vector<128x64xbf16>
    %cst_43 = arith.constant dense<0.000000e+00> : vector<64x64xf32>
    %66 = tpu.matmul %60, %65, %cst_43 {dimension_numbers = #tpu.dot_dimension_numbers<[1], [0], [0], [1], [0, 0, 1, 1], [], []>} : vector<64x128xbf16>, vector<128x64xbf16>, vector<64x64xf32> -> vector<64x64xf32>
    %67 = arith.maximumf %63, %66 : vector<64x64xf32>
    %68 = vector.shape_cast %67 : vector<64x64xf32> to vector<8x8x64xf32>
    %cst_44 = arith.constant 0.000000e+00 : f32
    %69 = vector.broadcast %cst_44 : f32 to vector<8x128xf32>
    %70 = vector.extract_strided_slice %68 {offsets = [0, 0, 0], sizes = [8, 1, 64], strides = [1, 1, 1]} : vector<8x8x64xf32> to vector<8x1x64xf32>
    %71 = vector.shape_cast %70 : vector<8x1x64xf32> to vector<8x64xf32>
    %72 = vector.extract_strided_slice %68 {offsets = [0, 1, 0], sizes = [8, 1, 64], strides = [1, 1, 1]} : vector<8x8x64xf32> to vector<8x1x64xf32>
    %73 = vector.shape_cast %72 : vector<8x1x64xf32> to vector<8x64xf32>
    %74 = arith.maximumf %71, %73 : vector<8x64xf32>
    %75 = arith.truncf %74 : vector<8x64xf32> to vector<8x64xbf16>
    %c0_45 = arith.constant 0 : index
    %c0_46 = arith.constant 0 : index
    %c0_47 = arith.constant 0 : index
    %76 = vector.load %arg8[%c0_45, %c0_46, %c0_47] : memref<4x64x128xbf16, #tpu.memory_space<vmem>>, vector<1x64x128xbf16>
    %77 = vector.shape_cast %76 : vector<1x64x128xbf16> to vector<64x128xbf16>
    %cst_48 = arith.constant dense<0.000000e+00> : vector<8x128xf32>
    %78 = tpu.matmul %75, %77, %cst_48 {dimension_numbers = #tpu.dot_dimension_numbers<[1], [0], [0], [1], [0, 0, 1, 1], [], []>} : vector<8x64xbf16>, vector<64x128xbf16>, vector<8x128xf32> -> vector<8x128xf32>
    %79 = arith.addf %69, %78 : vector<8x128xf32>
    %80 = vector.extract_strided_slice %68 {offsets = [0, 2, 0], sizes = [8, 1, 64], strides = [1, 1, 1]} : vector<8x8x64xf32> to vector<8x1x64xf32>
    %81 = vector.shape_cast %80 : vector<8x1x64xf32> to vector<8x64xf32>
    %82 = vector.extract_strided_slice %68 {offsets = [0, 3, 0], sizes = [8, 1, 64], strides = [1, 1, 1]} : vector<8x8x64xf32> to vector<8x1x64xf32>
    %83 = vector.shape_cast %82 : vector<8x1x64xf32> to vector<8x64xf32>
    %84 = arith.maximumf %81, %83 : vector<8x64xf32>
    %85 = arith.truncf %84 : vector<8x64xf32> to vector<8x64xbf16>
    %c1_49 = arith.constant 1 : index
    %c0_50 = arith.constant 0 : index
    %c0_51 = arith.constant 0 : index
    %86 = vector.load %arg8[%c1_49, %c0_50, %c0_51] : memref<4x64x128xbf16, #tpu.memory_space<vmem>>, vector<1x64x128xbf16>
    %87 = vector.shape_cast %86 : vector<1x64x128xbf16> to vector<64x128xbf16>
    %cst_52 = arith.constant dense<0.000000e+00> : vector<8x128xf32>
    %88 = tpu.matmul %85, %87, %cst_52 {dimension_numbers = #tpu.dot_dimension_numbers<[1], [0], [0], [1], [0, 0, 1, 1], [], []>} : vector<8x64xbf16>, vector<64x128xbf16>, vector<8x128xf32> -> vector<8x128xf32>
    %89 = arith.addf %79, %88 : vector<8x128xf32>
    %90 = vector.extract_strided_slice %68 {offsets = [0, 4, 0], sizes = [8, 1, 64], strides = [1, 1, 1]} : vector<8x8x64xf32> to vector<8x1x64xf32>
    %91 = vector.shape_cast %90 : vector<8x1x64xf32> to vector<8x64xf32>
    %92 = vector.extract_strided_slice %68 {offsets = [0, 5, 0], sizes = [8, 1, 64], strides = [1, 1, 1]} : vector<8x8x64xf32> to vector<8x1x64xf32>
    %93 = vector.shape_cast %92 : vector<8x1x64xf32> to vector<8x64xf32>
    %94 = arith.maximumf %91, %93 : vector<8x64xf32>
    %95 = arith.truncf %94 : vector<8x64xf32> to vector<8x64xbf16>
    %c2_53 = arith.constant 2 : index
    %c0_54 = arith.constant 0 : index
    %c0_55 = arith.constant 0 : index
    %96 = vector.load %arg8[%c2_53, %c0_54, %c0_55] : memref<4x64x128xbf16, #tpu.memory_space<vmem>>, vector<1x64x128xbf16>
    %97 = vector.shape_cast %96 : vector<1x64x128xbf16> to vector<64x128xbf16>
    %cst_56 = arith.constant dense<0.000000e+00> : vector<8x128xf32>
    %98 = tpu.matmul %95, %97, %cst_56 {dimension_numbers = #tpu.dot_dimension_numbers<[1], [0], [0], [1], [0, 0, 1, 1], [], []>} : vector<8x64xbf16>, vector<64x128xbf16>, vector<8x128xf32> -> vector<8x128xf32>
    %99 = arith.addf %89, %98 : vector<8x128xf32>
    %100 = vector.extract_strided_slice %68 {offsets = [0, 6, 0], sizes = [8, 1, 64], strides = [1, 1, 1]} : vector<8x8x64xf32> to vector<8x1x64xf32>
    %101 = vector.shape_cast %100 : vector<8x1x64xf32> to vector<8x64xf32>
    %102 = vector.extract_strided_slice %68 {offsets = [0, 7, 0], sizes = [8, 1, 64], strides = [1, 1, 1]} : vector<8x8x64xf32> to vector<8x1x64xf32>
    %103 = vector.shape_cast %102 : vector<8x1x64xf32> to vector<8x64xf32>
    %104 = arith.maximumf %101, %103 : vector<8x64xf32>
    %105 = arith.truncf %104 : vector<8x64xf32> to vector<8x64xbf16>
    %c3_57 = arith.constant 3 : index
    %c0_58 = arith.constant 0 : index
    %c0_59 = arith.constant 0 : index
    %106 = vector.load %arg8[%c3_57, %c0_58, %c0_59] : memref<4x64x128xbf16, #tpu.memory_space<vmem>>, vector<1x64x128xbf16>
    %107 = vector.shape_cast %106 : vector<1x64x128xbf16> to vector<64x128xbf16>
    %cst_60 = arith.constant dense<0.000000e+00> : vector<8x128xf32>
    %108 = tpu.matmul %105, %107, %cst_60 {dimension_numbers = #tpu.dot_dimension_numbers<[1], [0], [0], [1], [0, 0, 1, 1], [], []>} : vector<8x64xbf16>, vector<64x128xbf16>, vector<8x128xf32> -> vector<8x128xf32>
    %109 = arith.addf %99, %108 : vector<8x128xf32>
    %c0_61 = arith.constant 0 : index
    %c0_62 = arith.constant 0 : index
    %110 = vector.load %arg9[%c0_61, %c0_62] : memref<1x128xf32, #tpu.memory_space<vmem>>, vector<1x128xf32>
    %111 = vector.broadcast %110 : vector<1x128xf32> to vector<8x128xf32>
    %112 = arith.addf %109, %111 : vector<8x128xf32>
    %cst_63 = arith.constant 0.000000e+00 : f32
    %113 = vector.broadcast %cst_63 : f32 to vector<8x128xf32>
    %114 = arith.maximumf %112, %113 : vector<8x128xf32>
    %115 = arith.truncf %114 : vector<8x128xf32> to vector<8x128xbf16>
    %c0_64 = arith.constant 0 : index
    %c0_65 = arith.constant 0 : index
    %116 = vector.load %arg10[%c0_64, %c0_65] : memref<128x128xbf16, #tpu.memory_space<vmem>>, vector<128x128xbf16>
    %cst_66 = arith.constant dense<0.000000e+00> : vector<8x128xf32>
    %117 = tpu.matmul %115, %116, %cst_66 {dimension_numbers = #tpu.dot_dimension_numbers<[1], [0], [0], [1], [0, 0, 1, 1], [], []>} : vector<8x128xbf16>, vector<128x128xbf16>, vector<8x128xf32> -> vector<8x128xf32>
    %c0_67 = arith.constant 0 : index
    %c0_68 = arith.constant 0 : index
    %118 = vector.load %arg11[%c0_67, %c0_68] : memref<1x128xf32, #tpu.memory_space<vmem>>, vector<1x128xf32>
    %119 = vector.broadcast %118 : vector<1x128xf32> to vector<8x128xf32>
    %120 = arith.addf %117, %119 : vector<8x128xf32>
    %cst_69 = arith.constant 0.000000e+00 : f32
    %121 = vector.broadcast %cst_69 : f32 to vector<8x128xf32>
    %122 = arith.maximumf %120, %121 : vector<8x128xf32>
    %123 = arith.truncf %122 : vector<8x128xf32> to vector<8x128xbf16>
    %c0_70 = arith.constant 0 : index
    %c0_71 = arith.constant 0 : index
    %124 = vector.load %arg12[%c0_70, %c0_71] : memref<128x128xbf16, #tpu.memory_space<vmem>>, vector<128x128xbf16>
    %cst_72 = arith.constant dense<0.000000e+00> : vector<8x128xf32>
    %125 = tpu.matmul %123, %124, %cst_72 {dimension_numbers = #tpu.dot_dimension_numbers<[1], [0], [0], [1], [0, 0, 1, 1], [], []>} : vector<8x128xbf16>, vector<128x128xbf16>, vector<8x128xf32> -> vector<8x128xf32>
    %c0_73 = arith.constant 0 : index
    %c0_74 = arith.constant 0 : index
    %126 = vector.load %arg13[%c0_73, %c0_74] : memref<1x128xf32, #tpu.memory_space<vmem>>, vector<1x128xf32>
    %127 = vector.broadcast %126 : vector<1x128xf32> to vector<8x128xf32>
    %128 = arith.addf %125, %127 : vector<8x128xf32>
    %c0_75 = arith.constant 0 : index
    %c0_76 = arith.constant 0 : index
    %129 = vector.load %arg14[%c0_75, %c0_76] : memref<8x128xf32, #tpu.memory_space<vmem>>, vector<8x128xf32>
    tpu.vector_store %arg14[%c0_75, %c0_76], %128 {strides = array<i32>} : memref<8x128xf32, #tpu.memory_space<vmem>>, vector<8x128xf32>,
    return
  }
  func.func @transform_0(%arg0: i32) -> (i32, i32, i32, i32) {
    %c0_i32 = arith.constant 0 : i32
    %c0_i32_0 = arith.constant 0 : i32
    %c0_i32_1 = arith.constant 0 : i32
    %c0_i32_2 = arith.constant 0 : i32
    return %arg0, %c0_i32, %c0_i32_0, %c0_i32_1 : i32, i32, i32, i32
  }
  func.func @transform_1(%arg0: i32) -> (i32, i32) {
    %c0_i32 = arith.constant 0 : i32
    %c0_i32_0 = arith.constant 0 : i32
    %c0_i32_1 = arith.constant 0 : i32
    return %c0_i32, %c0_i32_0 : i32, i32
  }
  func.func @transform_2(%arg0: i32) -> (i32, i32) {
    %c0_i32 = arith.constant 0 : i32
    %c0_i32_0 = arith.constant 0 : i32
    %c0_i32_1 = arith.constant 0 : i32
    return %c0_i32, %c0_i32_0 : i32, i32
  }
  func.func @transform_3(%arg0: i32) -> (i32, i32, i32) {
    %c0_i32 = arith.constant 0 : i32
    %c0_i32_0 = arith.constant 0 : i32
    %c0_i32_1 = arith.constant 0 : i32
    %c0_i32_2 = arith.constant 0 : i32
    return %c0_i32, %c0_i32_0, %c0_i32_1 : i32, i32, i32
  }
  func.func @transform_4(%arg0: i32) -> (i32, i32, i32) {
    %c0_i32 = arith.constant 0 : i32
    %c0_i32_0 = arith.constant 0 : i32
    %c0_i32_1 = arith.constant 0 : i32
    %c0_i32_2 = arith.constant 0 : i32
    return %c0_i32, %c0_i32_0, %c0_i32_1 : i32, i32, i32
  }
  func.func @transform_5(%arg0: i32) -> (i32, i32) {
    %c0_i32 = arith.constant 0 : i32
    %c0_i32_0 = arith.constant 0 : i32
    %c0_i32_1 = arith.constant 0 : i32
    return %c0_i32, %c0_i32_0 : i32, i32
  }
  func.func @transform_6(%arg0: i32) -> (i32, i32, i32) {
    %c0_i32 = arith.constant 0 : i32
    %c0_i32_0 = arith.constant 0 : i32
    %c0_i32_1 = arith.constant 0 : i32
    %c0_i32_2 = arith.constant 0 : i32
    return %c0_i32, %c0_i32_0, %c0_i32_1 : i32, i32, i32
  }
  func.func @transform_7(%arg0: i32) -> (i32, i32, i32) {
    %c0_i32 = arith.constant 0 : i32
    %c0_i32_0 = arith.constant 0 : i32
    %c0_i32_1 = arith.constant 0 : i32
    %c0_i32_2 = arith.constant 0 : i32
    return %c0_i32, %c0_i32_0, %c0_i32_1 : i32, i32, i32
  }
  func.func @transform_8(%arg0: i32) -> (i32, i32) {
    %c0_i32 = arith.constant 0 : i32
    %c0_i32_0 = arith.constant 0 : i32
    %c0_i32_1 = arith.constant 0 : i32
    return %c0_i32, %c0_i32_0 : i32, i32
  }
  func.func @transform_9(%arg0: i32) -> (i32, i32) {
    %c0_i32 = arith.constant 0 : i32
    %c0_i32_0 = arith.constant 0 : i32
    %c0_i32_1 = arith.constant 0 : i32
    return %c0_i32, %c0_i32_0 : i32, i32
  }
  func.func @transform_10(%arg0: i32) -> (i32, i32) {
    %c0_i32 = arith.constant 0 : i32
    %c0_i32_0 = arith.constant 0 : i32
    %c0_i32_1 = arith.constant 0 : i32
    return %c0_i32, %c0_i32_0 : i32, i32
  }
  func.func @transform_11(%arg0: i32) -> (i32, i32) {
    %c0_i32 = arith.constant 0 : i32
    %c0_i32_0 = arith.constant 0 : i32
    %c0_i32_1 = arith.constant 0 : i32
    return %c0_i32, %c0_i32_0 : i32, i32
  }
  func.func @transform_12(%arg0: i32) -> (i32, i32) {
    %c0_i32 = arith.constant 0 : i32
    %c0_i32_0 = arith.constant 0 : i32
    %c0_i32_1 = arith.constant 0 : i32
    return %c0_i32, %c0_i32_0 : i32, i32
  }
  func.func @transform_13(%arg0: i32) -> (i32, i32) {
    %c0_i32 = arith.constant 0 : i32
    %c0_i32_0 = arith.constant 0 : i32
    return %arg0, %c0_i32 : i32, i32
  }
}

</mosaic_0001>

<llo_original>
// kernel: forward.1
$region0: #{forward.1}
  #allocation0 [shape = 'u32[]', space=smem, size = 0x4, offset = 0x4, fixed_abs, tag = 'smem constant byte address 0x4 - core index']
  #allocation1 [shape = 'u32[144,128]{1,0:T(1,128)}', space=vmem, size = 0x12000, scoped, tag = 'internal scratch']
  %s0 = inlined_call_operand.vmem [shape: bf16[8,2,16,140], index: 0, kind: input, shape index: {}]
  %s1 = inlined_call_operand.vmem [shape: bf16[140,144], index: 1, kind: input, shape index: {}]
  %s2 = inlined_call_operand.vmem [shape: f32[1,144], index: 2, kind: input, shape index: {}]
  %s3 = inlined_call_operand.vmem [shape: bf16[2,144,72], index: 3, kind: input, shape index: {}]
  %s4 = inlined_call_operand.vmem [shape: bf16[5,72,128], index: 4, kind: input, shape index: {}]
  %s5 = inlined_call_operand.vmem [shape: f32[1,128], index: 5, kind: input, shape index: {}]
  %s6 = inlined_call_operand.vmem [shape: bf16[2,128,64], index: 6, kind: input, shape index: {}]
  %s7 = inlined_call_operand.vmem [shape: bf16[4,64,128], index: 7, kind: input, shape index: {}]
  %s8 = inlined_call_operand.vmem [shape: f32[1,128], index: 8, kind: input, shape index: {}]
  %s9 = inlined_call_operand.vmem [shape: bf16[128,128], index: 9, kind: input, shape index: {}]
  %s10 = inlined_call_operand.vmem [shape: f32[1,128], index: 10, kind: input, shape index: {}]
  %s11 = inlined_call_operand.vmem [shape: bf16[128,128], index: 11, kind: input, shape index: {}]
  %s12 = inlined_call_operand.vmem [shape: f32[1,128], index: 12, kind: input, shape index: {}]
  %s13 = inlined_call_operand.vmem [shape: f32[8,128], index: 13, kind: output, shape index: {}]
  %s14 = sld [smem:[#allocation0]]
  $region62: #{forward.1} parent=0
    _
  %s16 = ssub.s32 1, %s14
  %s17 = scalar_select 0, %s16, %s14
  // Predicated region
  $region2: #{forward.1} parent=0 // pred_check
    _
  $region3: #{forward.1} parent=0 // pred_check_branch
    %19 = sbr.rel (0) target = $region5
  $region4: #{forward.1} parent=0 // pred_region
    _
  $region5: #{forward.1} parent=0 // pred_fallthru
    _
  // Predicated region
  $region6: #{forward.1} parent=0 // pred_check
    _
  $region7: #{forward.1} parent=0 // pred_check_branch
    %21 = sbr.rel (0) target = $region9
  $region8: #{forward.1} parent=0 // pred_region
    _
  $region9: #{forward.1} parent=0 // pred_fallthru
    _
  // Predicated region
  $region10: #{forward.1} parent=0 // pred_check
    _
  $region11: #{forward.1} parent=0 // pred_check_branch
    %23 = sbr.rel (0) target = $region13
  $region12: #{forward.1} parent=0 // pred_region
    _
  $region13: #{forward.1} parent=0 // pred_fallthru
    _
  // Predicated region
  $region14: #{forward.1} parent=0 // pred_check
    _
  $region15: #{forward.1} parent=0 // pred_check_branch
    %25 = sbr.rel (0) target = $region17
  $region16: #{forward.1} parent=0 // pred_region
    _
  $region17: #{forward.1} parent=0 // pred_fallthru
    _
  // Predicated region
  $region18: #{forward.1} parent=0 // pred_check
    _
  $region19: #{forward.1} parent=0 // pred_check_branch
    %27 = sbr.rel (0) target = $region21
  $region20: #{forward.1} parent=0 // pred_region
    _
  $region21: #{forward.1} parent=0 // pred_fallthru
    _
  // Predicated region
  $region22: #{forward.1} parent=0 // pred_check
    _
  $region23: #{forward.1} parent=0 // pred_check_branch
    %29 = sbr.rel (0) target = $region25
  $region24: #{forward.1} parent=0 // pred_region
    _
  $region25: #{forward.1} parent=0 // pred_fallthru
    _
  // Predicated region
  $region26: #{forward.1} parent=0 // pred_check
    _
  $region27: #{forward.1} parent=0 // pred_check_branch
    %31 = sbr.rel (0) target = $region29
  $region28: #{forward.1} parent=0 // pred_region
    _
  $region29: #{forward.1} parent=0 // pred_fallthru
    _
  // Predicated region
  $region30: #{forward.1} parent=0 // pred_check
    _
  $region31: #{forward.1} parent=0 // pred_check_branch
    %33 = sbr.rel (0) target = $region33
  $region32: #{forward.1} parent=0 // pred_region
    _
  $region33: #{forward.1} parent=0 // pred_fallthru
    _
  // Predicated region
  $region34: #{forward.1} parent=0 // pred_check
    _
  $region35: #{forward.1} parent=0 // pred_check_branch
    %35 = sbr.rel (0) target = $region37
  $region36: #{forward.1} parent=0 // pred_region
    _
  $region37: #{forward.1} parent=0 // pred_fallthru
    _
  // Predicated region
  $region38: #{forward.1} parent=0 // pred_check
    _
  $region39: #{forward.1} parent=0 // pred_check_branch
    %37 = sbr.rel (0) target = $region41
  $region40: #{forward.1} parent=0 // pred_region
    _
  $region41: #{forward.1} parent=0 // pred_fallthru
    _
  // Predicated region
  $region42: #{forward.1} parent=0 // pred_check
    _
  $region43: #{forward.1} parent=0 // pred_check_branch
    %39 = sbr.rel (0) target = $region45
  $region44: #{forward.1} parent=0 // pred_region
    _
  $region45: #{forward.1} parent=0 // pred_fallthru
    _
  // Predicated region
  $region46: #{forward.1} parent=0 // pred_check
    _
  $region47: #{forward.1} parent=0 // pred_check_branch
    %41 = sbr.rel (0) target = $region49
  $region48: #{forward.1} parent=0 // pred_region
    _
  $region49: #{forward.1} parent=0 // pred_fallthru
    _
  // Predicated region
  $region50: #{forward.1} parent=0 // pred_check
    _
  $region51: #{forward.1} parent=0 // pred_check_branch
    %43 = sbr.rel (0) target = $region53
  $region52: #{forward.1} parent=0 // pred_region
    _
  $region53: #{forward.1} parent=0 // pred_fallthru
    _
  %v45 = vld [vmem:[%s0] sm:$0xff]
  %v46 = vld [vmem:[%s0 + $0x8] sm:$0xff]
  %v47 = vld [vmem:[%s0 + $0x10] sm:$0xff]
  %v48 = vld [vmem:[%s0 + $0x18] sm:$0xff]
  %v49 = vld [vmem:[%s0 + $0x20] sm:$0xff]
  %v50 = vld [vmem:[%s0 + $0x28] sm:$0xff]
  %v51 = vld [vmem:[%s0 + $0x30] sm:$0xff]
  %v52 = vld [vmem:[%s0 + $0x38] sm:$0xff]
  %v53 = vld [vmem:[%s0 + $0x40] sm:$0xff]
  %v54 = vld [vmem:[%s0 + $0x48] sm:$0xff]
  %v55 = vld [vmem:[%s0 + $0x50] sm:$0xff]
  %v56 = vld [vmem:[%s0 + $0x58] sm:$0xff]
  %v57 = vld [vmem:[%s0 + $0x60] sm:$0xff]
  %v58 = vld [vmem:[%s0 + $0x68] sm:$0xff]
  %v59 = vld [vmem:[%s0 + $0x70] sm:$0xff]
  %v60 = vld [vmem:[%s0 + $0x78] sm:$0xff]
  %v61 = vld [vmem:[%s0 + $0x80] sm:$0xff]
  %v62 = vld [vmem:[%s0 + $0x88] sm:$0xff]
  %v63 = vld [vmem:[%s0 + $0x90] sm:$0xff]
  %v64 = vld [vmem:[%s0 + $0x98] sm:$0xff]
  %v65 = vld [vmem:[%s0 + $0xa0] sm:$0xff]
  %v66 = vld [vmem:[%s0 + $0xa8] sm:$0xff]
  %v67 = vld [vmem:[%s0 + $0xb0] sm:$0xff]
  %v68 = vld [vmem:[%s0 + $0xb8] sm:$0xff]
  %v69 = vld [vmem:[%s0 + $0xc0] sm:$0xff]
  %v70 = vld [vmem:[%s0 + $0xc8] sm:$0xff]
  %v71 = vld [vmem:[%s0 + $0xd0] sm:$0xff]
  %v72 = vld [vmem:[%s0 + $0xd8] sm:$0xff]
  %v73 = vld [vmem:[%s0 + $0xe0] sm:$0xff]
  %v74 = vld [vmem:[%s0 + $0xe8] sm:$0xff]
  %v75 = vld [vmem:[%s0 + $0xf0] sm:$0xff]
  %v76 = vld [vmem:[%s0 + $0xf8] sm:$0xff]
  %v77 = vld [vmem:[%s1] sm:$0xff]
  %v78 = vld [vmem:[%s1 + $0x8] sm:$0xff]
  %v79 = vld [vmem:[%s1 + $0x10] sm:$0xff]
  %v80 = vld [vmem:[%s1 + $0x18] sm:$0xff]
  %v81 = vld [vmem:[%s1 + $0x20] sm:$0xff]
  %v82 = vld [vmem:[%s1 + $0x28] sm:$0xff]
  %v83 = vld [vmem:[%s1 + $0x30] sm:$0xff]
  %v84 = vld [vmem:[%s1 + $0x38] sm:$0xff]
  %v85 = vld [vmem:[%s1 + $0x40] sm:$0xff]
  %v86 = vld [vmem:[%s1 + $0x48] sm:$0xff]
  %v87 = vld [vmem:[%s1 + $0x50] sm:$0xff]
  %v88 = vld [vmem:[%s1 + $0x58] sm:$0xff]
  %v89 = vld [vmem:[%s1 + $0x60] sm:$0xff]
  %v90 = vld [vmem:[%s1 + $0x68] sm:$0xff]
  %v91 = vld [vmem:[%s1 + $0x70] sm:$0xff]
  %v92 = vld [vmem:[%s1 + $0x78] sm:$0xff]
  %v93 = vld [vmem:[%s1 + $0x80] sm:$0xff]
  %v94 = vld [vmem:[%s1 + $0x88] sm:$0x33]
  %v95 = vld [vmem:[%s2] sm:$0x3]
  %v97 = vlaneseq
  %v98 = vshrl.u32 %v97, 7
  %v99 = vsub.s32 0, %v98
  %v100 = vrot.slane %v95, %v99
  %v101 = vlaneseq
  %v102 = vshrl.u32 %v101, 7
  %v103 = vsub.s32 1, %v102
  %v104 = vrot.slane %v95, %v103
  %v139 = vunpack.c.l.b16 %v45
  %v140 = vunpack.c.h.b16 %v45
  %v141 = vunpack.c.l.b16 %v46
  %v142 = vunpack.c.h.b16 %v46
  %v143 = vunpack.c.l.b16 %v47
  %v144 = vunpack.c.h.b16 %v47
  %v145 = vunpack.c.l.b16 %v48
  %v146 = vunpack.c.h.b16 %v48
  %v147 = vunpack.c.l.b16 %v49
  %v148 = vunpack.c.h.b16 %v49
  %v149 = vunpack.c.l.b16 %v50
  %v150 = vunpack.c.h.b16 %v50
  %v151 = vunpack.c.l.b16 %v51
  %v152 = vunpack.c.h.b16 %v51
  %v153 = vunpack.c.l.b16 %v52
  %v154 = vunpack.c.h.b16 %v52
  %v155 = vunpack.c.l.b16 %v53
  %v156 = vunpack.c.h.b16 %v53
  %v157 = vunpack.c.l.b16 %v54
  %v158 = vunpack.c.h.b16 %v54
  %v159 = vunpack.c.l.b16 %v55
  %v160 = vunpack.c.h.b16 %v55
  %v161 = vunpack.c.l.b16 %v56
  %v162 = vunpack.c.h.b16 %v56
  %v163 = vunpack.c.l.b16 %v57
  %v164 = vunpack.c.h.b16 %v57
  %v165 = vunpack.c.l.b16 %v58
  %v166 = vunpack.c.h.b16 %v58
  %v167 = vunpack.c.l.b16 %v59
  %v168 = vunpack.c.h.b16 %v59
  %v169 = vunpack.c.l.b16 %v60
  %v170 = vunpack.c.h.b16 %v60
  %v171 = vunpack.c.l.b16 %v61
  %v172 = vunpack.c.h.b16 %v61
  %v173 = vunpack.c.l.b16 %v62
  %v174 = vunpack.c.h.b16 %v62
  %v175 = vunpack.c.l.b16 %v63
  %v176 = vunpack.c.h.b16 %v63
  %v177 = vunpack.c.l.b16 %v64
  %v178 = vunpack.c.h.b16 %v64
  %v179 = vunpack.c.l.b16 %v65
  %v180 = vunpack.c.h.b16 %v65
  %v181 = vunpack.c.l.b16 %v66
  %v182 = vunpack.c.h.b16 %v66
  %v183 = vunpack.c.l.b16 %v67
  %v184 = vunpack.c.h.b16 %v67
  %v185 = vunpack.c.l.b16 %v68
  %v186 = vunpack.c.h.b16 %v68
  %v187 = vunpack.c.l.b16 %v69
  %v188 = vunpack.c.h.b16 %v69
  %v189 = vunpack.c.l.b16 %v70
  %v190 = vunpack.c.h.b16 %v70
  %v191 = vunpack.c.l.b16 %v71
  %v192 = vunpack.c.h.b16 %v71
  %v193 = vunpack.c.l.b16 %v72
  %v194 = vunpack.c.h.b16 %v72
  %v195 = vunpack.c.l.b16 %v73
  %v196 = vunpack.c.h.b16 %v73
  %v197 = vunpack.c.l.b16 %v74
  %v198 = vunpack.c.h.b16 %v74
  %v199 = vunpack.c.l.b16 %v75
  %v200 = vunpack.c.h.b16 %v75
  %v201 = vunpack.c.l.b16 %v76
  %v202 = vunpack.c.h.b16 %v76
  %v203 = vpack.c.b16 %v141, %v139
  %v204 = vpack.c.b16 %v142, %v140
  %v205 = vpack.c.b16 %v145, %v143
  %v206 = vpack.c.b16 %v146, %v144
  %v207 = vpack.c.b16 %v149, %v147
  %v208 = vpack.c.b16 %v150, %v148
  %v209 = vpack.c.b16 %v153, %v151
  %v210 = vpack.c.b16 %v154, %v152
  %v211 = vpack.c.b16 %v157, %v155
  %v212 = vpack.c.b16 %v158, %v156
  %v213 = vpack.c.b16 %v161, %v159
  %v214 = vpack.c.b16 %v162, %v160
  %v215 = vpack.c.b16 %v165, %v163
  %v216 = vpack.c.b16 %v166, %v164
  %v217 = vpack.c.b16 %v169, %v167
  %v218 = vpack.c.b16 %v170, %v168
  %v219 = vpack.c.b16 %v173, %v171
  %v220 = vpack.c.b16 %v174, %v172
  %v221 = vpack.c.b16 %v177, %v175
  %v222 = vpack.c.b16 %v178, %v176
  %v223 = vpack.c.b16 %v181, %v179
  %v224 = vpack.c.b16 %v182, %v180
  %v225 = vpack.c.b16 %v185, %v183
  %v226 = vpack.c.b16 %v186, %v184
  %v227 = vpack.c.b16 %v189, %v187
  %v228 = vpack.c.b16 %v190, %v188
  %v229 = vpack.c.b16 %v193, %v191
  %v230 = vpack.c.b16 %v194, %v192
  %v231 = vpack.c.b16 %v197, %v195
  %v232 = vpack.c.b16 %v198, %v196
  %v233 = vpack.c.b16 %v201, %v199
  %v234 = vpack.c.b16 %v202, %v200
  %v269 = vunpack.c.l.b16 %v77
  %v270 = vunpack.c.h.b16 %v77
  %v271 = vunpack.c.l.b16 %v78
  %v272 = vunpack.c.h.b16 %v78
  %v273 = vunpack.c.l.b16 %v79
  %v274 = vunpack.c.h.b16 %v79
  %v275 = vunpack.c.l.b16 %v80
  %v276 = vunpack.c.h.b16 %v80
  %v277 = vunpack.c.l.b16 %v81
  %v278 = vunpack.c.h.b16 %v81
  %v279 = vunpack.c.l.b16 %v82
  %v280 = vunpack.c.h.b16 %v82
  %v281 = vunpack.c.l.b16 %v83
  %v282 = vunpack.c.h.b16 %v83
  %v283 = vunpack.c.l.b16 %v84
  %v284 = vunpack.c.h.b16 %v84
  %v285 = vunpack.c.l.b16 %v85
  %v286 = vunpack.c.h.b16 %v85
  %v287 = vunpack.c.l.b16 %v86
  %v288 = vunpack.c.h.b16 %v86
  %v289 = vunpack.c.l.b16 %v87
  %v290 = vunpack.c.h.b16 %v87
  %v291 = vunpack.c.l.b16 %v88
  %v292 = vunpack.c.h.b16 %v88
  %v293 = vunpack.c.l.b16 %v89
  %v294 = vunpack.c.h.b16 %v89
  %v295 = vunpack.c.l.b16 %v90
  %v296 = vunpack.c.h.b16 %v90
  %v297 = vunpack.c.l.b16 %v91
  %v298 = vunpack.c.h.b16 %v91
  %v299 = vunpack.c.l.b16 %v92
  %v300 = vunpack.c.h.b16 %v92
  %v301 = vunpack.c.l.b16 %v93
  %v302 = vunpack.c.h.b16 %v93
  %v303 = vunpack.c.l.b16 %v94
  %v304 = vunpack.c.h.b16 %v94
  %v305 = vpack.c.b16 %v271, %v269
  %v306 = vpack.c.b16 %v272, %v270
  %v307 = vpack.c.b16 %v275, %v273
  %v308 = vpack.c.b16 %v276, %v274
  %v309 = vpack.c.b16 %v279, %v277
  %v310 = vpack.c.b16 %v280, %v278
  %v311 = vpack.c.b16 %v283, %v281
  %v312 = vpack.c.b16 %v284, %v282
  %v313 = vpack.c.b16 %v287, %v285
  %v314 = vpack.c.b16 %v288, %v286
  %v315 = vpack.c.b16 %v291, %v289
  %v316 = vpack.c.b16 %v292, %v290
  %v317 = vpack.c.b16 %v295, %v293
  %v318 = vpack.c.b16 %v296, %v294
  %v319 = vpack.c.b16 %v299, %v297
  %v320 = vpack.c.b16 %v300, %v298
  %v321 = vpack.c.b16 %v303, %v301
  %v322 = vpack.c.b16 %v304, %v302
  %vm339 = vcmask 97280
  %v341 = vsel %vm339, %v204, 0
  %v344 = vsel %vm339, %v206, 0
  %v347 = vsel %vm339, %v208, 0
  %v350 = vsel %vm339, %v210, 0
  %v353 = vsel %vm339, %v212, 0
  %v356 = vsel %vm339, %v214, 0
  %v359 = vsel %vm339, %v216, 0
  %v362 = vsel %vm339, %v218, 0
  %v365 = vsel %vm339, %v220, 0
  %v368 = vsel %vm339, %v222, 0
  %v371 = vsel %vm339, %v224, 0
  %v374 = vsel %vm339, %v226, 0
  %v377 = vsel %vm339, %v228, 0
  %v380 = vsel %vm339, %v230, 0
  %v383 = vsel %vm339, %v232, 0
  %v386 = vsel %vm339, %v234, 0
  %vm388 = vcmask 1045504
  %v390 = vsel %vm388, %v321, 0
  %v393 = vsel %vm388, %v322, 0
  %395 = vmatprep.subr.bf16.mxu0 %v306
  %396 = vmatpush1.bf16.msra.mxu0 %v305
  %397 = vmatprep.subr.bf16.mxu0 %v308
  %398 = vmatpush1.bf16.msra.mxu0 %v307
  %399 = vmatprep.subr.bf16.mxu0 %v310
  %400 = vmatpush1.bf16.msra.mxu0 %v309
  %401 = vmatprep.subr.bf16.mxu0 %v312
  %402 = vmatpush1.bf16.msra.mxu0 %v311
  %403 = vmatprep.subr.bf16.mxu0 %v314
  %404 = vmatpush1.bf16.msra.mxu0 %v313
  %405 = vmatprep.subr.bf16.mxu0 %v316
  %406 = vmatpush1.bf16.msra.mxu0 %v315
  %407 = vmatprep.subr.bf16.mxu0 %v318
  %408 = vmatpush1.bf16.msra.mxu0 %v317
  %409 = vmatprep.subr.bf16.mxu0 %v320
  %410 = vmatpush1.bf16.msra.mxu0 %v319
  %411 = vmatprep.subr.bf16.mxu0 %v393
  %412 = vmatpush1.bf16.msra.mxu0 %v390
  %413 = vmatprep.subr.bf16.mxu0 0
  %414 = vmatpush1.bf16.msra.mxu0 0
  %415 = vmatprep.subr.bf16.mxu0 0
  %416 = vmatpush1.bf16.msra.mxu0 0
  %417 = vmatprep.subr.bf16.mxu0 0
  %418 = vmatpush1.bf16.msra.mxu0 0
  %419 = vmatprep.subr.bf16.mxu0 0
  %420 = vmatpush1.bf16.msra.mxu0 0
  %421 = vmatprep.subr.bf16.mxu0 0
  %422 = vmatpush1.bf16.msra.mxu0 0
  %423 = vmatprep.subr.bf16.mxu0 0
  %424 = vmatpush1.bf16.msra.mxu0 0
  %425 = vmatprep.subr.bf16.mxu0 0
  %426 = vmatpush1.bf16.msra.mxu0 0
  %427 = vmatprep.mubr.bf16.mxu0 %v341
  %428 = vmatmul.mubr.bf16.gmra.mrb[0].mxu0 %v203
  %v429 = vpop.f32.mrb[0].mxu0
  %v430 = vadd.f32 %v100, %v429
  %v431 = vpop.f32.mrb[0].mxu0
  %v432 = vadd.f32 %v104, %v431
  %v433 = vpop.f32.mrb[0].mxu0
  %v434 = vadd.f32 %v100, %v433
  %v435 = vpop.f32.mrb[0].mxu0
  %v436 = vadd.f32 %v104, %v435
  %437 = vmatprep.mubr.bf16.mxu0 %v344
  %438 = vmatmul.mubr.bf16.gmra.mrb[0].mxu0 %v205
  %v439 = vpop.f32.mrb[0].mxu0
  %v440 = vadd.f32 %v100, %v439
  %v441 = vpop.f32.mrb[0].mxu0
  %v442 = vadd.f32 %v104, %v441
  %v443 = vpop.f32.mrb[0].mxu0
  %v444 = vadd.f32 %v100, %v443
  %v445 = vpop.f32.mrb[0].mxu0
  %v446 = vadd.f32 %v104, %v445
  %447 = vmatprep.mubr.bf16.mxu0 %v347
  %448 = vmatmul.mubr.bf16.gmra.mrb[0].mxu0 %v207
  %v449 = vpop.f32.mrb[0].mxu0
  %v450 = vadd.f32 %v100, %v449
  %v451 = vpop.f32.mrb[0].mxu0
  %v452 = vadd.f32 %v104, %v451
  %v453 = vpop.f32.mrb[0].mxu0
  %v454 = vadd.f32 %v100, %v453
  %v455 = vpop.f32.mrb[0].mxu0
  %v456 = vadd.f32 %v104, %v455
  %457 = vmatprep.mubr.bf16.mxu0 %v350
  %458 = vmatmul.mubr.bf16.gmra.mrb[0].mxu0 %v209
  %v459 = vpop.f32.mrb[0].mxu0
  %v460 = vadd.f32 %v100, %v459
  %v461 = vpop.f32.mrb[0].mxu0
  %v462 = vadd.f32 %v104, %v461
  %v463 = vpop.f32.mrb[0].mxu0
  %v464 = vadd.f32 %v100, %v463
  %v465 = vpop.f32.mrb[0].mxu0
  %v466 = vadd.f32 %v104, %v465
  %467 = vmatprep.mubr.bf16.mxu0 %v353
  %468 = vmatmul.mubr.bf16.gmra.mrb[0].mxu0 %v211
  %v469 = vpop.f32.mrb[0].mxu0
  %v470 = vadd.f32 %v100, %v469
  %v471 = vpop.f32.mrb[0].mxu0
  %v472 = vadd.f32 %v104, %v471
  %v473 = vpop.f32.mrb[0].mxu0
  %v474 = vadd.f32 %v100, %v473
  %v475 = vpop.f32.mrb[0].mxu0
  %v476 = vadd.f32 %v104, %v475
  %477 = vmatprep.mubr.bf16.mxu0 %v356
  %478 = vmatmul.mubr.bf16.gmra.mrb[0].mxu0 %v213
  %v479 = vpop.f32.mrb[0].mxu0
  %v480 = vadd.f32 %v100, %v479
  %v481 = vpop.f32.mrb[0].mxu0
  %v482 = vadd.f32 %v104, %v481
  %v483 = vpop.f32.mrb[0].mxu0
  %v484 = vadd.f32 %v100, %v483
  %v485 = vpop.f32.mrb[0].mxu0
  %v486 = vadd.f32 %v104, %v485
  %487 = vmatprep.mubr.bf16.mxu0 %v359
  %488 = vmatmul.mubr.bf16.gmra.mrb[0].mxu0 %v215
  %v489 = vpop.f32.mrb[0].mxu0
  %v490 = vadd.f32 %v100, %v489
  %v491 = vpop.f32.mrb[0].mxu0
  %v492 = vadd.f32 %v104, %v491
  %v493 = vpop.f32.mrb[0].mxu0
  %v494 = vadd.f32 %v100, %v493
  %v495 = vpop.f32.mrb[0].mxu0
  %v496 = vadd.f32 %v104, %v495
  %497 = vmatprep.mubr.bf16.mxu0 %v362
  %498 = vmatmul.mubr.bf16.gmra.mrb[0].mxu0 %v217
  %v499 = vpop.f32.mrb[0].mxu0
  %v500 = vadd.f32 %v100, %v499
  %v501 = vpop.f32.mrb[0].mxu0
  %v502 = vadd.f32 %v104, %v501
  %v503 = vpop.f32.mrb[0].mxu0
  %v504 = vadd.f32 %v100, %v503
  %v505 = vpop.f32.mrb[0].mxu0
  %v506 = vadd.f32 %v104, %v505
  %507 = vmatprep.mubr.bf16.mxu0 %v365
  %508 = vmatmul.mubr.bf16.gmra.mrb[0].mxu0 %v219
  %v509 = vpop.f32.mrb[0].mxu0
  %v510 = vadd.f32 %v100, %v509
  %v511 = vpop.f32.mrb[0].mxu0
  %v512 = vadd.f32 %v104, %v511
  %v513 = vpop.f32.mrb[0].mxu0
  %v514 = vadd.f32 %v100, %v513
  %v515 = vpop.f32.mrb[0].mxu0
  %v516 = vadd.f32 %v104, %v515
  %517 = vmatprep.mubr.bf16.mxu0 %v368
  %518 = vmatmul.mubr.bf16.gmra.mrb[0].mxu0 %v221
  %v519 = vpop.f32.mrb[0].mxu0
  %v520 = vadd.f32 %v100, %v519
  %v521 = vpop.f32.mrb[0].mxu0
  %v522 = vadd.f32 %v104, %v521
  %v523 = vpop.f32.mrb[0].mxu0
  %v524 = vadd.f32 %v100, %v523
  %v525 = vpop.f32.mrb[0].mxu0
  %v526 = vadd.f32 %v104, %v525
  %527 = vmatprep.mubr.bf16.mxu0 %v371
  %528 = vmatmul.mubr.bf16.gmra.mrb[0].mxu0 %v223
  %v529 = vpop.f32.mrb[0].mxu0
  %v530 = vadd.f32 %v100, %v529
  %v531 = vpop.f32.mrb[0].mxu0
  %v532 = vadd.f32 %v104, %v531
  %v533 = vpop.f32.mrb[0].mxu0
  %v534 = vadd.f32 %v100, %v533
  %v535 = vpop.f32.mrb[0].mxu0
  %v536 = vadd.f32 %v104, %v535
  %537 = vmatprep.mubr.bf16.mxu0 %v374
  %538 = vmatmul.mubr.bf16.gmra.mrb[0].mxu0 %v225
  %v539 = vpop.f32.mrb[0].mxu0
  %v540 = vadd.f32 %v100, %v539
  %v541 = vpop.f32.mrb[0].mxu0
  %v542 = vadd.f32 %v104, %v541
  %v543 = vpop.f32.mrb[0].mxu0
  %v544 = vadd.f32 %v100, %v543
  %v545 = vpop.f32.mrb[0].mxu0
  %v546 = vadd.f32 %v104, %v545
  %547 = vmatprep.mubr.bf16.mxu0 %v377
  %548 = vmatmul.mubr.bf16.gmra.mrb[0].mxu0 %v227
  %v549 = vpop.f32.mrb[0].mxu0
  %v550 = vadd.f32 %v100, %v549
  %v551 = vpop.f32.mrb[0].mxu0
  %v552 = vadd.f32 %v104, %v551
  %v553 = vpop.f32.mrb[0].mxu0
  %v554 = vadd.f32 %v100, %v553
  %v555 = vpop.f32.mrb[0].mxu0
  %v556 = vadd.f32 %v104, %v555
  %557 = vmatprep.mubr.bf16.mxu0 %v380
  %558 = vmatmul.mubr.bf16.gmra.mrb[0].mxu0 %v229
  %v559 = vpop.f32.mrb[0].mxu0
  %v560 = vadd.f32 %v100, %v559
  %v561 = vpop.f32.mrb[0].mxu0
  %v562 = vadd.f32 %v104, %v561
  %v563 = vpop.f32.mrb[0].mxu0
  %v564 = vadd.f32 %v100, %v563
  %v565 = vpop.f32.mrb[0].mxu0
  %v566 = vadd.f32 %v104, %v565
  %567 = vmatprep.mubr.bf16.mxu0 %v383
  %568 = vmatmul.mubr.bf16.gmra.mrb[0].mxu0 %v231
  %v569 = vpop.f32.mrb[0].mxu0
  %v570 = vadd.f32 %v100, %v569
  %v571 = vpop.f32.mrb[0].mxu0
  %v572 = vadd.f32 %v104, %v571
  %v573 = vpop.f32.mrb[0].mxu0
  %v574 = vadd.f32 %v100, %v573
  %v575 = vpop.f32.mrb[0].mxu0
  %v576 = vadd.f32 %v104, %v575
  %577 = vmatprep.mubr.bf16.mxu0 %v386
  %578 = vmatmul.mubr.bf16.gmra.mrb[0].mxu0 %v233
  %v579 = vpop.f32.mrb[0].mxu0
  %v580 = vadd.f32 %v100, %v579
  %v581 = vpop.f32.mrb[0].mxu0
  %v582 = vadd.f32 %v104, %v581
  %v583 = vpop.f32.mrb[0].mxu0
  %v584 = vadd.f32 %v100, %v583
  %v585 = vpop.f32.mrb[0].mxu0
  %v586 = vadd.f32 %v104, %v585
  %587 = vdwg.mxu0
  %v588 = vmax.f32 %v430, 0.0
  %v589 = vmax.f32 %v432, 0.0
  %v590 = vmax.f32 %v434, 0.0
  %v591 = vmax.f32 %v436, 0.0
  %v592 = vmax.f32 %v440, 0.0
  %v593 = vmax.f32 %v442, 0.0
  %v594 = vmax.f32 %v444, 0.0
  %v595 = vmax.f32 %v446, 0.0
  %v596 = vmax.f32 %v450, 0.0
  %v597 = vmax.f32 %v452, 0.0
  %v598 = vmax.f32 %v454, 0.0
  %v599 = vmax.f32 %v456, 0.0
  %v600 = vmax.f32 %v460, 0.0
  %v601 = vmax.f32 %v462, 0.0
  %v602 = vmax.f32 %v464, 0.0
  %v603 = vmax.f32 %v466, 0.0
  %v604 = vmax.f32 %v470, 0.0
  %v605 = vmax.f32 %v472, 0.0
  %v606 = vmax.f32 %v474, 0.0
  %v607 = vmax.f32 %v476, 0.0
  %v608 = vmax.f32 %v480, 0.0
  %v609 = vmax.f32 %v482, 0.0
  %v610 = vmax.f32 %v484, 0.0
  %v611 = vmax.f32 %v486, 0.0
  %v612 = vmax.f32 %v490, 0.0
  %v613 = vmax.f32 %v492, 0.0
  %v614 = vmax.f32 %v494, 0.0
  %v615 = vmax.f32 %v496, 0.0
  %v616 = vmax.f32 %v500, 0.0
  %v617 = vmax.f32 %v502, 0.0
  %v618 = vmax.f32 %v504, 0.0
  %v619 = vmax.f32 %v506, 0.0
  %v620 = vmax.f32 %v510, 0.0
  %v621 = vmax.f32 %v512, 0.0
  %v622 = vmax.f32 %v514, 0.0
  %v623 = vmax.f32 %v516, 0.0
  %v624 = vmax.f32 %v520, 0.0
  %v625 = vmax.f32 %v522, 0.0
  %v626 = vmax.f32 %v524, 0.0
  %v627 = vmax.f32 %v526, 0.0
  %v628 = vmax.f32 %v530, 0.0
  %v629 = vmax.f32 %v532, 0.0
  %v630 = vmax.f32 %v534, 0.0
  %v631 = vmax.f32 %v536, 0.0
  %v632 = vmax.f32 %v540, 0.0
  %v633 = vmax.f32 %v542, 0.0
  %v634 = vmax.f32 %v544, 0.0
  %v635 = vmax.f32 %v546, 0.0
  %v636 = vmax.f32 %v550, 0.0
  %v637 = vmax.f32 %v552, 0.0
  %v638 = vmax.f32 %v554, 0.0
  %v639 = vmax.f32 %v556, 0.0
  %v640 = vmax.f32 %v560, 0.0
  %v641 = vmax.f32 %v562, 0.0
  %v642 = vmax.f32 %v564, 0.0
  %v643 = vmax.f32 %v566, 0.0
  %v644 = vmax.f32 %v570, 0.0
  %v645 = vmax.f32 %v572, 0.0
  %v646 = vmax.f32 %v574, 0.0
  %v647 = vmax.f32 %v576, 0.0
  %v648 = vmax.f32 %v580, 0.0
  %v649 = vmax.f32 %v582, 0.0
  %v650 = vmax.f32 %v584, 0.0
  %v651 = vmax.f32 %v586, 0.0
  %v652 = vpack.c.bf16 %v590, %v588
  %v653 = vpack.c.bf16 %v591, %v589
  %v654 = vpack.c.bf16 %v594, %v592
  %v655 = vpack.c.bf16 %v595, %v593
  %v656 = vpack.c.bf16 %v598, %v596
  %v657 = vpack.c.bf16 %v599, %v597
  %v658 = vpack.c.bf16 %v602, %v600
  %v659 = vpack.c.bf16 %v603, %v601
  %v660 = vpack.c.bf16 %v606, %v604
  %v661 = vpack.c.bf16 %v607, %v605
  %v662 = vpack.c.bf16 %v610, %v608
  %v663 = vpack.c.bf16 %v611, %v609
  %v664 = vpack.c.bf16 %v614, %v612
  %v665 = vpack.c.bf16 %v615, %v613
  %v666 = vpack.c.bf16 %v618, %v616
  %v667 = vpack.c.bf16 %v619, %v617
  %v668 = vpack.c.bf16 %v622, %v620
  %v669 = vpack.c.bf16 %v623, %v621
  %v670 = vpack.c.bf16 %v626, %v624
  %v671 = vpack.c.bf16 %v627, %v625
  %v672 = vpack.c.bf16 %v630, %v628
  %v673 = vpack.c.bf16 %v631, %v629
  %v674 = vpack.c.bf16 %v634, %v632
  %v675 = vpack.c.bf16 %v635, %v633
  %v676 = vpack.c.bf16 %v638, %v636
  %v677 = vpack.c.bf16 %v639, %v637
  %v678 = vpack.c.bf16 %v642, %v640
  %v679 = vpack.c.bf16 %v643, %v641
  %v680 = vpack.c.bf16 %v646, %v644
  %v681 = vpack.c.bf16 %v647, %v645
  %v682 = vpack.c.bf16 %v650, %v648
  %v683 = vpack.c.bf16 %v651, %v649
  %v684 = vld [vmem:[%s3] sm:$0xf]
  %v685 = vld [vmem:[%s3 + $0x4] sm:$0xf]
  %v686 = vld [vmem:[%s3 + $0x8] sm:$0xf]
  %v687 = vld [vmem:[%s3 + $0xc] sm:$0xf]
  %v688 = vld [vmem:[%s3 + $0x10] sm:$0xf]
  %v689 = vld [vmem:[%s3 + $0x14] sm:$0xf]
  %v690 = vld [vmem:[%s3 + $0x18] sm:$0xf]
  %v691 = vld [vmem:[%s3 + $0x1c] sm:$0xf]
  %v692 = vld [vmem:[%s3 + $0x20] sm:$0xf]
  %v693 = vld [vmem:[%s3 + $0x24] sm:$0xf]
  %v694 = vld [vmem:[%s3 + $0x28] sm:$0xf]
  %v695 = vld [vmem:[%s3 + $0x2c] sm:$0xf]
  %v696 = vld [vmem:[%s3 + $0x30] sm:$0xf]
  %v697 = vld [vmem:[%s3 + $0x34] sm:$0xf]
  %v698 = vld [vmem:[%s3 + $0x38] sm:$0xf]
  %v699 = vld [vmem:[%s3 + $0x3c] sm:$0xf]
  %v700 = vld [vmem:[%s3 + $0x40] sm:$0xf]
  %v701 = vld [vmem:[%s3 + $0x44] sm:$0xf]
  %v720 = vunpack.c.l.b16 %v684
  %v721 = vunpack.c.l.b16 %v685
  %v722 = vunpack.c.l.b16 %v686
  %v723 = vunpack.c.l.b16 %v687
  %v724 = vunpack.c.l.b16 %v688
  %v725 = vunpack.c.l.b16 %v689
  %v726 = vunpack.c.l.b16 %v690
  %v727 = vunpack.c.l.b16 %v691
  %v728 = vunpack.c.l.b16 %v692
  %v729 = vunpack.c.l.b16 %v693
  %v730 = vunpack.c.l.b16 %v694
  %v731 = vunpack.c.l.b16 %v695
  %v732 = vunpack.c.l.b16 %v696
  %v733 = vunpack.c.l.b16 %v697
  %v734 = vunpack.c.l.b16 %v698
  %v735 = vunpack.c.l.b16 %v699
  %v736 = vunpack.c.l.b16 %v700
  %v737 = vunpack.c.l.b16 %v701
  %v738 = vpack.c.b16 %v721, %v720
  %v739 = vpack.c.b16 %v723, %v722
  %v740 = vpack.c.b16 %v725, %v724
  %v741 = vpack.c.b16 %v727, %v726
  %v742 = vpack.c.b16 %v729, %v728
  %v743 = vpack.c.b16 %v731, %v730
  %v744 = vpack.c.b16 %v733, %v732
  %v745 = vpack.c.b16 %v735, %v734
  %v746 = vpack.c.b16 %v737, %v736
  %vm756 = vcmask 130048
  %v758 = vsel %vm756, %v653, 0
  %v761 = vsel %vm756, %v655, 0
  %v764 = vsel %vm756, %v657, 0
  %v767 = vsel %vm756, %v659, 0
  %v770 = vsel %vm756, %v661, 0
  %v773 = vsel %vm756, %v663, 0
  %v776 = vsel %vm756, %v665, 0
  %v779 = vsel %vm756, %v667, 0
  %v782 = vsel %vm756, %v669, 0
  %v785 = vsel %vm756, %v671, 0
  %v788 = vsel %vm756, %v673, 0
  %v791 = vsel %vm756, %v675, 0
  %v794 = vsel %vm756, %v677, 0
  %v797 = vsel %vm756, %v679, 0
  %v800 = vsel %vm756, %v681, 0
  %v803 = vsel %vm756, %v683, 0
  %805 = vmatprep.subr.bf16.mxu0 0
  %806 = vmatpush1.bf16.msra.mxu0 %v738
  %807 = vmatprep.subr.bf16.mxu0 0
  %808 = vmatpush1.bf16.msra.mxu0 %v739
  %809 = vmatprep.subr.bf16.mxu0 0
  %810 = vmatpush1.bf16.msra.mxu0 %v740
  %811 = vmatprep.subr.bf16.mxu0 0
  %812 = vmatpush1.bf16.msra.mxu0 %v741
  %813 = vmatprep.subr.bf16.mxu0 0
  %814 = vmatpush1.bf16.msra.mxu0 %v742
  %815 = vmatprep.subr.bf16.mxu0 0
  %816 = vmatpush1.bf16.msra.mxu0 %v743
  %817 = vmatprep.subr.bf16.mxu0 0
  %818 = vmatpush1.bf16.msra.mxu0 %v744
  %819 = vmatprep.subr.bf16.mxu0 0
  %820 = vmatpush1.bf16.msra.mxu0 %v745
  %821 = vmatprep.subr.bf16.mxu0 0
  %822 = vmatpush1.bf16.msra.mxu0 %v746
  %823 = vmatprep.subr.bf16.mxu0 0
  %824 = vmatpush1.bf16.msra.mxu0 0
  %825 = vmatprep.subr.bf16.mxu0 0
  %826 = vmatpush1.bf16.msra.mxu0 0
  %827 = vmatprep.subr.bf16.mxu0 0
  %828 = vmatpush1.bf16.msra.mxu0 0
  %829 = vmatprep.subr.bf16.mxu0 0
  %830 = vmatpush1.bf16.msra.mxu0 0
  %831 = vmatprep.subr.bf16.mxu0 0
  %832 = vmatpush1.bf16.msra.mxu0 0
  %833 = vmatprep.subr.bf16.mxu0 0
  %834 = vmatpush1.bf16.msra.mxu0 0
  %835 = vmatprep.subr.bf16.mxu0 0
  %836 = vmatpush1.bf16.msra.mxu0 0
  %837 = vmatprep.mubr.bf16.mxu0 %v758
  %838 = vmatmul.mubr.bf16.gmra.mrb[0].mxu0 %v652
  %v839 = vpop.f32.mrb[0].mxu0
  %v840 = vadd.f32 0.0, %v839
  %v841 = vpop.f32.mrb[0].mxu0
  %v842 = vpop.f32.mrb[0].mxu0
  %v843 = vadd.f32 0.0, %v842
  %v844 = vpop.f32.mrb[0].mxu0
  %845 = vmatprep.mubr.bf16.mxu0 %v761
  %846 = vmatmul.mubr.bf16.gmra.mrb[0].mxu0 %v654
  %v847 = vpop.f32.mrb[0].mxu0
  %v848 = vadd.f32 0.0, %v847
  %v849 = vpop.f32.mrb[0].mxu0
  %v850 = vpop.f32.mrb[0].mxu0
  %v851 = vadd.f32 0.0, %v850
  %v852 = vpop.f32.mrb[0].mxu0
  %853 = vmatprep.mubr.bf16.mxu0 %v764
  %854 = vmatmul.mubr.bf16.gmra.mrb[0].mxu0 %v656
  %v855 = vpop.f32.mrb[0].mxu0
  %v856 = vadd.f32 0.0, %v855
  %v857 = vpop.f32.mrb[0].mxu0
  %v858 = vpop.f32.mrb[0].mxu0
  %v859 = vadd.f32 0.0, %v858
  %v860 = vpop.f32.mrb[0].mxu0
  %861 = vmatprep.mubr.bf16.mxu0 %v767
  %862 = vmatmul.mubr.bf16.gmra.mrb[0].mxu0 %v658
  %v863 = vpop.f32.mrb[0].mxu0
  %v864 = vadd.f32 0.0, %v863
  %v865 = vpop.f32.mrb[0].mxu0
  %v866 = vpop.f32.mrb[0].mxu0
  %v867 = vadd.f32 0.0, %v866
  %v868 = vpop.f32.mrb[0].mxu0
  %869 = vmatprep.mubr.bf16.mxu0 %v770
  %870 = vmatmul.mubr.bf16.gmra.mrb[0].mxu0 %v660
  %v871 = vpop.f32.mrb[0].mxu0
  %v872 = vadd.f32 0.0, %v871
  %v873 = vpop.f32.mrb[0].mxu0
  %v874 = vpop.f32.mrb[0].mxu0
  %v875 = vadd.f32 0.0, %v874
  %v876 = vpop.f32.mrb[0].mxu0
  %877 = vmatprep.mubr.bf16.mxu0 %v773
  %878 = vmatmul.mubr.bf16.gmra.mrb[0].mxu0 %v662
  %v879 = vpop.f32.mrb[0].mxu0
  %v880 = vadd.f32 0.0, %v879
  %v881 = vpop.f32.mrb[0].mxu0
  %v882 = vpop.f32.mrb[0].mxu0
  %v883 = vadd.f32 0.0, %v882
  %v884 = vpop.f32.mrb[0].mxu0
  %885 = vmatprep.mubr.bf16.mxu0 %v776
  %886 = vmatmul.mubr.bf16.gmra.mrb[0].mxu0 %v664
  %v887 = vpop.f32.mrb[0].mxu0
  %v888 = vadd.f32 0.0, %v887
  %v889 = vpop.f32.mrb[0].mxu0
  %v890 = vpop.f32.mrb[0].mxu0
  %v891 = vadd.f32 0.0, %v890
  %v892 = vpop.f32.mrb[0].mxu0
  %893 = vmatprep.mubr.bf16.mxu0 %v779
  %894 = vmatmul.mubr.bf16.gmra.mrb[0].mxu0 %v666
  %v895 = vpop.f32.mrb[0].mxu0
  %v896 = vadd.f32 0.0, %v895
  %v897 = vpop.f32.mrb[0].mxu0
  %v898 = vpop.f32.mrb[0].mxu0
  %v899 = vadd.f32 0.0, %v898
  %v900 = vpop.f32.mrb[0].mxu0
  %901 = vmatprep.mubr.bf16.mxu0 %v782
  %902 = vmatmul.mubr.bf16.gmra.mrb[0].mxu0 %v668
  %v903 = vpop.f32.mrb[0].mxu0
  %v904 = vadd.f32 0.0, %v903
  %v905 = vpop.f32.mrb[0].mxu0
  %v906 = vpop.f32.mrb[0].mxu0
  %v907 = vadd.f32 0.0, %v906
  %v908 = vpop.f32.mrb[0].mxu0
  %909 = vmatprep.mubr.bf16.mxu0 %v785
  %910 = vmatmul.mubr.bf16.gmra.mrb[0].mxu0 %v670
  %v911 = vpop.f32.mrb[0].mxu0
  %v912 = vadd.f32 0.0, %v911
  %v913 = vpop.f32.mrb[0].mxu0
  %v914 = vpop.f32.mrb[0].mxu0
  %v915 = vadd.f32 0.0, %v914
  %v916 = vpop.f32.mrb[0].mxu0
  %917 = vmatprep.mubr.bf16.mxu0 %v788
  %918 = vmatmul.mubr.bf16.gmra.mrb[0].mxu0 %v672
  %v919 = vpop.f32.mrb[0].mxu0
  %v920 = vadd.f32 0.0, %v919
  %v921 = vpop.f32.mrb[0].mxu0
  %v922 = vpop.f32.mrb[0].mxu0
  %v923 = vadd.f32 0.0, %v922
  %v924 = vpop.f32.mrb[0].mxu0
  %925 = vmatprep.mubr.bf16.mxu0 %v791
  %926 = vmatmul.mubr.bf16.gmra.mrb[0].mxu0 %v674
  %v927 = vpop.f32.mrb[0].mxu0
  %v928 = vadd.f32 0.0, %v927
  %v929 = vpop.f32.mrb[0].mxu0
  %v930 = vpop.f32.mrb[0].mxu0
  %v931 = vadd.f32 0.0, %v930
  %v932 = vpop.f32.mrb[0].mxu0
  %933 = vmatprep.mubr.bf16.mxu0 %v794
  %934 = vmatmul.mubr.bf16.gmra.mrb[0].mxu0 %v676
  %v935 = vpop.f32.mrb[0].mxu0
  %v936 = vadd.f32 0.0, %v935
  %v937 = vpop.f32.mrb[0].mxu0
  %v938 = vpop.f32.mrb[0].mxu0
  %v939 = vadd.f32 0.0, %v938
  %v940 = vpop.f32.mrb[0].mxu0
  %941 = vmatprep.mubr.bf16.mxu0 %v797
  %942 = vmatmul.mubr.bf16.gmra.mrb[0].mxu0 %v678
  %v943 = vpop.f32.mrb[0].mxu0
  %v944 = vadd.f32 0.0, %v943
  %v945 = vpop.f32.mrb[0].mxu0
  %v946 = vpop.f32.mrb[0].mxu0
  %v947 = vadd.f32 0.0, %v946
  %v948 = vpop.f32.mrb[0].mxu0
  %949 = vmatprep.mubr.bf16.mxu0 %v800
  %950 = vmatmul.mubr.bf16.gmra.mrb[0].mxu0 %v680
  %v951 = vpop.f32.mrb[0].mxu0
  %v952 = vadd.f32 0.0, %v951
  %v953 = vpop.f32.mrb[0].mxu0
  %v954 = vpop.f32.mrb[0].mxu0
  %v955 = vadd.f32 0.0, %v954
  %v956 = vpop.f32.mrb[0].mxu0
  %957 = vmatprep.mubr.bf16.mxu0 %v803
  %958 = vmatmul.mubr.bf16.gmra.mrb[0].mxu0 %v682
  %v959 = vpop.f32.mrb[0].mxu0
  %v960 = vadd.f32 0.0, %v959
  %v961 = vpop.f32.mrb[0].mxu0
  %v962 = vpop.f32.mrb[0].mxu0
  %v963 = vadd.f32 0.0, %v962
  %v964 = vpop.f32.mrb[0].mxu0
  %965 = vdwg.mxu0
  %s966 = scalar_lea.vmem %s3, 72
  %v967 = vld [vmem:[%s966] sm:$0xf]
  %v968 = vld [vmem:[%s966 + $0x4] sm:$0xf]
  %v969 = vld [vmem:[%s966 + $0x8] sm:$0xf]
  %v970 = vld [vmem:[%s966 + $0xc] sm:$0xf]
  %v971 = vld [vmem:[%s966 + $0x10] sm:$0xf]
  %v972 = vld [vmem:[%s966 + $0x14] sm:$0xf]
  %v973 = vld [vmem:[%s966 + $0x18] sm:$0xf]
  %v974 = vld [vmem:[%s966 + $0x1c] sm:$0xf]
  %v975 = vld [vmem:[%s966 + $0x20] sm:$0xf]
  %v976 = vld [vmem:[%s966 + $0x24] sm:$0xf]
  %v977 = vld [vmem:[%s966 + $0x28] sm:$0xf]
  %v978 = vld [vmem:[%s966 + $0x2c] sm:$0xf]
  %v979 = vld [vmem:[%s966 + $0x30] sm:$0xf]
  %v980 = vld [vmem:[%s966 + $0x34] sm:$0xf]
  %v981 = vld [vmem:[%s966 + $0x38] sm:$0xf]
  %v982 = vld [vmem:[%s966 + $0x3c] sm:$0xf]
  %v983 = vld [vmem:[%s966 + $0x40] sm:$0xf]
  %v984 = vld [vmem:[%s966 + $0x44] sm:$0xf]
  %v1003 = vunpack.c.l.b16 %v967
  %v1004 = vunpack.c.l.b16 %v968
  %v1005 = vunpack.c.l.b16 %v969
  %v1006 = vunpack.c.l.b16 %v970
  %v1007 = vunpack.c.l.b16 %v971
  %v1008 = vunpack.c.l.b16 %v972
  %v1009 = vunpack.c.l.b16 %v973
  %v1010 = vunpack.c.l.b16 %v974
  %v1011 = vunpack.c.l.b16 %v975
  %v1012 = vunpack.c.l.b16 %v976
  %v1013 = vunpack.c.l.b16 %v977
  %v1014 = vunpack.c.l.b16 %v978
  %v1015 = vunpack.c.l.b16 %v979
  %v1016 = vunpack.c.l.b16 %v980
  %v1017 = vunpack.c.l.b16 %v981
  %v1018 = vunpack.c.l.b16 %v982
  %v1019 = vunpack.c.l.b16 %v983
  %v1020 = vunpack.c.l.b16 %v984
  %v1021 = vpack.c.b16 %v1004, %v1003
  %v1022 = vpack.c.b16 %v1006, %v1005
  %v1023 = vpack.c.b16 %v1008, %v1007
  %v1024 = vpack.c.b16 %v1010, %v1009
  %v1025 = vpack.c.b16 %v1012, %v1011
  %v1026 = vpack.c.b16 %v1014, %v1013
  %v1027 = vpack.c.b16 %v1016, %v1015
  %v1028 = vpack.c.b16 %v1018, %v1017
  %v1029 = vpack.c.b16 %v1020, %v1019
  %1039 = vmatprep.subr.bf16.mxu0 0
  %1040 = vmatpush1.bf16.msra.mxu0 %v1021
  %1041 = vmatprep.subr.bf16.mxu0 0
  %1042 = vmatpush1.bf16.msra.mxu0 %v1022
  %1043 = vmatprep.subr.bf16.mxu0 0
  %1044 = vmatpush1.bf16.msra.mxu0 %v1023
  %1045 = vmatprep.subr.bf16.mxu0 0
  %1046 = vmatpush1.bf16.msra.mxu0 %v1024
  %1047 = vmatprep.subr.bf16.mxu0 0
  %1048 = vmatpush1.bf16.msra.mxu0 %v1025
  %1049 = vmatprep.subr.bf16.mxu0 0
  %1050 = vmatpush1.bf16.msra.mxu0 %v1026
  %1051 = vmatprep.subr.bf16.mxu0 0
  %1052 = vmatpush1.bf16.msra.mxu0 %v1027
  %1053 = vmatprep.subr.bf16.mxu0 0
  %1054 = vmatpush1.bf16.msra.mxu0 %v1028
  %1055 = vmatprep.subr.bf16.mxu0 0
  %1056 = vmatpush1.bf16.msra.mxu0 %v1029
  %1057 = vmatprep.subr.bf16.mxu0 0
  %1058 = vmatpush1.bf16.msra.mxu0 0
  %1059 = vmatprep.subr.bf16.mxu0 0
  %1060 = vmatpush1.bf16.msra.mxu0 0
  %1061 = vmatprep.subr.bf16.mxu0 0
  %1062 = vmatpush1.bf16.msra.mxu0 0
  %1063 = vmatprep.subr.bf16.mxu0 0
  %1064 = vmatpush1.bf16.msra.mxu0 0
  %1065 = vmatprep.subr.bf16.mxu0 0
  %1066 = vmatpush1.bf16.msra.mxu0 0
  %1067 = vmatprep.subr.bf16.mxu0 0
  %1068 = vmatpush1.bf16.msra.mxu0 0
  %1069 = vmatprep.subr.bf16.mxu0 0
  %1070 = vmatpush1.bf16.msra.mxu0 0
  %1071 = vmatprep.mubr.bf16.mxu0 %v758
  %1072 = vmatmul.mubr.bf16.gmra.mrb[0].mxu0 %v652
  %v1073 = vpop.f32.mrb[0].mxu0
  %v1074 = vadd.f32 0.0, %v1073
  %v1075 = vpop.f32.mrb[0].mxu0
  %v1076 = vpop.f32.mrb[0].mxu0
  %v1077 = vadd.f32 0.0, %v1076
  %v1078 = vpop.f32.mrb[0].mxu0
  %1079 = vmatprep.mubr.bf16.mxu0 %v761
  %1080 = vmatmul.mubr.bf16.gmra.mrb[0].mxu0 %v654
  %v1081 = vpop.f32.mrb[0].mxu0
  %v1082 = vadd.f32 0.0, %v1081
  %v1083 = vpop.f32.mrb[0].mxu0
  %v1084 = vpop.f32.mrb[0].mxu0
  %v1085 = vadd.f32 0.0, %v1084
  %v1086 = vpop.f32.mrb[0].mxu0
  %1087 = vmatprep.mubr.bf16.mxu0 %v764
  %1088 = vmatmul.mubr.bf16.gmra.mrb[0].mxu0 %v656
  %v1089 = vpop.f32.mrb[0].mxu0
  %v1090 = vadd.f32 0.0, %v1089
  %v1091 = vpop.f32.mrb[0].mxu0
  %v1092 = vpop.f32.mrb[0].mxu0
  %v1093 = vadd.f32 0.0, %v1092
  %v1094 = vpop.f32.mrb[0].mxu0
  %1095 = vmatprep.mubr.bf16.mxu0 %v767
  %1096 = vmatmul.mubr.bf16.gmra.mrb[0].mxu0 %v658
  %v1097 = vpop.f32.mrb[0].mxu0
  %v1098 = vadd.f32 0.0, %v1097
  %v1099 = vpop.f32.mrb[0].mxu0
  %v1100 = vpop.f32.mrb[0].mxu0
  %v1101 = vadd.f32 0.0, %v1100
  %v1102 = vpop.f32.mrb[0].mxu0
  %1103 = vmatprep.mubr.bf16.mxu0 %v770
  %1104 = vmatmul.mubr.bf16.gmra.mrb[0].mxu0 %v660
  %v1105 = vpop.f32.mrb[0].mxu0
  %v1106 = vadd.f32 0.0, %v1105
  %v1107 = vpop.f32.mrb[0].mxu0
  %v1108 = vpop.f32.mrb[0].mxu0
  %v1109 = vadd.f32 0.0, %v1108
  %v1110 = vpop.f32.mrb[0].mxu0
  %1111 = vmatprep.mubr.bf16.mxu0 %v773
  %1112 = vmatmul.mubr.bf16.gmra.mrb[0].mxu0 %v662
  %v1113 = vpop.f32.mrb[0].mxu0
  %v1114 = vadd.f32 0.0, %v1113
  %v1115 = vpop.f32.mrb[0].mxu0
  %v1116 = vpop.f32.mrb[0].mxu0
  %v1117 = vadd.f32 0.0, %v1116
  %v1118 = vpop.f32.mrb[0].mxu0
  %1119 = vmatprep.mubr.bf16.mxu0 %v776
  %1120 = vmatmul.mubr.bf16.gmra.mrb[0].mxu0 %v664
  %v1121 = vpop.f32.mrb[0].mxu0
  %v1122 = vadd.f32 0.0, %v1121
  %v1123 = vpop.f32.mrb[0].mxu0
  %v1124 = vpop.f32.mrb[0].mxu0
  %v1125 = vadd.f32 0.0, %v1124
  %v1126 = vpop.f32.mrb[0].mxu0
  %1127 = vmatprep.mubr.bf16.mxu0 %v779
  %1128 = vmatmul.mubr.bf16.gmra.mrb[0].mxu0 %v666
  %v1129 = vpop.f32.mrb[0].mxu0
  %v1130 = vadd.f32 0.0, %v1129
  %v1131 = vpop.f32.mrb[0].mxu0
  %v1132 = vpop.f32.mrb[0].mxu0
  %v1133 = vadd.f32 0.0, %v1132
  %v1134 = vpop.f32.mrb[0].mxu0
  %1135 = vmatprep.mubr.bf16.mxu0 %v782
  %1136 = vmatmul.mubr.bf16.gmra.mrb[0].mxu0 %v668
  %v1137 = vpop.f32.mrb[0].mxu0
  %v1138 = vadd.f32 0.0, %v1137
  %v1139 = vpop.f32.mrb[0].mxu0
  %v1140 = vpop.f32.mrb[0].mxu0
  %v1141 = vadd.f32 0.0, %v1140
  %v1142 = vpop.f32.mrb[0].mxu0
  %1143 = vmatprep.mubr.bf16.mxu0 %v785
  %1144 = vmatmul.mubr.bf16.gmra.mrb[0].mxu0 %v670
  %v1145 = vpop.f32.mrb[0].mxu0
  %v1146 = vadd.f32 0.0, %v1145
  %v1147 = vpop.f32.mrb[0].mxu0
  %v1148 = vpop.f32.mrb[0].mxu0
  %v1149 = vadd.f32 0.0, %v1148
  %v1150 = vpop.f32.mrb[0].mxu0
  %1151 = vmatprep.mubr.bf16.mxu0 %v788
  %1152 = vmatmul.mubr.bf16.gmra.mrb[0].mxu0 %v672
  %v1153 = vpop.f32.mrb[0].mxu0
  %v1154 = vadd.f32 0.0, %v1153
  %v1155 = vpop.f32.mrb[0].mxu0
  %v1156 = vpop.f32.mrb[0].mxu0
  %v1157 = vadd.f32 0.0, %v1156
  %v1158 = vpop.f32.mrb[0].mxu0
  %1159 = vmatprep.mubr.bf16.mxu0 %v791
  %1160 = vmatmul.mubr.bf16.gmra.mrb[0].mxu0 %v674
  %v1161 = vpop.f32.mrb[0].mxu0
  %v1162 = vadd.f32 0.0, %v1161
  %v1163 = vpop.f32.mrb[0].mxu0
  %v1164 = vpop.f32.mrb[0].mxu0
  %v1165 = vadd.f32 0.0, %v1164
  %v1166 = vpop.f32.mrb[0].mxu0
  %1167 = vmatprep.mubr.bf16.mxu0 %v794
  %1168 = vmatmul.mubr.bf16.gmra.mrb[0].mxu0 %v676
  %v1169 = vpop.f32.mrb[0].mxu0
  %v1170 = vadd.f32 0.0, %v1169
  %v1171 = vpop.f32.mrb[0].mxu0
  %v1172 = vpop.f32.mrb[0].mxu0
  %v1173 = vadd.f32 0.0, %v1172
  %v1174 = vpop.f32.mrb[0].mxu0
  %1175 = vmatprep.mubr.bf16.mxu0 %v797
  %1176 = vmatmul.mubr.bf16.gmra.mrb[0].mxu0 %v678
  %v1177 = vpop.f32.mrb[0].mxu0
  %v1178 = vadd.f32 0.0, %v1177
  %v1179 = vpop.f32.mrb[0].mxu0
  %v1180 = vpop.f32.mrb[0].mxu0
  %v1181 = vadd.f32 0.0, %v1180
  %v1182 = vpop.f32.mrb[0].mxu0
  %1183 = vmatprep.mubr.bf16.mxu0 %v800
  %1184 = vmatmul.mubr.bf16.gmra.mrb[0].mxu0 %v680
  %v1185 = vpop.f32.mrb[0].mxu0
  %v1186 = vadd.f32 0.0, %v1185
  %v1187 = vpop.f32.mrb[0].mxu0
  %v1188 = vpop.f32.mrb[0].mxu0
  %v1189 = vadd.f32 0.0, %v1188
  %v1190 = vpop.f32.mrb[0].mxu0
  %1191 = vmatprep.mubr.bf16.mxu0 %v803
  %1192 = vmatmul.mubr.bf16.gmra.mrb[0].mxu0 %v682
  %v1193 = vpop.f32.mrb[0].mxu0
  %v1194 = vadd.f32 0.0, %v1193
  %v1195 = vpop.f32.mrb[0].mxu0
  %v1196 = vpop.f32.mrb[0].mxu0
  %v1197 = vadd.f32 0.0, %v1196
  %v1198 = vpop.f32.mrb[0].mxu0
  %1199 = vdwg.mxu0
  %v1200 = vmax.f32 %v840, %v1074
  %v1201 = vmax.f32 %v843, %v1077
  %v1202 = vmax.f32 %v848, %v1082
  %v1203 = vmax.f32 %v851, %v1085
  %v1204 = vmax.f32 %v856, %v1090
  %v1205 = vmax.f32 %v859, %v1093
  %v1206 = vmax.f32 %v864, %v1098
  %v1207 = vmax.f32 %v867, %v1101
  %v1208 = vmax.f32 %v872, %v1106
  %v1209 = vmax.f32 %v875, %v1109
  %v1210 = vmax.f32 %v880, %v1114
  %v1211 = vmax.f32 %v883, %v1117
  %v1212 = vmax.f32 %v888, %v1122
  %v1213 = vmax.f32 %v891, %v1125
  %v1214 = vmax.f32 %v896, %v1130
  %v1215 = vmax.f32 %v899, %v1133
  %v1216 = vmax.f32 %v904, %v1138
  %v1217 = vmax.f32 %v907, %v1141
  %v1218 = vmax.f32 %v912, %v1146
  %v1219 = vmax.f32 %v915, %v1149
  %v1220 = vmax.f32 %v920, %v1154
  %v1221 = vmax.f32 %v923, %v1157
  %v1222 = vmax.f32 %v928, %v1162
  %v1223 = vmax.f32 %v931, %v1165
  %v1224 = vmax.f32 %v936, %v1170
  %v1225 = vmax.f32 %v939, %v1173
  %v1226 = vmax.f32 %v944, %v1178
  %v1227 = vmax.f32 %v947, %v1181
  %v1228 = vmax.f32 %v952, %v1186
  %v1229 = vmax.f32 %v955, %v1189
  %v1230 = vmax.f32 %v960, %v1194
  %v1231 = vmax.f32 %v963, %v1197
  %v1232 = vmax.f32 %v1200, %v1202
  %v1233 = vmax.f32 %v1201, %v1203
  %v1234 = vmax.f32 %v1204, %v1206
  %v1235 = vmax.f32 %v1205, %v1207
  %v1236 = vmax.f32 %v1208, %v1210
  %v1237 = vmax.f32 %v1209, %v1211
  %v1238 = vmax.f32 %v1212, %v1214
  %v1239 = vmax.f32 %v1213, %v1215
  %v1240 = vmax.f32 %v1216, %v1218
  %v1241 = vmax.f32 %v1217, %v1219
  %v1242 = vmax.f32 %v1220, %v1222
  %v1243 = vmax.f32 %v1221, %v1223
  %v1244 = vmax.f32 %v1224, %v1226
  %v1245 = vmax.f32 %v1225, %v1227
  %v1246 = vmax.f32 %v1228, %v1230
  %v1247 = vmax.f32 %v1229, %v1231
  %v1248 = vpack.c.bf16 %v1233, %v1232
  %v1249 = vpack.c.bf16 %v1235, %v1234
  %v1250 = vpack.c.bf16 %v1237, %v1236
  %v1251 = vpack.c.bf16 %v1239, %v1238
  %v1252 = vpack.c.bf16 %v1241, %v1240
  %v1253 = vpack.c.bf16 %v1243, %v1242
  %v1254 = vpack.c.bf16 %v1245, %v1244
  %v1255 = vpack.c.bf16 %v1247, %v1246
  %v1256 = vld [vmem:[%s4] sm:$0xf]
  %v1257 = vld [vmem:[%s4 + $0x4] sm:$0xf]
  %v1258 = vld [vmem:[%s4 + $0x8] sm:$0xf]
  %v1259 = vld [vmem:[%s4 + $0xc] sm:$0xf]
  %v1260 = vld [vmem:[%s4 + $0x10] sm:$0xf]
  %v1261 = vld [vmem:[%s4 + $0x14] sm:$0xf]
  %v1262 = vld [vmem:[%s4 + $0x18] sm:$0xf]
  %v1263 = vld [vmem:[%s4 + $0x1c] sm:$0xf]
  %v1264 = vld [vmem:[%s4 + $0x20] sm:$0xf]
  %v1273 = vunpack.c.l.b16 %v1248
  %v1274 = vunpack.c.h.b16 %v1248
  %v1275 = vunpack.c.l.b16 %v1249
  %v1276 = vunpack.c.h.b16 %v1249
  %v1277 = vunpack.c.l.b16 %v1250
  %v1278 = vunpack.c.h.b16 %v1250
  %v1279 = vunpack.c.l.b16 %v1251
  %v1280 = vunpack.c.h.b16 %v1251
  %v1281 = vunpack.c.l.b16 %v1252
  %v1282 = vunpack.c.h.b16 %v1252
  %v1283 = vunpack.c.l.b16 %v1253
  %v1284 = vunpack.c.h.b16 %v1253
  %v1285 = vunpack.c.l.b16 %v1254
  %v1286 = vunpack.c.h.b16 %v1254
  %v1287 = vunpack.c.l.b16 %v1255
  %v1288 = vunpack.c.h.b16 %v1255
  %v1289 = vpack.c.b16 %v1273, %v1273
  %v1290 = vpack.c.b16 %v1274, %v1274
  %v1291 = vpack.c.b16 %v1275, %v1275
  %v1292 = vpack.c.b16 %v1276, %v1276
  %v1293 = vpack.c.b16 %v1277, %v1277
  %v1294 = vpack.c.b16 %v1278, %v1278
  %v1295 = vpack.c.b16 %v1279, %v1279
  %v1296 = vpack.c.b16 %v1280, %v1280
  %v1297 = vpack.c.b16 %v1281, %v1281
  %v1298 = vpack.c.b16 %v1282, %v1282
  %v1299 = vpack.c.b16 %v1283, %v1283
  %v1300 = vpack.c.b16 %v1284, %v1284
  %v1301 = vpack.c.b16 %v1285, %v1285
  %v1302 = vpack.c.b16 %v1286, %v1286
  %v1303 = vpack.c.b16 %v1287, %v1287
  %v1304 = vpack.c.b16 %v1288, %v1288
  %vm1305 = vsmask.f32 3328
  %vm1306 = vsmask.f32 7440
  %vm1307 = vmor %vm1305, %vm1306
  %v1309 = vshrl.u32 %v1289, 16
  %v1311 = vrot.slane %v1309, 4
  %v1312 = vshll.u32 %v1289, 16
  %v1314 = vrot.slane %v1312, 5
  %v1315 = vor.u32 %v1311, %v1314
  %v1316 = vrot.slane %v1315, 4
  %v1318 = vshll.u32 %v1290, 16
  %v1320 = vrot.slane %v1318, 5
  %v1321 = vsel %vm1307, %v1316, %v1320
  %v1323 = vshrl.u32 %v1291, 16
  %v1325 = vrot.slane %v1323, 4
  %v1326 = vshll.u32 %v1291, 16
  %v1328 = vrot.slane %v1326, 5
  %v1329 = vor.u32 %v1325, %v1328
  %v1330 = vrot.slane %v1329, 4
  %v1332 = vshll.u32 %v1292, 16
  %v1334 = vrot.slane %v1332, 5
  %v1335 = vsel %vm1307, %v1330, %v1334
  %v1337 = vshrl.u32 %v1293, 16
  %v1339 = vrot.slane %v1337, 4
  %v1340 = vshll.u32 %v1293, 16
  %v1342 = vrot.slane %v1340, 5
  %v1343 = vor.u32 %v1339, %v1342
  %v1344 = vrot.slane %v1343, 4
  %v1346 = vshll.u32 %v1294, 16
  %v1348 = vrot.slane %v1346, 5
  %v1349 = vsel %vm1307, %v1344, %v1348
  %v1351 = vshrl.u32 %v1295, 16
  %v1353 = vrot.slane %v1351, 4
  %v1354 = vshll.u32 %v1295, 16
  %v1356 = vrot.slane %v1354, 5
  %v1357 = vor.u32 %v1353, %v1356
  %v1358 = vrot.slane %v1357, 4
  %v1360 = vshll.u32 %v1296, 16
  %v1362 = vrot.slane %v1360, 5
  %v1363 = vsel %vm1307, %v1358, %v1362
  %v1365 = vshrl.u32 %v1297, 16
  %v1367 = vrot.slane %v1365, 4
  %v1368 = vshll.u32 %v1297, 16
  %v1370 = vrot.slane %v1368, 5
  %v1371 = vor.u32 %v1367, %v1370
  %v1372 = vrot.slane %v1371, 4
  %v1374 = vshll.u32 %v1298, 16
  %v1376 = vrot.slane %v1374, 5
  %v1377 = vsel %vm1307, %v1372, %v1376
  %v1379 = vshrl.u32 %v1299, 16
  %v1381 = vrot.slane %v1379, 4
  %v1382 = vshll.u32 %v1299, 16
  %v1384 = vrot.slane %v1382, 5
  %v1385 = vor.u32 %v1381, %v1384
  %v1386 = vrot.slane %v1385, 4
  %v1388 = vshll.u32 %v1300, 16
  %v1390 = vrot.slane %v1388, 5
  %v1391 = vsel %vm1307, %v1386, %v1390
  %v1393 = vshrl.u32 %v1301, 16
  %v1395 = vrot.slane %v1393, 4
  %v1396 = vshll.u32 %v1301, 16
  %v1398 = vrot.slane %v1396, 5
  %v1399 = vor.u32 %v1395, %v1398
  %v1400 = vrot.slane %v1399, 4
  %v1402 = vshll.u32 %v1302, 16
  %v1404 = vrot.slane %v1402, 5
  %v1405 = vsel %vm1307, %v1400, %v1404
  %v1407 = vshrl.u32 %v1303, 16
  %v1409 = vrot.slane %v1407, 4
  %v1410 = vshll.u32 %v1303, 16
  %v1412 = vrot.slane %v1410, 5
  %v1413 = vor.u32 %v1409, %v1412
  %v1414 = vrot.slane %v1413, 4
  %v1416 = vshll.u32 %v1304, 16
  %v1418 = vrot.slane %v1416, 5
  %v1419 = vsel %vm1307, %v1414, %v1418
  %s1420 = scalar_lea.vmem %s4, 36
  %v1421 = vld [vmem:[%s1420] sm:$0xf]
  %v1422 = vld [vmem:[%s1420 + $0x4] sm:$0xf]
  %v1423 = vld [vmem:[%s1420 + $0x8] sm:$0xf]
  %v1424 = vld [vmem:[%s1420 + $0xc] sm:$0xf]
  %v1425 = vld [vmem:[%s1420 + $0x10] sm:$0xf]
  %v1426 = vld [vmem:[%s1420 + $0x14] sm:$0xf]
  %v1427 = vld [vmem:[%s1420 + $0x18] sm:$0xf]
  %v1428 = vld [vmem:[%s1420 + $0x1c] sm:$0xf]
  %v1429 = vld [vmem:[%s1420 + $0x20] sm:$0xf]
  %v1430 = vunpack.c.l.b16 %v1321
  %v1431 = vunpack.c.l.b16 %v1335
  %v1432 = vunpack.c.l.b16 %v1349
  %v1433 = vunpack.c.l.b16 %v1363
  %v1434 = vunpack.c.l.b16 %v1377
  %v1435 = vunpack.c.l.b16 %v1391
  %v1436 = vunpack.c.l.b16 %v1405
  %v1437 = vunpack.c.l.b16 %v1419
  %v1438 = vpack.c.b16 %v1431, %v1430
  %v1439 = vpack.c.b16 %v1433, %v1432
  %v1440 = vpack.c.b16 %v1435, %v1434
  %v1441 = vpack.c.b16 %v1437, %v1436
  %v1451 = vunpack.c.l.b16 %v1421
  %v1452 = vunpack.c.l.b16 %v1422
  %v1453 = vunpack.c.l.b16 %v1423
  %v1454 = vunpack.c.l.b16 %v1424
  %v1455 = vunpack.c.l.b16 %v1425
  %v1456 = vunpack.c.l.b16 %v1426
  %v1457 = vunpack.c.l.b16 %v1427
  %v1458 = vunpack.c.l.b16 %v1428
  %v1459 = vunpack.c.l.b16 %v1429
  %v1460 = vpack.c.b16 %v1452, %v1451
  %v1461 = vpack.c.b16 %v1454, %v1453
  %v1462 = vpack.c.b16 %v1456, %v1455
  %v1463 = vpack.c.b16 %v1458, %v1457
  %v1464 = vpack.c.b16 %v1459, %v1459
  %vm1469 = vcmask 588800
  %v1471 = vsel %vm1469, %v1438, 0
  %v1474 = vsel %vm1469, %v1439, 0
  %v1477 = vsel %vm1469, %v1440, 0
  %v1480 = vsel %vm1469, %v1441, 0
  %vm1482 = vcmask 1043456
  %v1484 = vsel %vm1482, %v1464, 0
  %1486 = vmatprep.subr.bf16.mxu0 0
  %1487 = vmatpush1.bf16.msra.mxu0 %v1460
  %1488 = vmatprep.subr.bf16.mxu0 0
  %1489 = vmatpush1.bf16.msra.mxu0 %v1461
  %1490 = vmatprep.subr.bf16.mxu0 0
  %1491 = vmatpush1.bf16.msra.mxu0 %v1462
  %1492 = vmatprep.subr.bf16.mxu0 0
  %1493 = vmatpush1.bf16.msra.mxu0 %v1463
  %1494 = vmatprep.subr.bf16.mxu0 0
  %1495 = vmatpush1.bf16.msra.mxu0 %v1484
  %1496 = vmatprep.subr.bf16.mxu0 0
  %1497 = vmatpush1.bf16.msra.mxu0 0
  %1498 = vmatprep.subr.bf16.mxu0 0
  %1499 = vmatpush1.bf16.msra.mxu0 0
  %1500 = vmatprep.subr.bf16.mxu0 0
  %1501 = vmatpush1.bf16.msra.mxu0 0
  %1502 = vmatprep.subr.bf16.mxu0 0
  %1503 = vmatpush1.bf16.msra.mxu0 0
  %1504 = vmatprep.subr.bf16.mxu0 0
  %1505 = vmatpush1.bf16.msra.mxu0 0
  %1506 = vmatprep.subr.bf16.mxu0 0
  %1507 = vmatpush1.bf16.msra.mxu0 0
  %1508 = vmatprep.subr.bf16.mxu0 0
  %1509 = vmatpush1.bf16.msra.mxu0 0
  %1510 = vmatprep.subr.bf16.mxu0 0
  %1511 = vmatpush1.bf16.msra.mxu0 0
  %1512 = vmatprep.subr.bf16.mxu0 0
  %1513 = vmatpush1.bf16.msra.mxu0 0
  %1514 = vmatprep.subr.bf16.mxu0 0
  %1515 = vmatpush1.bf16.msra.mxu0 0
  %1516 = vmatprep.subr.bf16.mxu0 0
  %1517 = vmatpush1.bf16.msra.mxu0 0
  %1518 = vmatprep.mubr.bf16.mxu0 0
  %1519 = vmatmul.mubr.bf16.gmra.mrb[0].mxu0 %v1471
  %v1520 = vpop.f32.mrb[0].mxu0
  %v1521 = vadd.f32 0.0, %v1520
  %v1522 = vpop.f32.mrb[0].mxu0
  %v1523 = vpop.f32.mrb[0].mxu0
  %v1524 = vadd.f32 0.0, %v1523
  %v1525 = vpop.f32.mrb[0].mxu0
  %1526 = vmatprep.mubr.bf16.mxu0 0
  %1527 = vmatmul.mubr.bf16.gmra.mrb[0].mxu0 %v1474
  %v1528 = vpop.f32.mrb[0].mxu0
  %v1529 = vadd.f32 0.0, %v1528
  %v1530 = vpop.f32.mrb[0].mxu0
  %v1531 = vpop.f32.mrb[0].mxu0
  %v1532 = vadd.f32 0.0, %v1531
  %v1533 = vpop.f32.mrb[0].mxu0
  %1534 = vmatprep.mubr.bf16.mxu0 0
  %1535 = vmatmul.mubr.bf16.gmra.mrb[0].mxu0 %v1477
  %v1536 = vpop.f32.mrb[0].mxu0
  %v1537 = vadd.f32 0.0, %v1536
  %v1538 = vpop.f32.mrb[0].mxu0
  %v1539 = vpop.f32.mrb[0].mxu0
  %v1540 = vadd.f32 0.0, %v1539
  %v1541 = vpop.f32.mrb[0].mxu0
  %1542 = vmatprep.mubr.bf16.mxu0 0
  %1543 = vmatmul.mubr.bf16.gmra.mrb[0].mxu0 %v1480
  %v1544 = vpop.f32.mrb[0].mxu0
  %v1545 = vadd.f32 0.0, %v1544
  %v1546 = vpop.f32.mrb[0].mxu0
  %v1547 = vpop.f32.mrb[0].mxu0
  %v1548 = vadd.f32 0.0, %v1547
  %v1549 = vpop.f32.mrb[0].mxu0
  %1550 = vdwg.mxu0
  %v1551 = vpack.c.b16 %v1275, %v1273
  %v1552 = vpack.c.b16 %v1279, %v1277
  %v1553 = vpack.c.b16 %v1283, %v1281
  %v1554 = vpack.c.b16 %v1287, %v1285
  %v1564 = vunpack.c.l.b16 %v1256
  %v1565 = vunpack.c.l.b16 %v1257
  %v1566 = vunpack.c.l.b16 %v1258
  %v1567 = vunpack.c.l.b16 %v1259
  %v1568 = vunpack.c.l.b16 %v1260
  %v1569 = vunpack.c.l.b16 %v1261
  %v1570 = vunpack.c.l.b16 %v1262
  %v1571 = vunpack.c.l.b16 %v1263
  %v1572 = vunpack.c.l.b16 %v1264
  %v1573 = vpack.c.b16 %v1565, %v1564
  %v1574 = vpack.c.b16 %v1567, %v1566
  %v1575 = vpack.c.b16 %v1569, %v1568
  %v1576 = vpack.c.b16 %v1571, %v1570
  %v1577 = vpack.c.b16 %v1572, %v1572
  %v1583 = vsel %vm1469, %v1551, 0
  %v1586 = vsel %vm1469, %v1552, 0
  %v1589 = vsel %vm1469, %v1553, 0
  %v1592 = vsel %vm1469, %v1554, 0
  %v1595 = vsel %vm1482, %v1577, 0
  %1597 = vmatprep.subr.bf16.mxu0 0
  %1598 = vmatpush1.bf16.msra.mxu0 %v1573
  %1599 = vmatprep.subr.bf16.mxu0 0
  %1600 = vmatpush1.bf16.msra.mxu0 %v1574
  %1601 = vmatprep.subr.bf16.mxu0 0
  %1602 = vmatpush1.bf16.msra.mxu0 %v1575
  %1603 = vmatprep.subr.bf16.mxu0 0
  %1604 = vmatpush1.bf16.msra.mxu0 %v1576
  %1605 = vmatprep.subr.bf16.mxu0 0
  %1606 = vmatpush1.bf16.msra.mxu0 %v1595
  %1607 = vmatprep.subr.bf16.mxu0 0
  %1608 = vmatpush1.bf16.msra.mxu0 0
  %1609 = vmatprep.subr.bf16.mxu0 0
  %1610 = vmatpush1.bf16.msra.mxu0 0
  %1611 = vmatprep.subr.bf16.mxu0 0
  %1612 = vmatpush1.bf16.msra.mxu0 0
  %1613 = vmatprep.subr.bf16.mxu0 0
  %1614 = vmatpush1.bf16.msra.mxu0 0
  %1615 = vmatprep.subr.bf16.mxu0 0
  %1616 = vmatpush1.bf16.msra.mxu0 0
  %1617 = vmatprep.subr.bf16.mxu0 0
  %1618 = vmatpush1.bf16.msra.mxu0 0
  %1619 = vmatprep.subr.bf16.mxu0 0
  %1620 = vmatpush1.bf16.msra.mxu0 0
  %1621 = vmatprep.subr.bf16.mxu0 0
  %1622 = vmatpush1.bf16.msra.mxu0 0
  %1623 = vmatprep.subr.bf16.mxu0 0
  %1624 = vmatpush1.bf16.msra.mxu0 0
  %1625 = vmatprep.subr.bf16.mxu0 0
  %1626 = vmatpush1.bf16.msra.mxu0 0
  %1627 = vmatprep.subr.bf16.mxu0 0
  %1628 = vmatpush1.bf16.msra.mxu0 0
  %1629 = vmatprep.mubr.bf16.mxu0 0
  %1630 = vmatmul.mubr.bf16.gmra.mrb[0].mxu0 %v1583
  %v1631 = vpop.f32.mrb[0].mxu0
  %v1632 = vadd.f32 %v1521, %v1631
  %v1633 = vpop.f32.mrb[0].mxu0
  %v1634 = vpop.f32.mrb[0].mxu0
  %v1635 = vadd.f32 %v1524, %v1634
  %v1636 = vpop.f32.mrb[0].mxu0
  %1637 = vmatprep.mubr.bf16.mxu0 0
  %1638 = vmatmul.mubr.bf16.gmra.mrb[0].mxu0 %v1586
  %v1639 = vpop.f32.mrb[0].mxu0
  %v1640 = vadd.f32 %v1529, %v1639
  %v1641 = vpop.f32.mrb[0].mxu0
  %v1642 = vpop.f32.mrb[0].mxu0
  %v1643 = vadd.f32 %v1532, %v1642
  %v1644 = vpop.f32.mrb[0].mxu0
  %1645 = vmatprep.mubr.bf16.mxu0 0
  %1646 = vmatmul.mubr.bf16.gmra.mrb[0].mxu0 %v1589
  %v1647 = vpop.f32.mrb[0].mxu0
  %v1648 = vadd.f32 %v1537, %v1647
  %v1649 = vpop.f32.mrb[0].mxu0
  %v1650 = vpop.f32.mrb[0].mxu0
  %v1651 = vadd.f32 %v1540, %v1650
  %v1652 = vpop.f32.mrb[0].mxu0
  %1653 = vmatprep.mubr.bf16.mxu0 0
  %1654 = vmatmul.mubr.bf16.gmra.mrb[0].mxu0 %v1592
  %v1655 = vpop.f32.mrb[0].mxu0
  %v1656 = vadd.f32 %v1545, %v1655
  %v1657 = vpop.f32.mrb[0].mxu0
  %v1658 = vpop.f32.mrb[0].mxu0
  %v1659 = vadd.f32 %v1548, %v1658
  %v1660 = vpop.f32.mrb[0].mxu0
  %1661 = vdwg.mxu0
  %vm1662 = vcmask 1042432
  %vm1663 = vcmask 1046532
  %vm1664 = vmor %vm1662, %vm1663
  %v1665 = vrot.slane %v1289, 5
  %v1666 = vrot.slane %v1665, 4
  %v1667 = vrot.slane %v1290, 5
  %v1668 = vsel %vm1664, %v1666, %v1667
  %v1669 = vrot.slane %v1291, 5
  %v1670 = vrot.slane %v1669, 4
  %v1671 = vrot.slane %v1292, 5
  %v1672 = vsel %vm1664, %v1670, %v1671
  %v1673 = vrot.slane %v1293, 5
  %v1674 = vrot.slane %v1673, 4
  %v1675 = vrot.slane %v1294, 5
  %v1676 = vsel %vm1664, %v1674, %v1675
  %v1677 = vrot.slane %v1295, 5
  %v1678 = vrot.slane %v1677, 4
  %v1679 = vrot.slane %v1296, 5
  %v1680 = vsel %vm1664, %v1678, %v1679
  %v1681 = vrot.slane %v1297, 5
  %v1682 = vrot.slane %v1681, 4
  %v1683 = vrot.slane %v1298, 5
  %v1684 = vsel %vm1664, %v1682, %v1683
  %v1685 = vrot.slane %v1299, 5
  %v1686 = vrot.slane %v1685, 4
  %v1687 = vrot.slane %v1300, 5
  %v1688 = vsel %vm1664, %v1686, %v1687
  %v1689 = vrot.slane %v1301, 5
  %v1690 = vrot.slane %v1689, 4
  %v1691 = vrot.slane %v1302, 5
  %v1692 = vsel %vm1664, %v1690, %v1691
  %v1693 = vrot.slane %v1303, 5
  %v1694 = vrot.slane %v1693, 4
  %v1695 = vrot.slane %v1304, 5
  %v1696 = vsel %vm1664, %v1694, %v1695
  %s1697 = scalar_lea.vmem %s4, 72
  %v1698 = vld [vmem:[%s1697] sm:$0xf]
  %v1699 = vld [vmem:[%s1697 + $0x4] sm:$0xf]
  %v1700 = vld [vmem:[%s1697 + $0x8] sm:$0xf]
  %v1701 = vld [vmem:[%s1697 + $0xc] sm:$0xf]
  %v1702 = vld [vmem:[%s1697 + $0x10] sm:$0xf]
  %v1703 = vld [vmem:[%s1697 + $0x14] sm:$0xf]
  %v1704 = vld [vmem:[%s1697 + $0x18] sm:$0xf]
  %v1705 = vld [vmem:[%s1697 + $0x1c] sm:$0xf]
  %v1706 = vld [vmem:[%s1697 + $0x20] sm:$0xf]
  %v1707 = vunpack.c.l.b16 %v1668
  %v1708 = vunpack.c.l.b16 %v1672
  %v1709 = vunpack.c.l.b16 %v1676
  %v1710 = vunpack.c.l.b16 %v1680
  %v1711 = vunpack.c.l.b16 %v1684
  %v1712 = vunpack.c.l.b16 %v1688
  %v1713 = vunpack.c.l.b16 %v1692
  %v1714 = vunpack.c.l.b16 %v1696
  %v1715 = vpack.c.b16 %v1708, %v1707
  %v1716 = vpack.c.b16 %v1710, %v1709
  %v1717 = vpack.c.b16 %v1712, %v1711
  %v1718 = vpack.c.b16 %v1714, %v1713
  %v1728 = vunpack.c.l.b16 %v1698
  %v1729 = vunpack.c.l.b16 %v1699
  %v1730 = vunpack.c.l.b16 %v1700
  %v1731 = vunpack.c.l.b16 %v1701
  %v1732 = vunpack.c.l.b16 %v1702
  %v1733 = vunpack.c.l.b16 %v1703
  %v1734 = vunpack.c.l.b16 %v1704
  %v1735 = vunpack.c.l.b16 %v1705
  %v1736 = vunpack.c.l.b16 %v1706
  %v1737 = vpack.c.b16 %v1729, %v1728
  %v1738 = vpack.c.b16 %v1731, %v1730
  %v1739 = vpack.c.b16 %v1733, %v1732
  %v1740 = vpack.c.b16 %v1735, %v1734
  %v1741 = vpack.c.b16 %v1736, %v1736
  %v1747 = vsel %vm1469, %v1715, 0
  %v1750 = vsel %vm1469, %v1716, 0
  %v1753 = vsel %vm1469, %v1717, 0
  %v1756 = vsel %vm1469, %v1718, 0
  %v1759 = vsel %vm1482, %v1741, 0
  %1761 = vmatprep.subr.bf16.mxu0 0
  %1762 = vmatpush1.bf16.msra.mxu0 %v1737
  %1763 = vmatprep.subr.bf16.mxu0 0
  %1764 = vmatpush1.bf16.msra.mxu0 %v1738
  %1765 = vmatprep.subr.bf16.mxu0 0
  %1766 = vmatpush1.bf16.msra.mxu0 %v1739
  %1767 = vmatprep.subr.bf16.mxu0 0
  %1768 = vmatpush1.bf16.msra.mxu0 %v1740
  %1769 = vmatprep.subr.bf16.mxu0 0
  %1770 = vmatpush1.bf16.msra.mxu0 %v1759
  %1771 = vmatprep.subr.bf16.mxu0 0
  %1772 = vmatpush1.bf16.msra.mxu0 0
  %1773 = vmatprep.subr.bf16.mxu0 0
  %1774 = vmatpush1.bf16.msra.mxu0 0
  %1775 = vmatprep.subr.bf16.mxu0 0
  %1776 = vmatpush1.bf16.msra.mxu0 0
  %1777 = vmatprep.subr.bf16.mxu0 0
  %1778 = vmatpush1.bf16.msra.mxu0 0
  %1779 = vmatprep.subr.bf16.mxu0 0
  %1780 = vmatpush1.bf16.msra.mxu0 0
  %1781 = vmatprep.subr.bf16.mxu0 0
  %1782 = vmatpush1.bf16.msra.mxu0 0
  %1783 = vmatprep.subr.bf16.mxu0 0
  %1784 = vmatpush1.bf16.msra.mxu0 0
  %1785 = vmatprep.subr.bf16.mxu0 0
  %1786 = vmatpush1.bf16.msra.mxu0 0
  %1787 = vmatprep.subr.bf16.mxu0 0
  %1788 = vmatpush1.bf16.msra.mxu0 0
  %1789 = vmatprep.subr.bf16.mxu0 0
  %1790 = vmatpush1.bf16.msra.mxu0 0
  %1791 = vmatprep.subr.bf16.mxu0 0
  %1792 = vmatpush1.bf16.msra.mxu0 0
  %1793 = vmatprep.mubr.bf16.mxu0 0
  %1794 = vmatmul.mubr.bf16.gmra.mrb[0].mxu0 %v1747
  %v1795 = vpop.f32.mrb[0].mxu0
  %v1796 = vadd.f32 0.0, %v1795
  %v1797 = vpop.f32.mrb[0].mxu0
  %v1798 = vpop.f32.mrb[0].mxu0
  %v1799 = vadd.f32 0.0, %v1798
  %v1800 = vpop.f32.mrb[0].mxu0
  %1801 = vmatprep.mubr.bf16.mxu0 0
  %1802 = vmatmul.mubr.bf16.gmra.mrb[0].mxu0 %v1750
  %v1803 = vpop.f32.mrb[0].mxu0
  %v1804 = vadd.f32 0.0, %v1803
  %v1805 = vpop.f32.mrb[0].mxu0
  %v1806 = vpop.f32.mrb[0].mxu0
  %v1807 = vadd.f32 0.0, %v1806
  %v1808 = vpop.f32.mrb[0].mxu0
  %1809 = vmatprep.mubr.bf16.mxu0 0
  %1810 = vmatmul.mubr.bf16.gmra.mrb[0].mxu0 %v1753
  %v1811 = vpop.f32.mrb[0].mxu0
  %v1812 = vadd.f32 0.0, %v1811
  %v1813 = vpop.f32.mrb[0].mxu0
  %v1814 = vpop.f32.mrb[0].mxu0
  %v1815 = vadd.f32 0.0, %v1814
  %v1816 = vpop.f32.mrb[0].mxu0
  %1817 = vmatprep.mubr.bf16.mxu0 0
  %1818 = vmatmul.mubr.bf16.gmra.mrb[0].mxu0 %v1756
  %v1819 = vpop.f32.mrb[0].mxu0
  %v1820 = vadd.f32 0.0, %v1819
  %v1821 = vpop.f32.mrb[0].mxu0
  %v1822 = vpop.f32.mrb[0].mxu0
  %v1823 = vadd.f32 0.0, %v1822
  %v1824 = vpop.f32.mrb[0].mxu0
  %1825 = vdwg.mxu0
  %v1826 = vadd.f32 %v1632, %v1796
  %v1827 = vadd.f32 %v1635, %v1799
  %v1828 = vadd.f32 %v1640, %v1804
  %v1829 = vadd.f32 %v1643, %v1807
  %v1830 = vadd.f32 %v1648, %v1812
  %v1831 = vadd.f32 %v1651, %v1815
  %v1832 = vadd.f32 %v1656, %v1820
  %v1833 = vadd.f32 %v1659, %v1823
  %vm1834 = vsmask.f32 2304
  %vm1835 = vsmask.f32 6416
  %vm1836 = vmor %vm1834, %vm1835
  %v1837 = vrot.slane %v1309, 5
  %v1838 = vrot.slane %v1312, 6
  %v1839 = vor.u32 %v1837, %v1838
  %v1840 = vrot.slane %v1839, 4
  %v1841 = vshrl.u32 %v1290, 16
  %v1843 = vrot.slane %v1841, 5
  %v1844 = vrot.slane %v1318, 6
  %v1845 = vor.u32 %v1843, %v1844
  %v1846 = vsel %vm1836, %v1840, %v1845
  %v1847 = vrot.slane %v1323, 5
  %v1848 = vrot.slane %v1326, 6
  %v1849 = vor.u32 %v1847, %v1848
  %v1850 = vrot.slane %v1849, 4
  %v1851 = vshrl.u32 %v1292, 16
  %v1853 = vrot.slane %v1851, 5
  %v1854 = vrot.slane %v1332, 6
  %v1855 = vor.u32 %v1853, %v1854
  %v1856 = vsel %vm1836, %v1850, %v1855
  %v1857 = vrot.slane %v1337, 5
  %v1858 = vrot.slane %v1340, 6
  %v1859 = vor.u32 %v1857, %v1858
  %v1860 = vrot.slane %v1859, 4
  %v1861 = vshrl.u32 %v1294, 16
  %v1863 = vrot.slane %v1861, 5
  %v1864 = vrot.slane %v1346, 6
  %v1865 = vor.u32 %v1863, %v1864
  %v1866 = vsel %vm1836, %v1860, %v1865
  %v1867 = vrot.slane %v1351, 5
  %v1868 = vrot.slane %v1354, 6
  %v1869 = vor.u32 %v1867, %v1868
  %v1870 = vrot.slane %v1869, 4
  %v1871 = vshrl.u32 %v1296, 16
  %v1873 = vrot.slane %v1871, 5
  %v1874 = vrot.slane %v1360, 6
  %v1875 = vor.u32 %v1873, %v1874
  %v1876 = vsel %vm1836, %v1870, %v1875
  %v1877 = vrot.slane %v1365, 5
  %v1878 = vrot.slane %v1368, 6
  %v1879 = vor.u32 %v1877, %v1878
  %v1880 = vrot.slane %v1879, 4
  %v1881 = vshrl.u32 %v1298, 16
  %v1883 = vrot.slane %v1881, 5
  %v1884 = vrot.slane %v1374, 6
  %v1885 = vor.u32 %v1883, %v1884
  %v1886 = vsel %vm1836, %v1880, %v1885
  %v1887 = vrot.slane %v1379, 5
  %v1888 = vrot.slane %v1382, 6
  %v1889 = vor.u32 %v1887, %v1888
  %v1890 = vrot.slane %v1889, 4
  %v1891 = vshrl.u32 %v1300, 16
  %v1893 = vrot.slane %v1891, 5
  %v1894 = vrot.slane %v1388, 6
  %v1895 = vor.u32 %v1893, %v1894
  %v1896 = vsel %vm1836, %v1890, %v1895
  %v1897 = vrot.slane %v1393, 5
  %v1898 = vrot.slane %v1396, 6
  %v1899 = vor.u32 %v1897, %v1898
  %v1900 = vrot.slane %v1899, 4
  %v1901 = vshrl.u32 %v1302, 16
  %v1903 = vrot.slane %v1901, 5
  %v1904 = vrot.slane %v1402, 6
  %v1905 = vor.u32 %v1903, %v1904
  %v1906 = vsel %vm1836, %v1900, %v1905
  %v1907 = vrot.slane %v1407, 5
  %v1908 = vrot.slane %v1410, 6
  %v1909 = vor.u32 %v1907, %v1908
  %v1910 = vrot.slane %v1909, 4
  %v1911 = vshrl.u32 %v1304, 16
  %v1913 = vrot.slane %v1911, 5
  %v1914 = vrot.slane %v1416, 6
  %v1915 = vor.u32 %v1913, %v1914
  %v1916 = vsel %vm1836, %v1910, %v1915
  %s1917 = scalar_lea.vmem %s4, 108
  %v1918 = vld [vmem:[%s1917] sm:$0xf]
  %v1919 = vld [vmem:[%s1917 + $0x4] sm:$0xf]
  %v1920 = vld [vmem:[%s1917 + $0x8] sm:$0xf]
  %v1921 = vld [vmem:[%s1917 + $0xc] sm:$0xf]
  %v1922 = vld [vmem:[%s1917 + $0x10] sm:$0xf]
  %v1923 = vld [vmem:[%s1917 + $0x14] sm:$0xf]
  %v1924 = vld [vmem:[%s1917 + $0x18] sm:$0xf]
  %v1925 = vld [vmem:[%s1917 + $0x1c] sm:$0xf]
  %v1926 = vld [vmem:[%s1917 + $0x20] sm:$0xf]
  %v1927 = vunpack.c.l.b16 %v1846
  %v1928 = vunpack.c.l.b16 %v1856
  %v1929 = vunpack.c.l.b16 %v1866
  %v1930 = vunpack.c.l.b16 %v1876
  %v1931 = vunpack.c.l.b16 %v1886
  %v1932 = vunpack.c.l.b16 %v1896
  %v1933 = vunpack.c.l.b16 %v1906
  %v1934 = vunpack.c.l.b16 %v1916
  %v1935 = vpack.c.b16 %v1928, %v1927
  %v1936 = vpack.c.b16 %v1930, %v1929
  %v1937 = vpack.c.b16 %v1932, %v1931
  %v1938 = vpack.c.b16 %v1934, %v1933
  %v1948 = vunpack.c.l.b16 %v1918
  %v1949 = vunpack.c.l.b16 %v1919
  %v1950 = vunpack.c.l.b16 %v1920
  %v1951 = vunpack.c.l.b16 %v1921
  %v1952 = vunpack.c.l.b16 %v1922
  %v1953 = vunpack.c.l.b16 %v1923
  %v1954 = vunpack.c.l.b16 %v1924
  %v1955 = vunpack.c.l.b16 %v1925
  %v1956 = vunpack.c.l.b16 %v1926
  %v1957 = vpack.c.b16 %v1949, %v1948
  %v1958 = vpack.c.b16 %v1951, %v1950
  %v1959 = vpack.c.b16 %v1953, %v1952
  %v1960 = vpack.c.b16 %v1955, %v1954
  %v1961 = vpack.c.b16 %v1956, %v1956
  %v1967 = vsel %vm1469, %v1935, 0
  %v1970 = vsel %vm1469, %v1936, 0
  %v1973 = vsel %vm1469, %v1937, 0
  %v1976 = vsel %vm1469, %v1938, 0
  %v1979 = vsel %vm1482, %v1961, 0
  %1981 = vmatprep.subr.bf16.mxu0 0
  %1982 = vmatpush1.bf16.msra.mxu0 %v1957
  %1983 = vmatprep.subr.bf16.mxu0 0
  %1984 = vmatpush1.bf16.msra.mxu0 %v1958
  %1985 = vmatprep.subr.bf16.mxu0 0
  %1986 = vmatpush1.bf16.msra.mxu0 %v1959
  %1987 = vmatprep.subr.bf16.mxu0 0
  %1988 = vmatpush1.bf16.msra.mxu0 %v1960
  %1989 = vmatprep.subr.bf16.mxu0 0
  %1990 = vmatpush1.bf16.msra.mxu0 %v1979
  %1991 = vmatprep.subr.bf16.mxu0 0
  %1992 = vmatpush1.bf16.msra.mxu0 0
  %1993 = vmatprep.subr.bf16.mxu0 0
  %1994 = vmatpush1.bf16.msra.mxu0 0
  %1995 = vmatprep.subr.bf16.mxu0 0
  %1996 = vmatpush1.bf16.msra.mxu0 0
  %1997 = vmatprep.subr.bf16.mxu0 0
  %1998 = vmatpush1.bf16.msra.mxu0 0
  %1999 = vmatprep.subr.bf16.mxu0 0
  %2000 = vmatpush1.bf16.msra.mxu0 0
  %2001 = vmatprep.subr.bf16.mxu0 0
  %2002 = vmatpush1.bf16.msra.mxu0 0
  %2003 = vmatprep.subr.bf16.mxu0 0
  %2004 = vmatpush1.bf16.msra.mxu0 0
  %2005 = vmatprep.subr.bf16.mxu0 0
  %2006 = vmatpush1.bf16.msra.mxu0 0
  %2007 = vmatprep.subr.bf16.mxu0 0
  %2008 = vmatpush1.bf16.msra.mxu0 0
  %2009 = vmatprep.subr.bf16.mxu0 0
  %2010 = vmatpush1.bf16.msra.mxu0 0
  %2011 = vmatprep.subr.bf16.mxu0 0
  %2012 = vmatpush1.bf16.msra.mxu0 0
  %2013 = vmatprep.mubr.bf16.mxu0 0
  %2014 = vmatmul.mubr.bf16.gmra.mrb[0].mxu0 %v1967
  %v2015 = vpop.f32.mrb[0].mxu0
  %v2016 = vadd.f32 0.0, %v2015
  %v2017 = vpop.f32.mrb[0].mxu0
  %v2018 = vpop.f32.mrb[0].mxu0
  %v2019 = vadd.f32 0.0, %v2018
  %v2020 = vpop.f32.mrb[0].mxu0
  %2021 = vmatprep.mubr.bf16.mxu0 0
  %2022 = vmatmul.mubr.bf16.gmra.mrb[0].mxu0 %v1970
  %v2023 = vpop.f32.mrb[0].mxu0
  %v2024 = vadd.f32 0.0, %v2023
  %v2025 = vpop.f32.mrb[0].mxu0
  %v2026 = vpop.f32.mrb[0].mxu0
  %v2027 = vadd.f32 0.0, %v2026
  %v2028 = vpop.f32.mrb[0].mxu0
  %2029 = vmatprep.mubr.bf16.mxu0 0
  %2030 = vmatmul.mubr.bf16.gmra.mrb[0].mxu0 %v1973
  %v2031 = vpop.f32.mrb[0].mxu0
  %v2032 = vadd.f32 0.0, %v2031
  %v2033 = vpop.f32.mrb[0].mxu0
  %v2034 = vpop.f32.mrb[0].mxu0
  %v2035 = vadd.f32 0.0, %v2034
  %v2036 = vpop.f32.mrb[0].mxu0
  %2037 = vmatprep.mubr.bf16.mxu0 0
  %2038 = vmatmul.mubr.bf16.gmra.mrb[0].mxu0 %v1976
  %v2039 = vpop.f32.mrb[0].mxu0
  %v2040 = vadd.f32 0.0, %v2039
  %v2041 = vpop.f32.mrb[0].mxu0
  %v2042 = vpop.f32.mrb[0].mxu0
  %v2043 = vadd.f32 0.0, %v2042
  %v2044 = vpop.f32.mrb[0].mxu0
  %2045 = vdwg.mxu0
  %v2046 = vadd.f32 %v1826, %v2016
  %v2047 = vadd.f32 %v1827, %v2019
  %v2048 = vadd.f32 %v1828, %v2024
  %v2049 = vadd.f32 %v1829, %v2027
  %v2050 = vadd.f32 %v1830, %v2032
  %v2051 = vadd.f32 %v1831, %v2035
  %v2052 = vadd.f32 %v1832, %v2040
  %v2053 = vadd.f32 %v1833, %v2043
  %vm2054 = vcmask 1041408
  %vm2055 = vcmask 1045508
  %vm2056 = vmor %vm2054, %vm2055
  %v2057 = vrot.slane %v1289, 6
  %v2058 = vrot.slane %v2057, 4
  %v2059 = vrot.slane %v1290, 6
  %v2060 = vsel %vm2056, %v2058, %v2059
  %v2061 = vrot.slane %v1291, 6
  %v2062 = vrot.slane %v2061, 4
  %v2063 = vrot.slane %v1292, 6
  %v2064 = vsel %vm2056, %v2062, %v2063
  %v2065 = vrot.slane %v1293, 6
  %v2066 = vrot.slane %v2065, 4
  %v2067 = vrot.slane %v1294, 6
  %v2068 = vsel %vm2056, %v2066, %v2067
  %v2069 = vrot.slane %v1295, 6
  %v2070 = vrot.slane %v2069, 4
  %v2071 = vrot.slane %v1296, 6
  %v2072 = vsel %vm2056, %v2070, %v2071
  %v2073 = vrot.slane %v1297, 6
  %v2074 = vrot.slane %v2073, 4
  %v2075 = vrot.slane %v1298, 6
  %v2076 = vsel %vm2056, %v2074, %v2075
  %v2077 = vrot.slane %v1299, 6
  %v2078 = vrot.slane %v2077, 4
  %v2079 = vrot.slane %v1300, 6
  %v2080 = vsel %vm2056, %v2078, %v2079
  %v2081 = vrot.slane %v1301, 6
  %v2082 = vrot.slane %v2081, 4
  %v2083 = vrot.slane %v1302, 6
  %v2084 = vsel %vm2056, %v2082, %v2083
  %v2085 = vrot.slane %v1303, 6
  %v2086 = vrot.slane %v2085, 4
  %v2087 = vrot.slane %v1304, 6
  %v2088 = vsel %vm2056, %v2086, %v2087
  %s2089 = scalar_lea.vmem %s4, 144
  %v2090 = vld [vmem:[%s2089] sm:$0xf]
  %v2091 = vld [vmem:[%s2089 + $0x4] sm:$0xf]
  %v2092 = vld [vmem:[%s2089 + $0x8] sm:$0xf]
  %v2093 = vld [vmem:[%s2089 + $0xc] sm:$0xf]
  %v2094 = vld [vmem:[%s2089 + $0x10] sm:$0xf]
  %v2095 = vld [vmem:[%s2089 + $0x14] sm:$0xf]
  %v2096 = vld [vmem:[%s2089 + $0x18] sm:$0xf]
  %v2097 = vld [vmem:[%s2089 + $0x1c] sm:$0xf]
  %v2098 = vld [vmem:[%s2089 + $0x20] sm:$0xf]
  %v2099 = vunpack.c.l.b16 %v2060
  %v2100 = vunpack.c.l.b16 %v2064
  %v2101 = vunpack.c.l.b16 %v2068
  %v2102 = vunpack.c.l.b16 %v2072
  %v2103 = vunpack.c.l.b16 %v2076
  %v2104 = vunpack.c.l.b16 %v2080
  %v2105 = vunpack.c.l.b16 %v2084
  %v2106 = vunpack.c.l.b16 %v2088
  %v2107 = vpack.c.b16 %v2100, %v2099
  %v2108 = vpack.c.b16 %v2102, %v2101
  %v2109 = vpack.c.b16 %v2104, %v2103
  %v2110 = vpack.c.b16 %v2106, %v2105
  %v2120 = vunpack.c.l.b16 %v2090
  %v2121 = vunpack.c.l.b16 %v2091
  %v2122 = vunpack.c.l.b16 %v2092
  %v2123 = vunpack.c.l.b16 %v2093
  %v2124 = vunpack.c.l.b16 %v2094
  %v2125 = vunpack.c.l.b16 %v2095
  %v2126 = vunpack.c.l.b16 %v2096
  %v2127 = vunpack.c.l.b16 %v2097
  %v2128 = vunpack.c.l.b16 %v2098
  %v2129 = vpack.c.b16 %v2121, %v2120
  %v2130 = vpack.c.b16 %v2123, %v2122
  %v2131 = vpack.c.b16 %v2125, %v2124
  %v2132 = vpack.c.b16 %v2127, %v2126
  %v2133 = vpack.c.b16 %v2128, %v2128
  %v2139 = vsel %vm1469, %v2107, 0
  %v2142 = vsel %vm1469, %v2108, 0
  %v2145 = vsel %vm1469, %v2109, 0
  %v2148 = vsel %vm1469, %v2110, 0
  %v2151 = vsel %vm1482, %v2133, 0
  %2153 = vmatprep.subr.bf16.mxu0 0
  %2154 = vmatpush1.bf16.msra.mxu0 %v2129
  %2155 = vmatprep.subr.bf16.mxu0 0
  %2156 = vmatpush1.bf16.msra.mxu0 %v2130
  %2157 = vmatprep.subr.bf16.mxu0 0
  %2158 = vmatpush1.bf16.msra.mxu0 %v2131
  %2159 = vmatprep.subr.bf16.mxu0 0
  %2160 = vmatpush1.bf16.msra.mxu0 %v2132
  %2161 = vmatprep.subr.bf16.mxu0 0
  %2162 = vmatpush1.bf16.msra.mxu0 %v2151
  %2163 = vmatprep.subr.bf16.mxu0 0
  %2164 = vmatpush1.bf16.msra.mxu0 0
  %2165 = vmatprep.subr.bf16.mxu0 0
  %2166 = vmatpush1.bf16.msra.mxu0 0
  %2167 = vmatprep.subr.bf16.mxu0 0
  %2168 = vmatpush1.bf16.msra.mxu0 0
  %2169 = vmatprep.subr.bf16.mxu0 0
  %2170 = vmatpush1.bf16.msra.mxu0 0
  %2171 = vmatprep.subr.bf16.mxu0 0
  %2172 = vmatpush1.bf16.msra.mxu0 0
  %2173 = vmatprep.subr.bf16.mxu0 0
  %2174 = vmatpush1.bf16.msra.mxu0 0
  %2175 = vmatprep.subr.bf16.mxu0 0
  %2176 = vmatpush1.bf16.msra.mxu0 0
  %2177 = vmatprep.subr.bf16.mxu0 0
  %2178 = vmatpush1.bf16.msra.mxu0 0
  %2179 = vmatprep.subr.bf16.mxu0 0
  %2180 = vmatpush1.bf16.msra.mxu0 0
  %2181 = vmatprep.subr.bf16.mxu0 0
  %2182 = vmatpush1.bf16.msra.mxu0 0
  %2183 = vmatprep.subr.bf16.mxu0 0
  %2184 = vmatpush1.bf16.msra.mxu0 0
  %2185 = vmatprep.mubr.bf16.mxu0 0
  %2186 = vmatmul.mubr.bf16.gmra.mrb[0].mxu0 %v2139
  %v2187 = vpop.f32.mrb[0].mxu0
  %v2188 = vadd.f32 0.0, %v2187
  %v2189 = vpop.f32.mrb[0].mxu0
  %v2190 = vpop.f32.mrb[0].mxu0
  %v2191 = vadd.f32 0.0, %v2190
  %v2192 = vpop.f32.mrb[0].mxu0
  %2193 = vmatprep.mubr.bf16.mxu0 0
  %2194 = vmatmul.mubr.bf16.gmra.mrb[0].mxu0 %v2142
  %v2195 = vpop.f32.mrb[0].mxu0
  %v2196 = vadd.f32 0.0, %v2195
  %v2197 = vpop.f32.mrb[0].mxu0
  %v2198 = vpop.f32.mrb[0].mxu0
  %v2199 = vadd.f32 0.0, %v2198
  %v2200 = vpop.f32.mrb[0].mxu0
  %2201 = vmatprep.mubr.bf16.mxu0 0
  %2202 = vmatmul.mubr.bf16.gmra.mrb[0].mxu0 %v2145
  %v2203 = vpop.f32.mrb[0].mxu0
  %v2204 = vadd.f32 0.0, %v2203
  %v2205 = vpop.f32.mrb[0].mxu0
  %v2206 = vpop.f32.mrb[0].mxu0
  %v2207 = vadd.f32 0.0, %v2206
  %v2208 = vpop.f32.mrb[0].mxu0
  %2209 = vmatprep.mubr.bf16.mxu0 0
  %2210 = vmatmul.mubr.bf16.gmra.mrb[0].mxu0 %v2148
  %v2211 = vpop.f32.mrb[0].mxu0
  %v2212 = vadd.f32 0.0, %v2211
  %v2213 = vpop.f32.mrb[0].mxu0
  %v2214 = vpop.f32.mrb[0].mxu0
  %v2215 = vadd.f32 0.0, %v2214
  %v2216 = vpop.f32.mrb[0].mxu0
  %2217 = vdwg.mxu0
  %v2218 = vadd.f32 %v2046, %v2188
  %v2219 = vadd.f32 %v2047, %v2191
  %v2220 = vadd.f32 %v2048, %v2196
  %v2221 = vadd.f32 %v2049, %v2199
  %v2222 = vadd.f32 %v2050, %v2204
  %v2223 = vadd.f32 %v2051, %v2207
  %v2224 = vadd.f32 %v2052, %v2212
  %v2225 = vadd.f32 %v2053, %v2215
  %v2226 = vld [vmem:[%s5] sm:$0x1]
  %v2228 = vlaneseq
  %v2229 = vshrl.u32 %v2228, 7
  %v2230 = vsub.s32 0, %v2229
  %v2231 = vrot.slane %v2226, %v2230
  %v2233 = vadd.f32 %v2218, %v2231
  %v2234 = vadd.f32 %v2219, %v2231
  %v2235 = vadd.f32 %v2220, %v2231
  %v2236 = vadd.f32 %v2221, %v2231
  %v2237 = vadd.f32 %v2222, %v2231
  %v2238 = vadd.f32 %v2223, %v2231
  %v2239 = vadd.f32 %v2224, %v2231
  %v2240 = vadd.f32 %v2225, %v2231
  %v2241 = vmax.f32 %v2233, 0.0
  %v2242 = vmax.f32 %v2234, 0.0
  %v2243 = vmax.f32 %v2235, 0.0
  %v2244 = vmax.f32 %v2236, 0.0
  %v2245 = vmax.f32 %v2237, 0.0
  %v2246 = vmax.f32 %v2238, 0.0
  %v2247 = vmax.f32 %v2239, 0.0
  %v2248 = vmax.f32 %v2240, 0.0
  %v2249 = vpack.c.bf16 %v2242, %v2241
  %v2250 = vpack.c.bf16 %v2244, %v2243
  %v2251 = vpack.c.bf16 %v2246, %v2245
  %v2252 = vpack.c.bf16 %v2248, %v2247
  %v2253 = vld [vmem:[%s6] sm:$0xf]
  %v2254 = vld [vmem:[%s6 + $0x4] sm:$0xf]
  %v2255 = vld [vmem:[%s6 + $0x8] sm:$0xf]
  %v2256 = vld [vmem:[%s6 + $0xc] sm:$0xf]
  %v2257 = vld [vmem:[%s6 + $0x10] sm:$0xf]
  %v2258 = vld [vmem:[%s6 + $0x14] sm:$0xf]
  %v2259 = vld [vmem:[%s6 + $0x18] sm:$0xf]
  %v2260 = vld [vmem:[%s6 + $0x1c] sm:$0xf]
  %v2261 = vld [vmem:[%s6 + $0x20] sm:$0xf]
  %v2262 = vld [vmem:[%s6 + $0x24] sm:$0xf]
  %v2263 = vld [vmem:[%s6 + $0x28] sm:$0xf]
  %v2264 = vld [vmem:[%s6 + $0x2c] sm:$0xf]
  %v2265 = vld [vmem:[%s6 + $0x30] sm:$0xf]
  %v2266 = vld [vmem:[%s6 + $0x34] sm:$0xf]
  %v2267 = vld [vmem:[%s6 + $0x38] sm:$0xf]
  %v2268 = vld [vmem:[%s6 + $0x3c] sm:$0xf]
  %v2285 = vunpack.c.l.b16 %v2253
  %v2286 = vunpack.c.l.b16 %v2254
  %v2287 = vunpack.c.l.b16 %v2255
  %v2288 = vunpack.c.l.b16 %v2256
  %v2289 = vunpack.c.l.b16 %v2257
  %v2290 = vunpack.c.l.b16 %v2258
  %v2291 = vunpack.c.l.b16 %v2259
  %v2292 = vunpack.c.l.b16 %v2260
  %v2293 = vunpack.c.l.b16 %v2261
  %v2294 = vunpack.c.l.b16 %v2262
  %v2295 = vunpack.c.l.b16 %v2263
  %v2296 = vunpack.c.l.b16 %v2264
  %v2297 = vunpack.c.l.b16 %v2265
  %v2298 = vunpack.c.l.b16 %v2266
  %v2299 = vunpack.c.l.b16 %v2267
  %v2300 = vunpack.c.l.b16 %v2268
  %v2301 = vpack.c.b16 %v2286, %v2285
  %v2302 = vpack.c.b16 %v2288, %v2287
  %v2303 = vpack.c.b16 %v2290, %v2289
  %v2304 = vpack.c.b16 %v2292, %v2291
  %v2305 = vpack.c.b16 %v2294, %v2293
  %v2306 = vpack.c.b16 %v2296, %v2295
  %v2307 = vpack.c.b16 %v2298, %v2297
  %v2308 = vpack.c.b16 %v2300, %v2299
  %2317 = vmatprep.subr.bf16.mxu0 0
  %2318 = vmatpush1.bf16.msra.mxu0 %v2301
  %2319 = vmatprep.subr.bf16.mxu0 0
  %2320 = vmatpush1.bf16.msra.mxu0 %v2302
  %2321 = vmatprep.subr.bf16.mxu0 0
  %2322 = vmatpush1.bf16.msra.mxu0 %v2303
  %2323 = vmatprep.subr.bf16.mxu0 0
  %2324 = vmatpush1.bf16.msra.mxu0 %v2304
  %2325 = vmatprep.subr.bf16.mxu0 0
  %2326 = vmatpush1.bf16.msra.mxu0 %v2305
  %2327 = vmatprep.subr.bf16.mxu0 0
  %2328 = vmatpush1.bf16.msra.mxu0 %v2306
  %2329 = vmatprep.subr.bf16.mxu0 0
  %2330 = vmatpush1.bf16.msra.mxu0 %v2307
  %2331 = vmatprep.subr.bf16.mxu0 0
  %2332 = vmatpush1.bf16.msra.mxu0 %v2308
  %2333 = vmatprep.subr.bf16.mxu0 0
  %2334 = vmatpush1.bf16.msra.mxu0 0
  %2335 = vmatprep.subr.bf16.mxu0 0
  %2336 = vmatpush1.bf16.msra.mxu0 0
  %2337 = vmatprep.subr.bf16.mxu0 0
  %2338 = vmatpush1.bf16.msra.mxu0 0
  %2339 = vmatprep.subr.bf16.mxu0 0
  %2340 = vmatpush1.bf16.msra.mxu0 0
  %2341 = vmatprep.subr.bf16.mxu0 0
  %2342 = vmatpush1.bf16.msra.mxu0 0
  %2343 = vmatprep.subr.bf16.mxu0 0
  %2344 = vmatpush1.bf16.msra.mxu0 0
  %2345 = vmatprep.subr.bf16.mxu0 0
  %2346 = vmatpush1.bf16.msra.mxu0 0
  %2347 = vmatprep.subr.bf16.mxu0 0
  %2348 = vmatpush1.bf16.msra.mxu0 0
  %2349 = vmatprep.mubr.bf16.mxu0 0
  %2350 = vmatmul.mubr.bf16.gmra.mrb[0].mxu0 %v2249
  %v2351 = vpop.f32.mrb[0].mxu0
  %v2352 = vadd.f32 0.0, %v2351
  %v2353 = vpop.f32.mrb[0].mxu0
  %v2354 = vpop.f32.mrb[0].mxu0
  %v2355 = vadd.f32 0.0, %v2354
  %v2356 = vpop.f32.mrb[0].mxu0
  %2357 = vmatprep.mubr.bf16.mxu0 0
  %2358 = vmatmul.mubr.bf16.gmra.mrb[0].mxu0 %v2250
  %v2359 = vpop.f32.mrb[0].mxu0
  %v2360 = vadd.f32 0.0, %v2359
  %v2361 = vpop.f32.mrb[0].mxu0
  %v2362 = vpop.f32.mrb[0].mxu0
  %v2363 = vadd.f32 0.0, %v2362
  %v2364 = vpop.f32.mrb[0].mxu0
  %2365 = vmatprep.mubr.bf16.mxu0 0
  %2366 = vmatmul.mubr.bf16.gmra.mrb[0].mxu0 %v2251
  %v2367 = vpop.f32.mrb[0].mxu0
  %v2368 = vadd.f32 0.0, %v2367
  %v2369 = vpop.f32.mrb[0].mxu0
  %v2370 = vpop.f32.mrb[0].mxu0
  %v2371 = vadd.f32 0.0, %v2370
  %v2372 = vpop.f32.mrb[0].mxu0
  %2373 = vmatprep.mubr.bf16.mxu0 0
  %2374 = vmatmul.mubr.bf16.gmra.mrb[0].mxu0 %v2252
  %v2375 = vpop.f32.mrb[0].mxu0
  %v2376 = vadd.f32 0.0, %v2375
  %v2377 = vpop.f32.mrb[0].mxu0
  %v2378 = vpop.f32.mrb[0].mxu0
  %v2379 = vadd.f32 0.0, %v2378
  %v2380 = vpop.f32.mrb[0].mxu0
  %2381 = vdwg.mxu0
  %s2382 = scalar_lea.vmem %s6, 64
  %v2383 = vld [vmem:[%s2382] sm:$0xf]
  %v2384 = vld [vmem:[%s2382 + $0x4] sm:$0xf]
  %v2385 = vld [vmem:[%s2382 + $0x8] sm:$0xf]
  %v2386 = vld [vmem:[%s2382 + $0xc] sm:$0xf]
  %v2387 = vld [vmem:[%s2382 + $0x10] sm:$0xf]
  %v2388 = vld [vmem:[%s2382 + $0x14] sm:$0xf]
  %v2389 = vld [vmem:[%s2382 + $0x18] sm:$0xf]
  %v2390 = vld [vmem:[%s2382 + $0x1c] sm:$0xf]
  %v2391 = vld [vmem:[%s2382 + $0x20] sm:$0xf]
  %v2392 = vld [vmem:[%s2382 + $0x24] sm:$0xf]
  %v2393 = vld [vmem:[%s2382 + $0x28] sm:$0xf]
  %v2394 = vld [vmem:[%s2382 + $0x2c] sm:$0xf]
  %v2395 = vld [vmem:[%s2382 + $0x30] sm:$0xf]
  %v2396 = vld [vmem:[%s2382 + $0x34] sm:$0xf]
  %v2397 = vld [vmem:[%s2382 + $0x38] sm:$0xf]
  %v2398 = vld [vmem:[%s2382 + $0x3c] sm:$0xf]
  %v2415 = vunpack.c.l.b16 %v2383
  %v2416 = vunpack.c.l.b16 %v2384
  %v2417 = vunpack.c.l.b16 %v2385
  %v2418 = vunpack.c.l.b16 %v2386
  %v2419 = vunpack.c.l.b16 %v2387
  %v2420 = vunpack.c.l.b16 %v2388
  %v2421 = vunpack.c.l.b16 %v2389
  %v2422 = vunpack.c.l.b16 %v2390
  %v2423 = vunpack.c.l.b16 %v2391
  %v2424 = vunpack.c.l.b16 %v2392
  %v2425 = vunpack.c.l.b16 %v2393
  %v2426 = vunpack.c.l.b16 %v2394
  %v2427 = vunpack.c.l.b16 %v2395
  %v2428 = vunpack.c.l.b16 %v2396
  %v2429 = vunpack.c.l.b16 %v2397
  %v2430 = vunpack.c.l.b16 %v2398
  %v2431 = vpack.c.b16 %v2416, %v2415
  %v2432 = vpack.c.b16 %v2418, %v2417
  %v2433 = vpack.c.b16 %v2420, %v2419
  %v2434 = vpack.c.b16 %v2422, %v2421
  %v2435 = vpack.c.b16 %v2424, %v2423
  %v2436 = vpack.c.b16 %v2426, %v2425
  %v2437 = vpack.c.b16 %v2428, %v2427
  %v2438 = vpack.c.b16 %v2430, %v2429
  %2447 = vmatprep.subr.bf16.mxu0 0
  %2448 = vmatpush1.bf16.msra.mxu0 %v2431
  %2449 = vmatprep.subr.bf16.mxu0 0
  %2450 = vmatpush1.bf16.msra.mxu0 %v2432
  %2451 = vmatprep.subr.bf16.mxu0 0
  %2452 = vmatpush1.bf16.msra.mxu0 %v2433
  %2453 = vmatprep.subr.bf16.mxu0 0
  %2454 = vmatpush1.bf16.msra.mxu0 %v2434
  %2455 = vmatprep.subr.bf16.mxu0 0
  %2456 = vmatpush1.bf16.msra.mxu0 %v2435
  %2457 = vmatprep.subr.bf16.mxu0 0
  %2458 = vmatpush1.bf16.msra.mxu0 %v2436
  %2459 = vmatprep.subr.bf16.mxu0 0
  %2460 = vmatpush1.bf16.msra.mxu0 %v2437
  %2461 = vmatprep.subr.bf16.mxu0 0
  %2462 = vmatpush1.bf16.msra.mxu0 %v2438
  %2463 = vmatprep.subr.bf16.mxu0 0
  %2464 = vmatpush1.bf16.msra.mxu0 0
  %2465 = vmatprep.subr.bf16.mxu0 0
  %2466 = vmatpush1.bf16.msra.mxu0 0
  %2467 = vmatprep.subr.bf16.mxu0 0
  %2468 = vmatpush1.bf16.msra.mxu0 0
  %2469 = vmatprep.subr.bf16.mxu0 0
  %2470 = vmatpush1.bf16.msra.mxu0 0
  %2471 = vmatprep.subr.bf16.mxu0 0
  %2472 = vmatpush1.bf16.msra.mxu0 0
  %2473 = vmatprep.subr.bf16.mxu0 0
  %2474 = vmatpush1.bf16.msra.mxu0 0
  %2475 = vmatprep.subr.bf16.mxu0 0
  %2476 = vmatpush1.bf16.msra.mxu0 0
  %2477 = vmatprep.subr.bf16.mxu0 0
  %2478 = vmatpush1.bf16.msra.mxu0 0
  %2479 = vmatprep.mubr.bf16.mxu0 0
  %2480 = vmatmul.mubr.bf16.gmra.mrb[0].mxu0 %v2249
  %v2481 = vpop.f32.mrb[0].mxu0
  %v2482 = vadd.f32 0.0, %v2481
  %v2483 = vpop.f32.mrb[0].mxu0
  %v2484 = vpop.f32.mrb[0].mxu0
  %v2485 = vadd.f32 0.0, %v2484
  %v2486 = vpop.f32.mrb[0].mxu0
  %2487 = vmatprep.mubr.bf16.mxu0 0
  %2488 = vmatmul.mubr.bf16.gmra.mrb[0].mxu0 %v2250
  %v2489 = vpop.f32.mrb[0].mxu0
  %v2490 = vadd.f32 0.0, %v2489
  %v2491 = vpop.f32.mrb[0].mxu0
  %v2492 = vpop.f32.mrb[0].mxu0
  %v2493 = vadd.f32 0.0, %v2492
  %v2494 = vpop.f32.mrb[0].mxu0
  %2495 = vmatprep.mubr.bf16.mxu0 0
  %2496 = vmatmul.mubr.bf16.gmra.mrb[0].mxu0 %v2251
  %v2497 = vpop.f32.mrb[0].mxu0
  %v2498 = vadd.f32 0.0, %v2497
  %v2499 = vpop.f32.mrb[0].mxu0
  %v2500 = vpop.f32.mrb[0].mxu0
  %v2501 = vadd.f32 0.0, %v2500
  %v2502 = vpop.f32.mrb[0].mxu0
  %2503 = vmatprep.mubr.bf16.mxu0 0
  %2504 = vmatmul.mubr.bf16.gmra.mrb[0].mxu0 %v2252
  %v2505 = vpop.f32.mrb[0].mxu0
  %v2506 = vadd.f32 0.0, %v2505
  %v2507 = vpop.f32.mrb[0].mxu0
  %v2508 = vpop.f32.mrb[0].mxu0
  %v2509 = vadd.f32 0.0, %v2508
  %v2510 = vpop.f32.mrb[0].mxu0
  %2511 = vdwg.mxu0
  %v2512 = vmax.f32 %v2352, %v2482
  %v2513 = vmax.f32 %v2355, %v2485
  %v2514 = vmax.f32 %v2360, %v2490
  %v2515 = vmax.f32 %v2363, %v2493
  %v2516 = vmax.f32 %v2368, %v2498
  %v2517 = vmax.f32 %v2371, %v2501
  %v2518 = vmax.f32 %v2376, %v2506
  %v2519 = vmax.f32 %v2379, %v2509
  %v2528 = vrot.slane %v2512, 1
  %v2529 = vrot.slane %v2513, 1
  %v2530 = vrot.slane %v2514, 1
  %v2531 = vrot.slane %v2515, 1
  %v2532 = vrot.slane %v2516, 1
  %v2533 = vrot.slane %v2517, 1
  %v2534 = vrot.slane %v2518, 1
  %v2535 = vrot.slane %v2519, 1
  %v2544 = vmax.f32 %v2512, %v2528
  %v2545 = vmax.f32 %v2513, %v2529
  %v2546 = vmax.f32 %v2514, %v2530
  %v2547 = vmax.f32 %v2515, %v2531
  %v2548 = vmax.f32 %v2516, %v2532
  %v2549 = vmax.f32 %v2517, %v2533
  %v2550 = vmax.f32 %v2518, %v2534
  %v2551 = vmax.f32 %v2519, %v2535
  %v2552 = vpack.c.bf16 %v2544, %v2544
  %v2553 = vpack.c.bf16 %v2545, %v2545
  %v2554 = vpack.c.bf16 %v2546, %v2546
  %v2555 = vpack.c.bf16 %v2547, %v2547
  %v2556 = vpack.c.bf16 %v2548, %v2548
  %v2557 = vpack.c.bf16 %v2549, %v2549
  %v2558 = vpack.c.bf16 %v2550, %v2550
  %v2559 = vpack.c.bf16 %v2551, %v2551
  %v2560 = vld [vmem:[%s7] sm:$0xf]
  %v2561 = vld [vmem:[%s7 + $0x4] sm:$0xf]
  %v2562 = vld [vmem:[%s7 + $0x8] sm:$0xf]
  %v2563 = vld [vmem:[%s7 + $0xc] sm:$0xf]
  %v2564 = vld [vmem:[%s7 + $0x10] sm:$0xf]
  %v2565 = vld [vmem:[%s7 + $0x14] sm:$0xf]
  %v2566 = vld [vmem:[%s7 + $0x18] sm:$0xf]
  %v2567 = vld [vmem:[%s7 + $0x1c] sm:$0xf]
  %s2568 = scalar_lea.vmem %s7, 32
  %v2569 = vld [vmem:[%s2568] sm:$0xf]
  %v2570 = vld [vmem:[%s2568 + $0x4] sm:$0xf]
  %v2571 = vld [vmem:[%s2568 + $0x8] sm:$0xf]
  %v2572 = vld [vmem:[%s2568 + $0xc] sm:$0xf]
  %v2573 = vld [vmem:[%s2568 + $0x10] sm:$0xf]
  %v2574 = vld [vmem:[%s2568 + $0x14] sm:$0xf]
  %v2575 = vld [vmem:[%s2568 + $0x18] sm:$0xf]
  %v2576 = vld [vmem:[%s2568 + $0x1c] sm:$0xf]
  %v2585 = vunpack.c.l.b16 %v2552
  %v2586 = vunpack.c.l.b16 %v2553
  %v2587 = vunpack.c.l.b16 %v2554
  %v2588 = vunpack.c.l.b16 %v2555
  %v2589 = vunpack.c.l.b16 %v2556
  %v2590 = vunpack.c.l.b16 %v2557
  %v2591 = vunpack.c.l.b16 %v2558
  %v2592 = vunpack.c.l.b16 %v2559
  %v2593 = vrot.slane %v2585, 2
  %v2594 = vrot.slane %v2586, 1
  %vm2595 = vcmask 1041409
  %v2596 = vsel %vm2595, %v2594, %v2593
  %vm2597 = vcmask 1042434
  %v2598 = vsel %vm2597, %v2587, %v2596
  %v2599 = vrot.slane %v2588, 7
  %vm2600 = vcmask 1043459
  %v2601 = vsel %vm2600, %v2599, %v2598
  %v2602 = vrot.slane %v2589, 6
  %vm2603 = vcmask 1044484
  %v2604 = vsel %vm2603, %v2602, %v2601
  %v2605 = vrot.slane %v2590, 5
  %vm2606 = vcmask 1045509
  %v2607 = vsel %vm2606, %v2605, %v2604
  %v2608 = vrot.slane %v2591, 4
  %vm2609 = vcmask 1046534
  %v2610 = vsel %vm2609, %v2608, %v2607
  %v2611 = vrot.slane %v2592, 3
  %vm2612 = vcmask 1047559
  %v2613 = vsel %vm2612, %v2611, %v2610
  %v2614 = vpack.c.b16 %v2613, %v2613
  %v2623 = vunpack.c.l.b16 %v2569
  %v2624 = vunpack.c.l.b16 %v2570
  %v2625 = vunpack.c.l.b16 %v2571
  %v2626 = vunpack.c.l.b16 %v2572
  %v2627 = vunpack.c.l.b16 %v2573
  %v2628 = vunpack.c.l.b16 %v2574
  %v2629 = vunpack.c.l.b16 %v2575
  %v2630 = vunpack.c.l.b16 %v2576
  %v2631 = vpack.c.b16 %v2624, %v2623
  %v2632 = vpack.c.b16 %v2626, %v2625
  %v2633 = vpack.c.b16 %v2628, %v2627
  %v2634 = vpack.c.b16 %v2630, %v2629
  %vm2639 = vcmask 523264
  %v2641 = vsel %vm2639, %v2614, 0
  %2643 = vmatprep.subr.bf16.mxu0 0
  %2644 = vmatpush1.bf16.msra.mxu0 %v2631
  %2645 = vmatprep.subr.bf16.mxu0 0
  %2646 = vmatpush1.bf16.msra.mxu0 %v2632
  %2647 = vmatprep.subr.bf16.mxu0 0
  %2648 = vmatpush1.bf16.msra.mxu0 %v2633
  %2649 = vmatprep.subr.bf16.mxu0 0
  %2650 = vmatpush1.bf16.msra.mxu0 %v2634
  %2651 = vmatprep.subr.bf16.mxu0 0
  %2652 = vmatpush1.bf16.msra.mxu0 0
  %2653 = vmatprep.subr.bf16.mxu0 0
  %2654 = vmatpush1.bf16.msra.mxu0 0
  %2655 = vmatprep.subr.bf16.mxu0 0
  %2656 = vmatpush1.bf16.msra.mxu0 0
  %2657 = vmatprep.subr.bf16.mxu0 0
  %2658 = vmatpush1.bf16.msra.mxu0 0
  %2659 = vmatprep.subr.bf16.mxu0 0
  %2660 = vmatpush1.bf16.msra.mxu0 0
  %2661 = vmatprep.subr.bf16.mxu0 0
  %2662 = vmatpush1.bf16.msra.mxu0 0
  %2663 = vmatprep.subr.bf16.mxu0 0
  %2664 = vmatpush1.bf16.msra.mxu0 0
  %2665 = vmatprep.subr.bf16.mxu0 0
  %2666 = vmatpush1.bf16.msra.mxu0 0
  %2667 = vmatprep.subr.bf16.mxu0 0
  %2668 = vmatpush1.bf16.msra.mxu0 0
  %2669 = vmatprep.subr.bf16.mxu0 0
  %2670 = vmatpush1.bf16.msra.mxu0 0
  %2671 = vmatprep.subr.bf16.mxu0 0
  %2672 = vmatpush1.bf16.msra.mxu0 0
  %2673 = vmatprep.subr.bf16.mxu0 0
  %2674 = vmatpush1.bf16.msra.mxu0 0
  %2675 = vmatprep.mubr.bf16.mxu0 0
  %2676 = vmatmul.mubr.bf16.gmra.mrb[0].mxu0 %v2641
  %v2677 = vpop.f32.mrb[0].mxu0
  %v2678 = vadd.f32 0.0, %v2677
  %v2679 = vpop.f32.mrb[0].mxu0
  %v2680 = vpop.f32.mrb[0].mxu0
  %v2681 = vpop.f32.mrb[0].mxu0
  %2682 = vdwg.mxu0
  %v2683 = vrot.slane %v2586, 7
  %v2684 = vsel %vm2595, %v2683, %v2585
  %v2685 = vrot.slane %v2587, 6
  %v2686 = vsel %vm2597, %v2685, %v2684
  %v2687 = vrot.slane %v2588, 5
  %v2688 = vsel %vm2600, %v2687, %v2686
  %v2689 = vrot.slane %v2589, 4
  %v2690 = vsel %vm2603, %v2689, %v2688
  %v2691 = vrot.slane %v2590, 3
  %v2692 = vsel %vm2606, %v2691, %v2690
  %v2693 = vrot.slane %v2591, 2
  %v2694 = vsel %vm2609, %v2693, %v2692
  %v2695 = vrot.slane %v2592, 1
  %v2696 = vsel %vm2612, %v2695, %v2694
  %v2697 = vpack.c.b16 %v2696, %v2696
  %v2706 = vunpack.c.l.b16 %v2560
  %v2707 = vunpack.c.l.b16 %v2561
  %v2708 = vunpack.c.l.b16 %v2562
  %v2709 = vunpack.c.l.b16 %v2563
  %v2710 = vunpack.c.l.b16 %v2564
  %v2711 = vunpack.c.l.b16 %v2565
  %v2712 = vunpack.c.l.b16 %v2566
  %v2713 = vunpack.c.l.b16 %v2567
  %v2714 = vpack.c.b16 %v2707, %v2706
  %v2715 = vpack.c.b16 %v2709, %v2708
  %v2716 = vpack.c.b16 %v2711, %v2710
  %v2717 = vpack.c.b16 %v2713, %v2712
  %v2723 = vsel %vm2639, %v2697, 0
  %2725 = vmatprep.subr.bf16.mxu0 0
  %2726 = vmatpush1.bf16.msra.mxu0 %v2714
  %2727 = vmatprep.subr.bf16.mxu0 0
  %2728 = vmatpush1.bf16.msra.mxu0 %v2715
  %2729 = vmatprep.subr.bf16.mxu0 0
  %2730 = vmatpush1.bf16.msra.mxu0 %v2716
  %2731 = vmatprep.subr.bf16.mxu0 0
  %2732 = vmatpush1.bf16.msra.mxu0 %v2717
  %2733 = vmatprep.subr.bf16.mxu0 0
  %2734 = vmatpush1.bf16.msra.mxu0 0
  %2735 = vmatprep.subr.bf16.mxu0 0
  %2736 = vmatpush1.bf16.msra.mxu0 0
  %2737 = vmatprep.subr.bf16.mxu0 0
  %2738 = vmatpush1.bf16.msra.mxu0 0
  %2739 = vmatprep.subr.bf16.mxu0 0
  %2740 = vmatpush1.bf16.msra.mxu0 0
  %2741 = vmatprep.subr.bf16.mxu0 0
  %2742 = vmatpush1.bf16.msra.mxu0 0
  %2743 = vmatprep.subr.bf16.mxu0 0
  %2744 = vmatpush1.bf16.msra.mxu0 0
  %2745 = vmatprep.subr.bf16.mxu0 0
  %2746 = vmatpush1.bf16.msra.mxu0 0
  %2747 = vmatprep.subr.bf16.mxu0 0
  %2748 = vmatpush1.bf16.msra.mxu0 0
  %2749 = vmatprep.subr.bf16.mxu0 0
  %2750 = vmatpush1.bf16.msra.mxu0 0
  %2751 = vmatprep.subr.bf16.mxu0 0
  %2752 = vmatpush1.bf16.msra.mxu0 0
  %2753 = vmatprep.subr.bf16.mxu0 0
  %2754 = vmatpush1.bf16.msra.mxu0 0
  %2755 = vmatprep.subr.bf16.mxu0 0
  %2756 = vmatpush1.bf16.msra.mxu0 0
  %2757 = vmatprep.mubr.bf16.mxu0 0
  %2758 = vmatmul.mubr.bf16.gmra.mrb[0].mxu0 %v2723
  %v2759 = vpop.f32.mrb[0].mxu0
  %v2760 = vadd.f32 %v2678, %v2759
  %v2761 = vpop.f32.mrb[0].mxu0
  %v2762 = vpop.f32.mrb[0].mxu0
  %v2763 = vpop.f32.mrb[0].mxu0
  %2764 = vdwg.mxu0
  %s2765 = scalar_lea.vmem %s7, 64
  %v2766 = vld [vmem:[%s2765] sm:$0xf]
  %v2767 = vld [vmem:[%s2765 + $0x4] sm:$0xf]
  %v2768 = vld [vmem:[%s2765 + $0x8] sm:$0xf]
  %v2769 = vld [vmem:[%s2765 + $0xc] sm:$0xf]
  %v2770 = vld [vmem:[%s2765 + $0x10] sm:$0xf]
  %v2771 = vld [vmem:[%s2765 + $0x14] sm:$0xf]
  %v2772 = vld [vmem:[%s2765 + $0x18] sm:$0xf]
  %v2773 = vld [vmem:[%s2765 + $0x1c] sm:$0xf]
  %v2774 = vrot.slane %v2585, 4
  %v2775 = vrot.slane %v2586, 3
  %v2776 = vsel %vm2595, %v2775, %v2774
  %v2777 = vrot.slane %v2587, 2
  %v2778 = vsel %vm2597, %v2777, %v2776
  %v2779 = vrot.slane %v2588, 1
  %v2780 = vsel %vm2600, %v2779, %v2778
  %v2781 = vsel %vm2603, %v2589, %v2780
  %v2782 = vrot.slane %v2590, 7
  %v2783 = vsel %vm2606, %v2782, %v2781
  %v2784 = vrot.slane %v2591, 6
  %v2785 = vsel %vm2609, %v2784, %v2783
  %v2786 = vrot.slane %v2592, 5
  %v2787 = vsel %vm2612, %v2786, %v2785
  %v2788 = vpack.c.b16 %v2787, %v2787
  %v2797 = vunpack.c.l.b16 %v2766
  %v2798 = vunpack.c.l.b16 %v2767
  %v2799 = vunpack.c.l.b16 %v2768
  %v2800 = vunpack.c.l.b16 %v2769
  %v2801 = vunpack.c.l.b16 %v2770
  %v2802 = vunpack.c.l.b16 %v2771
  %v2803 = vunpack.c.l.b16 %v2772
  %v2804 = vunpack.c.l.b16 %v2773
  %v2805 = vpack.c.b16 %v2798, %v2797
  %v2806 = vpack.c.b16 %v2800, %v2799
  %v2807 = vpack.c.b16 %v2802, %v2801
  %v2808 = vpack.c.b16 %v2804, %v2803
  %v2814 = vsel %vm2639, %v2788, 0
  %2816 = vmatprep.subr.bf16.mxu0 0
  %2817 = vmatpush1.bf16.msra.mxu0 %v2805
  %2818 = vmatprep.subr.bf16.mxu0 0
  %2819 = vmatpush1.bf16.msra.mxu0 %v2806
  %2820 = vmatprep.subr.bf16.mxu0 0
  %2821 = vmatpush1.bf16.msra.mxu0 %v2807
  %2822 = vmatprep.subr.bf16.mxu0 0
  %2823 = vmatpush1.bf16.msra.mxu0 %v2808
  %2824 = vmatprep.subr.bf16.mxu0 0
  %2825 = vmatpush1.bf16.msra.mxu0 0
  %2826 = vmatprep.subr.bf16.mxu0 0
  %2827 = vmatpush1.bf16.msra.mxu0 0
  %2828 = vmatprep.subr.bf16.mxu0 0
  %2829 = vmatpush1.bf16.msra.mxu0 0
  %2830 = vmatprep.subr.bf16.mxu0 0
  %2831 = vmatpush1.bf16.msra.mxu0 0
  %2832 = vmatprep.subr.bf16.mxu0 0
  %2833 = vmatpush1.bf16.msra.mxu0 0
  %2834 = vmatprep.subr.bf16.mxu0 0
  %2835 = vmatpush1.bf16.msra.mxu0 0
  %2836 = vmatprep.subr.bf16.mxu0 0
  %2837 = vmatpush1.bf16.msra.mxu0 0
  %2838 = vmatprep.subr.bf16.mxu0 0
  %2839 = vmatpush1.bf16.msra.mxu0 0
  %2840 = vmatprep.subr.bf16.mxu0 0
  %2841 = vmatpush1.bf16.msra.mxu0 0
  %2842 = vmatprep.subr.bf16.mxu0 0
  %2843 = vmatpush1.bf16.msra.mxu0 0
  %2844 = vmatprep.subr.bf16.mxu0 0
  %2845 = vmatpush1.bf16.msra.mxu0 0
  %2846 = vmatprep.subr.bf16.mxu0 0
  %2847 = vmatpush1.bf16.msra.mxu0 0
  %2848 = vmatprep.mubr.bf16.mxu0 0
  %2849 = vmatmul.mubr.bf16.gmra.mrb[0].mxu0 %v2814
  %v2850 = vpop.f32.mrb[0].mxu0
  %v2851 = vadd.f32 0.0, %v2850
  %v2852 = vpop.f32.mrb[0].mxu0
  %v2853 = vpop.f32.mrb[0].mxu0
  %v2854 = vpop.f32.mrb[0].mxu0
  %2855 = vdwg.mxu0
  %v2856 = vadd.f32 %v2760, %v2851
  %s2857 = scalar_lea.vmem %s7, 96
  %v2858 = vld [vmem:[%s2857] sm:$0xf]
  %v2859 = vld [vmem:[%s2857 + $0x4] sm:$0xf]
  %v2860 = vld [vmem:[%s2857 + $0x8] sm:$0xf]
  %v2861 = vld [vmem:[%s2857 + $0xc] sm:$0xf]
  %v2862 = vld [vmem:[%s2857 + $0x10] sm:$0xf]
  %v2863 = vld [vmem:[%s2857 + $0x14] sm:$0xf]
  %v2864 = vld [vmem:[%s2857 + $0x18] sm:$0xf]
  %v2865 = vld [vmem:[%s2857 + $0x1c] sm:$0xf]
  %v2866 = vrot.slane %v2585, 6
  %v2867 = vrot.slane %v2586, 5
  %v2868 = vsel %vm2595, %v2867, %v2866
  %v2869 = vrot.slane %v2587, 4
  %v2870 = vsel %vm2597, %v2869, %v2868
  %v2871 = vrot.slane %v2588, 3
  %v2872 = vsel %vm2600, %v2871, %v2870
  %v2873 = vrot.slane %v2589, 2
  %v2874 = vsel %vm2603, %v2873, %v2872
  %v2875 = vrot.slane %v2590, 1
  %v2876 = vsel %vm2606, %v2875, %v2874
  %v2877 = vsel %vm2609, %v2591, %v2876
  %v2878 = vrot.slane %v2592, 7
  %v2879 = vsel %vm2612, %v2878, %v2877
  %v2880 = vpack.c.b16 %v2879, %v2879
  %v2889 = vunpack.c.l.b16 %v2858
  %v2890 = vunpack.c.l.b16 %v2859
  %v2891 = vunpack.c.l.b16 %v2860
  %v2892 = vunpack.c.l.b16 %v2861
  %v2893 = vunpack.c.l.b16 %v2862
  %v2894 = vunpack.c.l.b16 %v2863
  %v2895 = vunpack.c.l.b16 %v2864
  %v2896 = vunpack.c.l.b16 %v2865
  %v2897 = vpack.c.b16 %v2890, %v2889
  %v2898 = vpack.c.b16 %v2892, %v2891
  %v2899 = vpack.c.b16 %v2894, %v2893
  %v2900 = vpack.c.b16 %v2896, %v2895
  %v2906 = vsel %vm2639, %v2880, 0
  %2908 = vmatprep.subr.bf16.mxu0 0
  %2909 = vmatpush1.bf16.msra.mxu0 %v2897
  %2910 = vmatprep.subr.bf16.mxu0 0
  %2911 = vmatpush1.bf16.msra.mxu0 %v2898
  %2912 = vmatprep.subr.bf16.mxu0 0
  %2913 = vmatpush1.bf16.msra.mxu0 %v2899
  %2914 = vmatprep.subr.bf16.mxu0 0
  %2915 = vmatpush1.bf16.msra.mxu0 %v2900
  %2916 = vmatprep.subr.bf16.mxu0 0
  %2917 = vmatpush1.bf16.msra.mxu0 0
  %2918 = vmatprep.subr.bf16.mxu0 0
  %2919 = vmatpush1.bf16.msra.mxu0 0
  %2920 = vmatprep.subr.bf16.mxu0 0
  %2921 = vmatpush1.bf16.msra.mxu0 0
  %2922 = vmatprep.subr.bf16.mxu0 0
  %2923 = vmatpush1.bf16.msra.mxu0 0
  %2924 = vmatprep.subr.bf16.mxu0 0
  %2925 = vmatpush1.bf16.msra.mxu0 0
  %2926 = vmatprep.subr.bf16.mxu0 0
  %2927 = vmatpush1.bf16.msra.mxu0 0
  %2928 = vmatprep.subr.bf16.mxu0 0
  %2929 = vmatpush1.bf16.msra.mxu0 0
  %2930 = vmatprep.subr.bf16.mxu0 0
  %2931 = vmatpush1.bf16.msra.mxu0 0
  %2932 = vmatprep.subr.bf16.mxu0 0
  %2933 = vmatpush1.bf16.msra.mxu0 0
  %2934 = vmatprep.subr.bf16.mxu0 0
  %2935 = vmatpush1.bf16.msra.mxu0 0
  %2936 = vmatprep.subr.bf16.mxu0 0
  %2937 = vmatpush1.bf16.msra.mxu0 0
  %2938 = vmatprep.subr.bf16.mxu0 0
  %2939 = vmatpush1.bf16.msra.mxu0 0
  %2940 = vmatprep.mubr.bf16.mxu0 0
  %2941 = vmatmul.mubr.bf16.gmra.mrb[0].mxu0 %v2906
  %v2942 = vpop.f32.mrb[0].mxu0
  %v2943 = vadd.f32 0.0, %v2942
  %v2944 = vpop.f32.mrb[0].mxu0
  %v2945 = vpop.f32.mrb[0].mxu0
  %v2946 = vpop.f32.mrb[0].mxu0
  %2947 = vdwg.mxu0
  %v2948 = vadd.f32 %v2856, %v2943
  %v2949 = vld [vmem:[%s8] sm:$0x1]
  %v2951 = vlaneseq
  %v2952 = vshrl.u32 %v2951, 7
  %v2953 = vsub.s32 0, %v2952
  %v2954 = vrot.slane %v2949, %v2953
  %v2956 = vadd.f32 %v2948, %v2954
  %v2957 = vmax.f32 %v2956, 0.0
  %v2958 = vpack.c.bf16 %v2957, %v2957
  %v2959 = vld [vmem:[%s9] sm:$0xf]
  %v2960 = vld [vmem:[%s9 + $0x4] sm:$0xf]
  %v2961 = vld [vmem:[%s9 + $0x8] sm:$0xf]
  %v2962 = vld [vmem:[%s9 + $0xc] sm:$0xf]
  %v2963 = vld [vmem:[%s9 + $0x10] sm:$0xf]
  %v2964 = vld [vmem:[%s9 + $0x14] sm:$0xf]
  %v2965 = vld [vmem:[%s9 + $0x18] sm:$0xf]
  %v2966 = vld [vmem:[%s9 + $0x1c] sm:$0xf]
  %v2967 = vld [vmem:[%s9 + $0x20] sm:$0xf]
  %v2968 = vld [vmem:[%s9 + $0x24] sm:$0xf]
  %v2969 = vld [vmem:[%s9 + $0x28] sm:$0xf]
  %v2970 = vld [vmem:[%s9 + $0x2c] sm:$0xf]
  %v2971 = vld [vmem:[%s9 + $0x30] sm:$0xf]
  %v2972 = vld [vmem:[%s9 + $0x34] sm:$0xf]
  %v2973 = vld [vmem:[%s9 + $0x38] sm:$0xf]
  %v2974 = vld [vmem:[%s9 + $0x3c] sm:$0xf]
  %v2975 = vld [vmem:[%s10] sm:$0x1]
  %v2977 = vlaneseq
  %v2978 = vshrl.u32 %v2977, 7
  %v2979 = vsub.s32 0, %v2978
  %v2980 = vrot.slane %v2975, %v2979
  %v2998 = vunpack.c.l.b16 %v2959
  %v2999 = vunpack.c.l.b16 %v2960
  %v3000 = vunpack.c.l.b16 %v2961
  %v3001 = vunpack.c.l.b16 %v2962
  %v3002 = vunpack.c.l.b16 %v2963
  %v3003 = vunpack.c.l.b16 %v2964
  %v3004 = vunpack.c.l.b16 %v2965
  %v3005 = vunpack.c.l.b16 %v2966
  %v3006 = vunpack.c.l.b16 %v2967
  %v3007 = vunpack.c.l.b16 %v2968
  %v3008 = vunpack.c.l.b16 %v2969
  %v3009 = vunpack.c.l.b16 %v2970
  %v3010 = vunpack.c.l.b16 %v2971
  %v3011 = vunpack.c.l.b16 %v2972
  %v3012 = vunpack.c.l.b16 %v2973
  %v3013 = vunpack.c.l.b16 %v2974
  %v3014 = vpack.c.b16 %v2999, %v2998
  %v3015 = vpack.c.b16 %v3001, %v3000
  %v3016 = vpack.c.b16 %v3003, %v3002
  %v3017 = vpack.c.b16 %v3005, %v3004
  %v3018 = vpack.c.b16 %v3007, %v3006
  %v3019 = vpack.c.b16 %v3009, %v3008
  %v3020 = vpack.c.b16 %v3011, %v3010
  %v3021 = vpack.c.b16 %v3013, %v3012
  %3030 = vmatprep.subr.bf16.mxu0 0
  %3031 = vmatpush1.bf16.msra.mxu0 %v3014
  %3032 = vmatprep.subr.bf16.mxu0 0
  %3033 = vmatpush1.bf16.msra.mxu0 %v3015
  %3034 = vmatprep.subr.bf16.mxu0 0
  %3035 = vmatpush1.bf16.msra.mxu0 %v3016
  %3036 = vmatprep.subr.bf16.mxu0 0
  %3037 = vmatpush1.bf16.msra.mxu0 %v3017
  %3038 = vmatprep.subr.bf16.mxu0 0
  %3039 = vmatpush1.bf16.msra.mxu0 %v3018
  %3040 = vmatprep.subr.bf16.mxu0 0
  %3041 = vmatpush1.bf16.msra.mxu0 %v3019
  %3042 = vmatprep.subr.bf16.mxu0 0
  %3043 = vmatpush1.bf16.msra.mxu0 %v3020
  %3044 = vmatprep.subr.bf16.mxu0 0
  %3045 = vmatpush1.bf16.msra.mxu0 %v3021
  %3046 = vmatprep.subr.bf16.mxu0 0
  %3047 = vmatpush1.bf16.msra.mxu0 0
  %3048 = vmatprep.subr.bf16.mxu0 0
  %3049 = vmatpush1.bf16.msra.mxu0 0
  %3050 = vmatprep.subr.bf16.mxu0 0
  %3051 = vmatpush1.bf16.msra.mxu0 0
  %3052 = vmatprep.subr.bf16.mxu0 0
  %3053 = vmatpush1.bf16.msra.mxu0 0
  %3054 = vmatprep.subr.bf16.mxu0 0
  %3055 = vmatpush1.bf16.msra.mxu0 0
  %3056 = vmatprep.subr.bf16.mxu0 0
  %3057 = vmatpush1.bf16.msra.mxu0 0
  %3058 = vmatprep.subr.bf16.mxu0 0
  %3059 = vmatpush1.bf16.msra.mxu0 0
  %3060 = vmatprep.subr.bf16.mxu0 0
  %3061 = vmatpush1.bf16.msra.mxu0 0
  %3062 = vmatprep.mubr.bf16.mxu0 0
  %3063 = vmatmul.mubr.bf16.gmra.mrb[0].mxu0 %v2958
  %v3064 = vpop.f32.mrb[0].mxu0
  %v3065 = vadd.f32 %v2980, %v3064
  %v3066 = vpop.f32.mrb[0].mxu0
  %v3067 = vpop.f32.mrb[0].mxu0
  %v3068 = vpop.f32.mrb[0].mxu0
  %3069 = vdwg.mxu0
  %v3070 = vmax.f32 %v3065, 0.0
  %v3071 = vpack.c.bf16 %v3070, %v3070
  %v3072 = vld [vmem:[%s11] sm:$0xf]
  %v3073 = vld [vmem:[%s11 + $0x4] sm:$0xf]
  %v3074 = vld [vmem:[%s11 + $0x8] sm:$0xf]
  %v3075 = vld [vmem:[%s11 + $0xc] sm:$0xf]
  %v3076 = vld [vmem:[%s11 + $0x10] sm:$0xf]
  %v3077 = vld [vmem:[%s11 + $0x14] sm:$0xf]
  %v3078 = vld [vmem:[%s11 + $0x18] sm:$0xf]
  %v3079 = vld [vmem:[%s11 + $0x1c] sm:$0xf]
  %v3080 = vld [vmem:[%s11 + $0x20] sm:$0xf]
  %v3081 = vld [vmem:[%s11 + $0x24] sm:$0xf]
  %v3082 = vld [vmem:[%s11 + $0x28] sm:$0xf]
  %v3083 = vld [vmem:[%s11 + $0x2c] sm:$0xf]
  %v3084 = vld [vmem:[%s11 + $0x30] sm:$0xf]
  %v3085 = vld [vmem:[%s11 + $0x34] sm:$0xf]
  %v3086 = vld [vmem:[%s11 + $0x38] sm:$0xf]
  %v3087 = vld [vmem:[%s11 + $0x3c] sm:$0xf]
  %v3088 = vld [vmem:[%s12] sm:$0x1]
  %v3090 = vlaneseq
  %v3091 = vshrl.u32 %v3090, 7
  %v3092 = vsub.s32 0, %v3091
  %v3093 = vrot.slane %v3088, %v3092
  %v3111 = vunpack.c.l.b16 %v3072
  %v3112 = vunpack.c.l.b16 %v3073
  %v3113 = vunpack.c.l.b16 %v3074
  %v3114 = vunpack.c.l.b16 %v3075
  %v3115 = vunpack.c.l.b16 %v3076
  %v3116 = vunpack.c.l.b16 %v3077
  %v3117 = vunpack.c.l.b16 %v3078
  %v3118 = vunpack.c.l.b16 %v3079
  %v3119 = vunpack.c.l.b16 %v3080
  %v3120 = vunpack.c.l.b16 %v3081
  %v3121 = vunpack.c.l.b16 %v3082
  %v3122 = vunpack.c.l.b16 %v3083
  %v3123 = vunpack.c.l.b16 %v3084
  %v3124 = vunpack.c.l.b16 %v3085
  %v3125 = vunpack.c.l.b16 %v3086
  %v3126 = vunpack.c.l.b16 %v3087
  %v3127 = vpack.c.b16 %v3112, %v3111
  %v3128 = vpack.c.b16 %v3114, %v3113
  %v3129 = vpack.c.b16 %v3116, %v3115
  %v3130 = vpack.c.b16 %v3118, %v3117
  %v3131 = vpack.c.b16 %v3120, %v3119
  %v3132 = vpack.c.b16 %v3122, %v3121
  %v3133 = vpack.c.b16 %v3124, %v3123
  %v3134 = vpack.c.b16 %v3126, %v3125
  %3143 = vmatprep.subr.bf16.mxu0 0
  %3144 = vmatpush1.bf16.msra.mxu0 %v3127
  %3145 = vmatprep.subr.bf16.mxu0 0
  %3146 = vmatpush1.bf16.msra.mxu0 %v3128
  %3147 = vmatprep.subr.bf16.mxu0 0
  %3148 = vmatpush1.bf16.msra.mxu0 %v3129
  %3149 = vmatprep.subr.bf16.mxu0 0
  %3150 = vmatpush1.bf16.msra.mxu0 %v3130
  %3151 = vmatprep.subr.bf16.mxu0 0
  %3152 = vmatpush1.bf16.msra.mxu0 %v3131
  %3153 = vmatprep.subr.bf16.mxu0 0
  %3154 = vmatpush1.bf16.msra.mxu0 %v3132
  %3155 = vmatprep.subr.bf16.mxu0 0
  %3156 = vmatpush1.bf16.msra.mxu0 %v3133
  %3157 = vmatprep.subr.bf16.mxu0 0
  %3158 = vmatpush1.bf16.msra.mxu0 %v3134
  %3159 = vmatprep.subr.bf16.mxu0 0
  %3160 = vmatpush1.bf16.msra.mxu0 0
  %3161 = vmatprep.subr.bf16.mxu0 0
  %3162 = vmatpush1.bf16.msra.mxu0 0
  %3163 = vmatprep.subr.bf16.mxu0 0
  %3164 = vmatpush1.bf16.msra.mxu0 0
  %3165 = vmatprep.subr.bf16.mxu0 0
  %3166 = vmatpush1.bf16.msra.mxu0 0
  %3167 = vmatprep.subr.bf16.mxu0 0
  %3168 = vmatpush1.bf16.msra.mxu0 0
  %3169 = vmatprep.subr.bf16.mxu0 0
  %3170 = vmatpush1.bf16.msra.mxu0 0
  %3171 = vmatprep.subr.bf16.mxu0 0
  %3172 = vmatpush1.bf16.msra.mxu0 0
  %3173 = vmatprep.subr.bf16.mxu0 0
  %3174 = vmatpush1.bf16.msra.mxu0 0
  %3175 = vmatprep.mubr.bf16.mxu0 0
  %3176 = vmatmul.mubr.bf16.gmra.mrb[0].mxu0 %v3071
  %v3177 = vpop.f32.mrb[0].mxu0
  %v3178 = vadd.f32 %v3093, %v3177
  %v3179 = vpop.f32.mrb[0].mxu0
  %v3180 = vpop.f32.mrb[0].mxu0
  %v3181 = vpop.f32.mrb[0].mxu0
  %3182 = vdwg.mxu0
  %3183 = vst [vmem:[%s13] sm:$0xff] %v3178
  // Predicated region
  $region54: #{forward.1} parent=0 // pred_check
    _
  $region55: #{forward.1} parent=0 // pred_check_branch
    %3185 = sbr.rel (0) target = $region57
  $region56: #{forward.1} parent=0 // pred_region
    _
  $region57: #{forward.1} parent=0 // pred_fallthru
    _
  // Predicated region
  $region58: #{forward.1} parent=0 // pred_check
    _
  $region59: #{forward.1} parent=0 // pred_check_branch
    %3187 = sbr.rel (0) target = $region61
  $region60: #{forward.1} parent=0 // pred_region
    _
  $region61: #{forward.1} parent=0 // pred_fallthru
    _

</llo_original>
